<compile_context>
chip_gen: v7x
topology: tpu7x:2x2x1
jax: 0.10.0
libtpu: 0.0.40
codegen_flags: <defaults>
</compile_context>

<pallas_src>
import functools

import numpy as np
import jax
import jax.numpy as jnp
from jax import lax
from jax.experimental import pallas as pl
from jax.experimental.pallas import tpu as pltpu


def _attention_kernel(x_ref, sel_ref, w1_ref, fc1_w_ref, fc1_b_ref,
                      fc2_w_ref, fc2_b_ref, out_ref, *,
                      n_pts, k_nb, n_tile, eps, batch_block, matmul_dtype,
                      approx_recip):
    md = matmul_dtype
    C = w1_ref.shape[0]
    tnk = n_tile * k_nb               # lane width of one point-tile (mult of 128)
    n_tiles = n_pts // n_tile

    # Constant operands: loaded once per grid step (index_map is constant, so
    # the same VMEM block is reused across steps).
    w1 = w1_ref[...]                  # (C, C)        matmul dtype
    sel = sel_ref[...]                # (Tn*K, Tn)    0/1 block-diag selector
    fc1_w = fc1_w_ref[...]            # (C//4, C)     f32
    fc1_b = fc1_b_ref[...]            # (C//4, 1)     f32
    fc2_w = fc2_w_ref[...]            # (C, C//4)     f32
    fc2_b = fc2_b_ref[...]            # (C, 1)        f32

    def process_one(i):
        x = x_ref[i]                                            # (C, N*K) f32

        # --- conv1: 1x1 Conv2d(C, C, bias=False) == channel matmul on the MXU
        #     (bf16-in / f32-accumulate in production).
        y = jnp.dot(w1, x.astype(md),
                    preferred_element_type=jnp.float32)         # (C, N*K) f32

        # --- InstanceNorm2d(affine=False): per-channel stats over all N*K
        #     lanes, two-pass variance (robust, var >= 0 by construction).
        mu = jnp.mean(y, axis=-1, keepdims=True)                # (C, 1)
        yc = y - mu
        var = jnp.mean(yc * yc, axis=-1, keepdims=True)
        inv_std = lax.rsqrt(var + eps)

        # --- per-point-tile: sigmoid -> exp, then ONE fused MXU matmul against
        #     the block-diagonal selector for both grouped K-reductions:
        #       den[c, n] = sum_k x1[c, n, k]
        #       num[c, n] = sum_k (x1 * x)[c, n, k]
        res_tiles = []
        for t in range(n_tiles):                       # static, lane-aligned
            sl = slice(t * tnk, (t + 1) * tnk)
            a_t = jnp.exp(jax.nn.sigmoid(yc[:, sl] * inv_std))  # (C, Tn*K) f32
            stacked = jnp.concatenate(
                [a_t.astype(md), (a_t * x[:, sl]).astype(md)],
                axis=0)                                          # (2C, Tn*K)
            r = jnp.dot(stacked, sel,
                        preferred_element_type=jnp.float32)      # (2C, Tn) f32
            den = r[:C]
            num = r[C:]
            # res = (num/den) / (den/K) == num*K/den^2 ; den >= K > 0 so safe.
            # approx reciprocal (EUP slot) in the bf16 path, exact in f32 path.
            res_tiles.append((num * float(k_nb))
                             * pl.reciprocal(den * den, approx=approx_recip))
        res = res_tiles[0] if n_tiles == 1 else jnp.concatenate(res_tiles, -1)

        # --- squeeze-excite gate: mean over points -> fc1 -> relu -> fc2 ->
        #     sigmoid (tiny f32 matvecs).
        g = jnp.mean(res, axis=-1, keepdims=True)               # (C, 1)
        h = jnp.maximum(
            jnp.dot(fc1_w, g, preferred_element_type=jnp.float32) + fc1_b, 0.0)
        gate = jax.nn.sigmoid(
            jnp.dot(fc2_w, h, preferred_element_type=jnp.float32) + fc2_b)

        # --- lane-dense store, already in PyTorch (C, N) layout.
        out_ref[i] = gate * res

    if batch_block == 1:
        process_one(0)
    else:
        # fori_loop (not a Python unroll) so each packed batch's slabs die at
        # iteration end — avoids spilling the 64-vreg file at batch_block > 1.
        def body(i, carry):
            process_one(i)
            return carry
        lax.fori_loop(0, batch_block, body, 0)


@functools.lru_cache(maxsize=None)
def _selector(n_tile, k_nb, dtype_name):
    """Cached (Tn*K, Tn) 0/1 block-diagonal selector: S[m, n] = (m // K == n).

    Built once on the host; under jit it becomes a baked constant, so no
    per-call device computation / HBM traffic for a fixed pattern.
    Exact in bf16 (values are 0/1).
    """
    m = n_tile * k_nb
    s = (np.arange(m)[:, None] // k_nb) == np.arange(n_tile)[None, :]
    return jnp.asarray(s, dtype=jnp.dtype(dtype_name))


def attention_forward(x, w1, fc1_w, fc1_b, fc2_w, fc2_b, *, eps=1e-5,
                      matmul_dtype=jnp.bfloat16, batch_block=None, n_tile=None):
    """Forward pass of DGCNN `Attention`.

    x:      (B, C, N, K) float32  (PyTorch NCHW; C=feature_size, K=neighbors)
    w1:     (C, C, 1, 1) Conv2d weight (bias-free)
    fc1_w:  (C//4, C), fc1_b: (C//4,)
    fc2_w:  (C, C//4), fc2_b: (C,)
    Returns (B, C, N) float32 — same layout as the PyTorch module (no wrapper
    transposes on input or output).

    matmul_dtype: MXU input dtype.  bfloat16 is the production default on all
                  chips (f32 MXU is 3-8x slower; keep f32 for bit-tight tests
                  only).
    batch_block:  batch elements packed per grid step.  None = auto heuristic
                  (>= 4 grid steps so both v7x TensorCores get work).  On
                  single-TC chips (v5e/v6e) pass batch_block=B to collapse the
                  serial grid and amortize the ~0.35 us/step overhead.
    n_tile:       point-tile width for the K-reduction selector (default 128,
                  or N if N is not a multiple of 128).
    """
    B, C, N, K = x.shape
    C4 = fc1_w.shape[0]
    M = N * K

    if batch_block is None:
        batch_block = max(1, B // 4)
        while B % batch_block:
            batch_block -= 1
    if B % batch_block != 0:
        raise ValueError("batch_block must divide the batch size")
    grid_b = B // batch_block

    if n_tile is None:
        n_tile = 128 if N % 128 == 0 else N
    if N % n_tile != 0:
        raise ValueError("n_tile must divide N")
    tnk = n_tile * K

    # Free metadata reshape (row-major merge of last two dims): no HBM transpose.
    xm = x.reshape(B, C, M)
    w1m = w1.reshape(C, C).astype(matmul_dtype)
    sel = _selector(n_tile, K, jnp.dtype(matmul_dtype).name)
    fc1_b2 = fc1_b.reshape(C4, 1)
    fc2_b2 = fc2_b.reshape(C, 1)

    approx_recip = jnp.dtype(matmul_dtype) != jnp.dtype(jnp.float32)

    kernel = functools.partial(
        _attention_kernel, n_pts=N, k_nb=K, n_tile=n_tile, eps=eps,
        batch_block=batch_block, matmul_dtype=matmul_dtype,
        approx_recip=approx_recip)

    return pl.pallas_call(
        kernel,
        out_shape=jax.ShapeDtypeStruct((B, C, N), jnp.float32),
        grid_spec=pltpu.PrefetchScalarGridSpec(
            num_scalar_prefetch=0,
            grid=(grid_b,),
            in_specs=[
                pl.BlockSpec((batch_block, C, M), lambda b: (b, 0, 0)),
                # Constant operands (index_map fixed at (0, 0)); a
                # pipeline_mode=pl.Buffered(1) single-buffer hint would shave a
                # little VMEM here — deferred, not the binding resource.
                pl.BlockSpec((tnk, n_tile), lambda b: (0, 0)),
                pl.BlockSpec((C, C), lambda b: (0, 0)),
                pl.BlockSpec((C4, C), lambda b: (0, 0)),
                pl.BlockSpec((C4, 1), lambda b: (0, 0)),
                pl.BlockSpec((C, C4), lambda b: (0, 0)),
                pl.BlockSpec((C, 1), lambda b: (0, 0)),
            ],
            out_specs=pl.BlockSpec((batch_block, C, N), lambda b: (b, 0, 0)),
        ),
        compiler_params=pltpu.CompilerParams(
            dimension_semantics=("parallel",),
            # Budget: x block (bb*C*M*4B) double-buffered + out block + tiled
            # selector + a few slab-sized f32 intermediates per in-flight batch
            # — single-digit MiB at these shapes.  32 MiB gives ample headroom
            # and stays within every chip's scoped VMEM capacity.
            vmem_limit_bytes=32 * 1024 * 1024,
        ),
    )(xm, sel, w1m, fc1_w, fc1_b2, fc2_w, fc2_b2)


def attention_ref(x, w1, fc1_w, fc1_b, fc2_w, fc2_b, *, eps=1e-5):
    """Pure-JAX (f32) reference mirroring the PyTorch forward, for validation."""
    B, C, N, K = x.shape
    y = jnp.einsum("oc,bcnk->bonk", w1.reshape(C, C), x)
    mu = y.mean(axis=(2, 3), keepdims=True)
    var = ((y - mu) ** 2).mean(axis=(2, 3), keepdims=True)
    yn = (y - mu) / jnp.sqrt(var + eps)
    x1 = jnp.exp(jax.nn.sigmoid(yn))
    x2 = x1.mean(-1)
    xx = (x1 * x).sum(-1) / x1.sum(-1)
    xx = xx / x2
    x3 = xx.mean(-1, keepdims=True)                    # (B, C, 1)
    x3 = jnp.swapaxes(x3, 1, 2)                        # (B, 1, C)
    h = jax.nn.relu(x3 @ fc1_w.T + fc1_b)
    g = jax.nn.sigmoid(h @ fc2_w.T + fc2_b)
    g = jnp.swapaxes(g, 1, 2)                          # (B, C, 1)
    return g * xx


if __name__ == "__main__":
    # DGCNN-like small shapes: feature_size=32, 128 points, k=20 (module default).
    B, C, N, K = 2, 32, 128, 20
    C4 = C // 4

    key = jax.random.PRNGKey(0)
    kx, kw1, kf1w, kf1b, kf2w, kf2b = jax.random.split(key, 6)

    x = jax.random.normal(kx, (B, C, N, K), dtype=jnp.float32)
    # Deterministic synthetic parameters (shapes from the module __init__).
    w1 = 0.1 * jax.random.normal(kw1, (C, C, 1, 1), dtype=jnp.float32)   # Conv2d
    fc1_w = 0.1 * jax.random.normal(kf1w, (C4, C), dtype=jnp.float32)    # Linear(C, C//4)
    fc1_b = 0.1 * jax.random.normal(kf1b, (C4,), dtype=jnp.float32)
    fc2_w = 0.1 * jax.random.normal(kf2w, (C, C4), dtype=jnp.float32)    # Linear(C//4, C)
    fc2_b = 0.1 * jax.random.normal(kf2b, (C,), dtype=jnp.float32)

    ref = attention_ref(x, w1, fc1_w, fc1_b, fc2_w, fc2_b)

    # 1) Strict semantics check: f32 MXU inputs, exact reciprocal, and
    #    batch_block=2 to exercise the fori_loop batch-packing path.
    fwd_f32 = jax.jit(functools.partial(
        attention_forward, matmul_dtype=jnp.float32, batch_block=2))
    out_f32 = jax.block_until_ready(fwd_f32(x, w1, fc1_w, fc1_b, fc2_w, fc2_b))
    assert out_f32.shape == (B, C, N)
    assert jnp.allclose(out_f32, ref, atol=1e-4, rtol=1e-4), "f32 kernel mismatch"

    # 2) Production path: bf16 MXU inputs (f32 accumulate), approx reciprocal,
    #    one batch per grid step so the 2-step grid spreads across both v7x
    #    TensorCores.  Tolerance covers only the intentional bf16 input
    #    rounding on the matmul operands (~2^-8 relative before the ratio).
    fwd_bf16 = jax.jit(functools.partial(
        attention_forward, matmul_dtype=jnp.bfloat16, batch_block=1))
    out_bf16 = jax.block_until_ready(fwd_bf16(x, w1, fc1_w, fc1_b, fc2_w, fc2_b))
    assert out_bf16.shape == (B, C, N)
    assert jnp.allclose(out_bf16, ref, atol=2e-2, rtol=2e-2), "bf16 kernel mismatch"

    print("KERNEL_OK")
</pallas_src>

<mosaic_0001>
module attributes {stable_mosaic.version = 11 : i64} {
  func.func @_attention_kernel(%arg0: i32, %arg1: memref<2x32x2560xf32, #tpu.memory_space<vmem>>, %arg2: memref<2560x128xf32, #tpu.memory_space<vmem>>, %arg3: memref<32x32xf32, #tpu.memory_space<vmem>>, %arg4: memref<8x32xf32, #tpu.memory_space<vmem>>, %arg5: memref<8x1xf32, #tpu.memory_space<vmem>>, %arg6: memref<32x8xf32, #tpu.memory_space<vmem>>, %arg7: memref<32x1xf32, #tpu.memory_space<vmem>>, %arg8: memref<2x32x128xf32, #tpu.memory_space<vmem>>) attributes {dimension_semantics = [#tpu.dimension_semantics<parallel>], iteration_bounds = array<i64: 1>, scalar_prefetch = 0 : i64, scratch_operands = 0 : i64, tpu.core_type = #tpu.core_type<tc>, window_params = [{transform_indices = @transform_0, window_bounds = array<i64: 2, 32, 2560>}, {pipeline_mode = #tpu.pipeline_mode<synchronous>, transform_indices = @transform_1, window_bounds = array<i64: 2560, 128>}, {pipeline_mode = #tpu.pipeline_mode<synchronous>, transform_indices = @transform_2, window_bounds = array<i64: 32, 32>}, {pipeline_mode = #tpu.pipeline_mode<synchronous>, transform_indices = @transform_3, window_bounds = array<i64: 8, 32>}, {pipeline_mode = #tpu.pipeline_mode<synchronous>, transform_indices = @transform_4, window_bounds = array<i64: 8, 1>}, {pipeline_mode = #tpu.pipeline_mode<synchronous>, transform_indices = @transform_5, window_bounds = array<i64: 32, 8>}, {pipeline_mode = #tpu.pipeline_mode<synchronous>, transform_indices = @transform_6, window_bounds = array<i64: 32, 1>}, {transform_indices = @transform_7, window_bounds = array<i64: 2, 32, 128>}]} {
    %c0 = arith.constant 0 : index
    %c0_0 = arith.constant 0 : index
    %0 = vector.load %arg3[%c0, %c0_0] : memref<32x32xf32, #tpu.memory_space<vmem>>, vector<32x32xf32>
    %c0_1 = arith.constant 0 : index
    %c0_2 = arith.constant 0 : index
    %1 = vector.load %arg2[%c0_1, %c0_2] : memref<2560x128xf32, #tpu.memory_space<vmem>>, vector<2560x128xf32>
    %c0_3 = arith.constant 0 : index
    %c0_4 = arith.constant 0 : index
    %2 = vector.load %arg4[%c0_3, %c0_4] : memref<8x32xf32, #tpu.memory_space<vmem>>, vector<8x32xf32>
    %c0_5 = arith.constant 0 : index
    %c0_6 = arith.constant 0 : index
    %3 = vector.load %arg5[%c0_5, %c0_6] : memref<8x1xf32, #tpu.memory_space<vmem>>, vector<8x1xf32>
    %c0_7 = arith.constant 0 : index
    %c0_8 = arith.constant 0 : index
    %4 = vector.load %arg6[%c0_7, %c0_8] : memref<32x8xf32, #tpu.memory_space<vmem>>, vector<32x8xf32>
    %c0_9 = arith.constant 0 : index
    %c0_10 = arith.constant 0 : index
    %5 = vector.load %arg7[%c0_9, %c0_10] : memref<32x1xf32, #tpu.memory_space<vmem>>, vector<32x1xf32>
    %c0_i32 = arith.constant 0 : i32
    %c2_i32 = arith.constant 2 : i32
    %6 = arith.addi %c0_i32, %c2_i32 : i32
    %c1_i32 = arith.constant 1 : i32
    scf.for %arg9 = %c0_i32 to %6 step %c1_i32  : i32 {
      %7 = arith.index_cast %arg9 : i32 to index
      %c0_12 = arith.constant 0 : index
      %c0_13 = arith.constant 0 : index
      %8 = vector.load %arg1[%7, %c0_12, %c0_13] : memref<2x32x2560xf32, #tpu.memory_space<vmem>>, vector<1x32x2560xf32>
      %9 = vector.shape_cast %8 : vector<1x32x2560xf32> to vector<32x2560xf32>
      %cst = arith.constant dense<0.000000e+00> : vector<32x2560xf32>
      %10 = tpu.matmul %0, %9, %cst {dimension_numbers = #tpu.dot_dimension_numbers<[1], [0], [0], [1], [0, 0, 1, 1], [], []>} : vector<32x32xf32>, vector<32x2560xf32>, vector<32x2560xf32> -> vector<32x2560xf32>
      %cst_14 = arith.constant dense<0.000000e+00> : vector<32xf32>
      %11 = vector.multi_reduction <add>, %10, %cst_14 [1] : vector<32x2560xf32> to vector<32xf32>
      %12 = vector.shape_cast %11 : vector<32xf32> to vector<32x1xf32>
      %cst_15 = arith.constant 2.560000e+03 : f32
      %13 = vector.broadcast %cst_15 : f32 to vector<32x1xf32>
      %14 = arith.divf %12, %13 : vector<32x1xf32>
      %15 = vector.broadcast %14 : vector<32x1xf32> to vector<32x2560xf32>
      %16 = arith.subf %10, %15 : vector<32x2560xf32>
      %17 = arith.mulf %16, %16 : vector<32x2560xf32>
      %cst_16 = arith.constant dense<0.000000e+00> : vector<32xf32>
      %18 = vector.multi_reduction <add>, %17, %cst_16 [1] : vector<32x2560xf32> to vector<32xf32>
      %19 = vector.shape_cast %18 : vector<32xf32> to vector<32x1xf32>
      %cst_17 = arith.constant 2.560000e+03 : f32
      %20 = vector.broadcast %cst_17 : f32 to vector<32x1xf32>
      %21 = arith.divf %19, %20 : vector<32x1xf32>
      %cst_18 = arith.constant 9.99999974E-6 : f32
      %22 = vector.broadcast %cst_18 : f32 to vector<32x1xf32>
      %23 = arith.addf %21, %22 : vector<32x1xf32>
      %24 = math.rsqrt %23 : vector<32x1xf32>
      %25 = vector.broadcast %24 : vector<32x1xf32> to vector<32x2560xf32>
      %26 = arith.mulf %16, %25 : vector<32x2560xf32>
      %27 = arith.negf %26 : vector<32x2560xf32>
      %28 = math.exp %27 : vector<32x2560xf32>
      %cst_19 = arith.constant 1.000000e+00 : f32
      %29 = vector.broadcast %cst_19 : f32 to vector<32x2560xf32>
      %30 = arith.addf %29, %28 : vector<32x2560xf32>
      %31 = arith.divf %29, %30 : vector<32x2560xf32>
      %32 = math.exp %31 : vector<32x2560xf32>
      %33 = arith.mulf %32, %9 : vector<32x2560xf32>
      %34 = tpu.concatenate %32, %33 in 0 : vector<32x2560xf32>, vector<32x2560xf32> -> vector<64x2560xf32>
      %cst_20 = arith.constant dense<0.000000e+00> : vector<64x128xf32>
      %35 = tpu.matmul %34, %1, %cst_20 {dimension_numbers = #tpu.dot_dimension_numbers<[1], [0], [0], [1], [0, 0, 1, 1], [], []>} : vector<64x2560xf32>, vector<2560x128xf32>, vector<64x128xf32> -> vector<64x128xf32>
      %36 = vector.extract_strided_slice %35 {offsets = [0, 0], sizes = [32, 128], strides = [1, 1]} : vector<64x128xf32> to vector<32x128xf32>
      %37 = vector.extract_strided_slice %35 {offsets = [32, 0], sizes = [32, 128], strides = [1, 1]} : vector<64x128xf32> to vector<32x128xf32>
      %cst_21 = arith.constant 2.000000e+01 : f32
      %38 = vector.broadcast %cst_21 : f32 to vector<32x128xf32>
      %39 = arith.mulf %37, %38 : vector<32x128xf32>
      %40 = arith.mulf %36, %36 : vector<32x128xf32>
      %41 = tpu.reciprocal %40 : vector<32x128xf32> -> vector<32x128xf32>
      %42 = arith.mulf %39, %41 : vector<32x128xf32>
      %cst_22 = arith.constant dense<0.000000e+00> : vector<32xf32>
      %43 = vector.multi_reduction <add>, %42, %cst_22 [1] : vector<32x128xf32> to vector<32xf32>
      %44 = vector.shape_cast %43 : vector<32xf32> to vector<32x1xf32>
      %cst_23 = arith.constant 1.280000e+02 : f32
      %45 = vector.broadcast %cst_23 : f32 to vector<32x1xf32>
      %46 = arith.divf %44, %45 : vector<32x1xf32>
      %cst_24 = arith.constant dense<0.000000e+00> : vector<8x1xf32>
      %47 = tpu.matmul %2, %46, %cst_24 {dimension_numbers = #tpu.dot_dimension_numbers<[1], [0], [0], [1], [0, 0, 1, 1], [], []>} : vector<8x32xf32>, vector<32x1xf32>, vector<8x1xf32> -> vector<8x1xf32>
      %48 = arith.addf %47, %3 : vector<8x1xf32>
      %cst_25 = arith.constant 0.000000e+00 : f32
      %49 = vector.broadcast %cst_25 : f32 to vector<8x1xf32>
      %50 = arith.maximumf %48, %49 : vector<8x1xf32>
      %cst_26 = arith.constant dense<0.000000e+00> : vector<32x1xf32>
      %51 = tpu.matmul %4, %50, %cst_26 {dimension_numbers = #tpu.dot_dimension_numbers<[1], [0], [0], [1], [0, 0, 1, 1], [], []>} : vector<32x8xf32>, vector<8x1xf32>, vector<32x1xf32> -> vector<32x1xf32>
      %52 = arith.addf %51, %5 : vector<32x1xf32>
      %53 = arith.negf %52 : vector<32x1xf32>
      %54 = math.exp %53 : vector<32x1xf32>
      %cst_27 = arith.constant 1.000000e+00 : f32
      %55 = vector.broadcast %cst_27 : f32 to vector<32x1xf32>
      %56 = arith.addf %55, %54 : vector<32x1xf32>
      %57 = arith.divf %55, %56 : vector<32x1xf32>
      %58 = vector.broadcast %57 : vector<32x1xf32> to vector<32x128xf32>
      %59 = arith.mulf %58, %42 : vector<32x128xf32>
      %60 = arith.index_cast %arg9 : i32 to index
      %c0_28 = arith.constant 0 : index
      %c0_29 = arith.constant 0 : index
      %61 = vector.load %arg8[%60, %c0_28, %c0_29] : memref<2x32x128xf32, #tpu.memory_space<vmem>>, vector<1x32x128xf32>
      %62 = vector.shape_cast %61 : vector<1x32x128xf32> to vector<32x128xf32>
      %63 = vector.shape_cast %59 : vector<32x128xf32> to vector<1x32x128xf32>
      tpu.vector_store %arg8[%60, %c0_28, %c0_29], %63 {strides = array<i32>} : memref<2x32x128xf32, #tpu.memory_space<vmem>>, vector<1x32x128xf32>,
    }
    %c2_i32_11 = arith.constant 2 : i32
    return
  }
  func.func @transform_0(%arg0: i32) -> (i32, i32, i32) {
    %c0_i32 = arith.constant 0 : i32
    %c0_i32_0 = arith.constant 0 : i32
    %c0_i32_1 = arith.constant 0 : i32
    return %arg0, %c0_i32, %c0_i32_0 : i32, i32, i32
  }
  func.func @transform_1(%arg0: i32) -> (i32, i32) {
    %c0_i32 = arith.constant 0 : i32
    %c0_i32_0 = arith.constant 0 : i32
    %c0_i32_1 = arith.constant 0 : i32
    return %c0_i32, %c0_i32_0 : i32, i32
  }
  func.func @transform_2(%arg0: i32) -> (i32, i32) {
    %c0_i32 = arith.constant 0 : i32
    %c0_i32_0 = arith.constant 0 : i32
    %c0_i32_1 = arith.constant 0 : i32
    return %c0_i32, %c0_i32_0 : i32, i32
  }
  func.func @transform_3(%arg0: i32) -> (i32, i32) {
    %c0_i32 = arith.constant 0 : i32
    %c0_i32_0 = arith.constant 0 : i32
    %c0_i32_1 = arith.constant 0 : i32
    return %c0_i32, %c0_i32_0 : i32, i32
  }
  func.func @transform_4(%arg0: i32) -> (i32, i32) {
    %c0_i32 = arith.constant 0 : i32
    %c0_i32_0 = arith.constant 0 : i32
    %c0_i32_1 = arith.constant 0 : i32
    return %c0_i32, %c0_i32_0 : i32, i32
  }
  func.func @transform_5(%arg0: i32) -> (i32, i32) {
    %c0_i32 = arith.constant 0 : i32
    %c0_i32_0 = arith.constant 0 : i32
    %c0_i32_1 = arith.constant 0 : i32
    return %c0_i32, %c0_i32_0 : i32, i32
  }
  func.func @transform_6(%arg0: i32) -> (i32, i32) {
    %c0_i32 = arith.constant 0 : i32
    %c0_i32_0 = arith.constant 0 : i32
    %c0_i32_1 = arith.constant 0 : i32
    return %c0_i32, %c0_i32_0 : i32, i32
  }
  func.func @transform_7(%arg0: i32) -> (i32, i32, i32) {
    %c0_i32 = arith.constant 0 : i32
    %c0_i32_0 = arith.constant 0 : i32
    %c0_i32_1 = arith.constant 0 : i32
    return %arg0, %c0_i32, %c0_i32_0 : i32, i32, i32
  }
}

</mosaic_0001>

<llo_original>
// kernel: attention_forward.1
$region0: #{attention_forward.1}
  #allocation0 [shape = 'u32[]', space=smem, size = 0x4, offset = 0x4, fixed_abs, tag = 'smem constant byte address 0x4 - core index']
  #allocation1 [shape = 'u32[144,128]{1,0:T(1,128)}', space=vmem, size = 0x12000, scoped, tag = 'internal scratch']
  %s0 = inlined_call_operand.vmem [shape: f32[2,32,2560], index: 0, kind: input, shape index: {}]
  %s1 = inlined_call_operand.vmem [shape: f32[2560,128], index: 1, kind: input, shape index: {}]
  %s2 = inlined_call_operand.vmem [shape: f32[32,32], index: 2, kind: input, shape index: {}]
  %s3 = inlined_call_operand.vmem [shape: f32[8,32], index: 3, kind: input, shape index: {}]
  %s4 = inlined_call_operand.vmem [shape: f32[8,1], index: 4, kind: input, shape index: {}]
  %s5 = inlined_call_operand.vmem [shape: f32[32,8], index: 5, kind: input, shape index: {}]
  %s6 = inlined_call_operand.vmem [shape: f32[32,1], index: 6, kind: input, shape index: {}]
  %s7 = inlined_call_operand.hbm [shape: f32[2,32,128], index: 7, kind: output, shape index: {}]
  %s8 = sld [smem:[#allocation0]]
  $region45: #{attention_forward.1} parent=0
    _
  %s10 = ssub.s32 1, %s8
  %s11 = scalar_select 0, %s10, %s8
  $region1: #{attention_forward.1} parent=0
    #allocation2 [shape = 'u8[32768]{0}', space=vmem, size = 0x8000, scoped, tag = 'output window, operand 0, single buffered']
    #allocation3 [shape = 's32[1]{0}', space=sflag, size = 0x4, scoped, tag = 'scoped memory for attention_forward.1']
    %12 = vsyncpa [#allocation3], 0
    // Predicated region
    $region2: #{attention_forward.1} parent=1 // pred_check
      _
    $region3: #{attention_forward.1} parent=1 // pred_check_branch
      %14 = sbr.rel (0) target = $region5
    $region4: #{attention_forward.1} parent=1 // pred_region
      _
    $region5: #{attention_forward.1} parent=1 // pred_fallthru
      _
    // Predicated region
    $region6: #{attention_forward.1} parent=1 // pred_check
      _
    $region7: #{attention_forward.1} parent=1 // pred_check_branch
      %16 = sbr.rel (0) target = $region9
    $region8: #{attention_forward.1} parent=1 // pred_region
      _
    $region9: #{attention_forward.1} parent=1 // pred_fallthru
      _
    // Predicated region
    $region10: #{attention_forward.1} parent=1 // pred_check
      _
    $region11: #{attention_forward.1} parent=1 // pred_check_branch
      %18 = sbr.rel (0) target = $region13
    $region12: #{attention_forward.1} parent=1 // pred_region
      _
    $region13: #{attention_forward.1} parent=1 // pred_fallthru
      _
    // Predicated region
    $region14: #{attention_forward.1} parent=1 // pred_check
      _
    $region15: #{attention_forward.1} parent=1 // pred_check_branch
      %20 = sbr.rel (0) target = $region17
    $region16: #{attention_forward.1} parent=1 // pred_region
      _
    $region17: #{attention_forward.1} parent=1 // pred_fallthru
      _
    // Predicated region
    $region18: #{attention_forward.1} parent=1 // pred_check
      _
    $region19: #{attention_forward.1} parent=1 // pred_check_branch
      %22 = sbr.rel (0) target = $region21
    $region20: #{attention_forward.1} parent=1 // pred_region
      _
    $region21: #{attention_forward.1} parent=1 // pred_fallthru
      _
    // Predicated region
    $region22: #{attention_forward.1} parent=1 // pred_check
      _
    $region23: #{attention_forward.1} parent=1 // pred_check_branch
      %24 = sbr.rel (0) target = $region25
    $region24: #{attention_forward.1} parent=1 // pred_region
      _
    $region25: #{attention_forward.1} parent=1 // pred_fallthru
      _
    // Predicated region
    $region26: #{attention_forward.1} parent=1 // pred_check
      _
    $region27: #{attention_forward.1} parent=1 // pred_check_branch
      %26 = sbr.rel (0) target = $region29
    $region28: #{attention_forward.1} parent=1 // pred_region
      _
    $region29: #{attention_forward.1} parent=1 // pred_fallthru
      _
    %v27 = vld [vmem:[%s2] sm:$0xff]
    %v28 = vld [vmem:[%s2 + $0x8] sm:$0xff]
    %v29 = vld [vmem:[%s2 + $0x10] sm:$0xff]
    %v30 = vld [vmem:[%s2 + $0x18] sm:$0xff]
    %v31 = vld [vmem:[%s1] sm:$0xff]
    %v32 = vld [vmem:[%s1 + $0x8] sm:$0xff]
    %v33 = vld [vmem:[%s1 + $0x10] sm:$0xff]
    %v34 = vld [vmem:[%s1 + $0x18] sm:$0xff]
    %v35 = vld [vmem:[%s1 + $0x20] sm:$0xff]
    %v36 = vld [vmem:[%s1 + $0x28] sm:$0xff]
    %v37 = vld [vmem:[%s1 + $0x30] sm:$0xff]
    %v38 = vld [vmem:[%s1 + $0x38] sm:$0xff]
    %v39 = vld [vmem:[%s1 + $0x40] sm:$0xff]
    %v40 = vld [vmem:[%s1 + $0x48] sm:$0xff]
    %v41 = vld [vmem:[%s1 + $0x50] sm:$0xff]
    %v42 = vld [vmem:[%s1 + $0x58] sm:$0xff]
    %v43 = vld [vmem:[%s1 + $0x60] sm:$0xff]
    %v44 = vld [vmem:[%s1 + $0x68] sm:$0xff]
    %v45 = vld [vmem:[%s1 + $0x70] sm:$0xff]
    %v46 = vld [vmem:[%s1 + $0x78] sm:$0xff]
    %v47 = vld [vmem:[%s1 + $0x80] sm:$0xff]
    %v48 = vld [vmem:[%s1 + $0x88] sm:$0xff]
    %v49 = vld [vmem:[%s1 + $0x90] sm:$0xff]
    %v50 = vld [vmem:[%s1 + $0x98] sm:$0xff]
    %v51 = vld [vmem:[%s1 + $0xa0] sm:$0xff]
    %v52 = vld [vmem:[%s1 + $0xa8] sm:$0xff]
    %v53 = vld [vmem:[%s1 + $0xb0] sm:$0xff]
    %v54 = vld [vmem:[%s1 + $0xb8] sm:$0xff]
    %v55 = vld [vmem:[%s1 + $0xc0] sm:$0xff]
    %v56 = vld [vmem:[%s1 + $0xc8] sm:$0xff]
    %v57 = vld [vmem:[%s1 + $0xd0] sm:$0xff]
    %v58 = vld [vmem:[%s1 + $0xd8] sm:$0xff]
    %v59 = vld [vmem:[%s1 + $0xe0] sm:$0xff]
    %v60 = vld [vmem:[%s1 + $0xe8] sm:$0xff]
    %v61 = vld [vmem:[%s1 + $0xf0] sm:$0xff]
    %v62 = vld [vmem:[%s1 + $0xf8] sm:$0xff]
    %v63 = vld [vmem:[%s1 + $0x100] sm:$0xff]
    %v64 = vld [vmem:[%s1 + $0x108] sm:$0xff]
    %v65 = vld [vmem:[%s1 + $0x110] sm:$0xff]
    %v66 = vld [vmem:[%s1 + $0x118] sm:$0xff]
    %v67 = vld [vmem:[%s1 + $0x120] sm:$0xff]
    %v68 = vld [vmem:[%s1 + $0x128] sm:$0xff]
    %v69 = vld [vmem:[%s1 + $0x130] sm:$0xff]
    %v70 = vld [vmem:[%s1 + $0x138] sm:$0xff]
    %v71 = vld [vmem:[%s1 + $0x140] sm:$0xff]
    %v72 = vld [vmem:[%s1 + $0x148] sm:$0xff]
    %v73 = vld [vmem:[%s1 + $0x150] sm:$0xff]
    %v74 = vld [vmem:[%s1 + $0x158] sm:$0xff]
    %v75 = vld [vmem:[%s1 + $0x160] sm:$0xff]
    %v76 = vld [vmem:[%s1 + $0x168] sm:$0xff]
    %v77 = vld [vmem:[%s1 + $0x170] sm:$0xff]
    %v78 = vld [vmem:[%s1 + $0x178] sm:$0xff]
    %v79 = vld [vmem:[%s1 + $0x180] sm:$0xff]
    %v80 = vld [vmem:[%s1 + $0x188] sm:$0xff]
    %v81 = vld [vmem:[%s1 + $0x190] sm:$0xff]
    %v82 = vld [vmem:[%s1 + $0x198] sm:$0xff]
    %v83 = vld [vmem:[%s1 + $0x1a0] sm:$0xff]
    %v84 = vld [vmem:[%s1 + $0x1a8] sm:$0xff]
    %v85 = vld [vmem:[%s1 + $0x1b0] sm:$0xff]
    %v86 = vld [vmem:[%s1 + $0x1b8] sm:$0xff]
    %v87 = vld [vmem:[%s1 + $0x1c0] sm:$0xff]
    %v88 = vld [vmem:[%s1 + $0x1c8] sm:$0xff]
    %v89 = vld [vmem:[%s1 + $0x1d0] sm:$0xff]
    %v90 = vld [vmem:[%s1 + $0x1d8] sm:$0xff]
    %v91 = vld [vmem:[%s1 + $0x1e0] sm:$0xff]
    %v92 = vld [vmem:[%s1 + $0x1e8] sm:$0xff]
    %v93 = vld [vmem:[%s1 + $0x1f0] sm:$0xff]
    %v94 = vld [vmem:[%s1 + $0x1f8] sm:$0xff]
    %v95 = vld [vmem:[%s1 + $0x200] sm:$0xff]
    %v96 = vld [vmem:[%s1 + $0x208] sm:$0xff]
    %v97 = vld [vmem:[%s1 + $0x210] sm:$0xff]
    %v98 = vld [vmem:[%s1 + $0x218] sm:$0xff]
    %v99 = vld [vmem:[%s1 + $0x220] sm:$0xff]
    %v100 = vld [vmem:[%s1 + $0x228] sm:$0xff]
    %v101 = vld [vmem:[%s1 + $0x230] sm:$0xff]
    %v102 = vld [vmem:[%s1 + $0x238] sm:$0xff]
    %v103 = vld [vmem:[%s1 + $0x240] sm:$0xff]
    %v104 = vld [vmem:[%s1 + $0x248] sm:$0xff]
    %v105 = vld [vmem:[%s1 + $0x250] sm:$0xff]
    %v106 = vld [vmem:[%s1 + $0x258] sm:$0xff]
    %v107 = vld [vmem:[%s1 + $0x260] sm:$0xff]
    %v108 = vld [vmem:[%s1 + $0x268] sm:$0xff]
    %v109 = vld [vmem:[%s1 + $0x270] sm:$0xff]
    %v110 = vld [vmem:[%s1 + $0x278] sm:$0xff]
    %v111 = vld [vmem:[%s1 + $0x280] sm:$0xff]
    %v112 = vld [vmem:[%s1 + $0x288] sm:$0xff]
    %v113 = vld [vmem:[%s1 + $0x290] sm:$0xff]
    %v114 = vld [vmem:[%s1 + $0x298] sm:$0xff]
    %v115 = vld [vmem:[%s1 + $0x2a0] sm:$0xff]
    %v116 = vld [vmem:[%s1 + $0x2a8] sm:$0xff]
    %v117 = vld [vmem:[%s1 + $0x2b0] sm:$0xff]
    %v118 = vld [vmem:[%s1 + $0x2b8] sm:$0xff]
    %v119 = vld [vmem:[%s1 + $0x2c0] sm:$0xff]
    %v120 = vld [vmem:[%s1 + $0x2c8] sm:$0xff]
    %v121 = vld [vmem:[%s1 + $0x2d0] sm:$0xff]
    %v122 = vld [vmem:[%s1 + $0x2d8] sm:$0xff]
    %v123 = vld [vmem:[%s1 + $0x2e0] sm:$0xff]
    %v124 = vld [vmem:[%s1 + $0x2e8] sm:$0xff]
    %v125 = vld [vmem:[%s1 + $0x2f0] sm:$0xff]
    %v126 = vld [vmem:[%s1 + $0x2f8] sm:$0xff]
    %v127 = vld [vmem:[%s1 + $0x300] sm:$0xff]
    %v128 = vld [vmem:[%s1 + $0x308] sm:$0xff]
    %v129 = vld [vmem:[%s1 + $0x310] sm:$0xff]
    %v130 = vld [vmem:[%s1 + $0x318] sm:$0xff]
    %v131 = vld [vmem:[%s1 + $0x320] sm:$0xff]
    %v132 = vld [vmem:[%s1 + $0x328] sm:$0xff]
    %v133 = vld [vmem:[%s1 + $0x330] sm:$0xff]
    %v134 = vld [vmem:[%s1 + $0x338] sm:$0xff]
    %v135 = vld [vmem:[%s1 + $0x340] sm:$0xff]
    %v136 = vld [vmem:[%s1 + $0x348] sm:$0xff]
    %v137 = vld [vmem:[%s1 + $0x350] sm:$0xff]
    %v138 = vld [vmem:[%s1 + $0x358] sm:$0xff]
    %v139 = vld [vmem:[%s1 + $0x360] sm:$0xff]
    %v140 = vld [vmem:[%s1 + $0x368] sm:$0xff]
    %v141 = vld [vmem:[%s1 + $0x370] sm:$0xff]
    %v142 = vld [vmem:[%s1 + $0x378] sm:$0xff]
    %v143 = vld [vmem:[%s1 + $0x380] sm:$0xff]
    %v144 = vld [vmem:[%s1 + $0x388] sm:$0xff]
    %v145 = vld [vmem:[%s1 + $0x390] sm:$0xff]
    %v146 = vld [vmem:[%s1 + $0x398] sm:$0xff]
    %v147 = vld [vmem:[%s1 + $0x3a0] sm:$0xff]
    %v148 = vld [vmem:[%s1 + $0x3a8] sm:$0xff]
    %v149 = vld [vmem:[%s1 + $0x3b0] sm:$0xff]
    %v150 = vld [vmem:[%s1 + $0x3b8] sm:$0xff]
    %v151 = vld [vmem:[%s1 + $0x3c0] sm:$0xff]
    %v152 = vld [vmem:[%s1 + $0x3c8] sm:$0xff]
    %v153 = vld [vmem:[%s1 + $0x3d0] sm:$0xff]
    %v154 = vld [vmem:[%s1 + $0x3d8] sm:$0xff]
    %v155 = vld [vmem:[%s1 + $0x3e0] sm:$0xff]
    %v156 = vld [vmem:[%s1 + $0x3e8] sm:$0xff]
    %v157 = vld [vmem:[%s1 + $0x3f0] sm:$0xff]
    %v158 = vld [vmem:[%s1 + $0x3f8] sm:$0xff]
    %v159 = vld [vmem:[%s1 + $0x400] sm:$0xff]
    %v160 = vld [vmem:[%s1 + $0x408] sm:$0xff]
    %v161 = vld [vmem:[%s1 + $0x410] sm:$0xff]
    %v162 = vld [vmem:[%s1 + $0x418] sm:$0xff]
    %v163 = vld [vmem:[%s1 + $0x420] sm:$0xff]
    %v164 = vld [vmem:[%s1 + $0x428] sm:$0xff]
    %v165 = vld [vmem:[%s1 + $0x430] sm:$0xff]
    %v166 = vld [vmem:[%s1 + $0x438] sm:$0xff]
    %v167 = vld [vmem:[%s1 + $0x440] sm:$0xff]
    %v168 = vld [vmem:[%s1 + $0x448] sm:$0xff]
    %v169 = vld [vmem:[%s1 + $0x450] sm:$0xff]
    %v170 = vld [vmem:[%s1 + $0x458] sm:$0xff]
    %v171 = vld [vmem:[%s1 + $0x460] sm:$0xff]
    %v172 = vld [vmem:[%s1 + $0x468] sm:$0xff]
    %v173 = vld [vmem:[%s1 + $0x470] sm:$0xff]
    %v174 = vld [vmem:[%s1 + $0x478] sm:$0xff]
    %v175 = vld [vmem:[%s1 + $0x480] sm:$0xff]
    %v176 = vld [vmem:[%s1 + $0x488] sm:$0xff]
    %v177 = vld [vmem:[%s1 + $0x490] sm:$0xff]
    %v178 = vld [vmem:[%s1 + $0x498] sm:$0xff]
    %v179 = vld [vmem:[%s1 + $0x4a0] sm:$0xff]
    %v180 = vld [vmem:[%s1 + $0x4a8] sm:$0xff]
    %v181 = vld [vmem:[%s1 + $0x4b0] sm:$0xff]
    %v182 = vld [vmem:[%s1 + $0x4b8] sm:$0xff]
    %v183 = vld [vmem:[%s1 + $0x4c0] sm:$0xff]
    %v184 = vld [vmem:[%s1 + $0x4c8] sm:$0xff]
    %v185 = vld [vmem:[%s1 + $0x4d0] sm:$0xff]
    %v186 = vld [vmem:[%s1 + $0x4d8] sm:$0xff]
    %v187 = vld [vmem:[%s1 + $0x4e0] sm:$0xff]
    %v188 = vld [vmem:[%s1 + $0x4e8] sm:$0xff]
    %v189 = vld [vmem:[%s1 + $0x4f0] sm:$0xff]
    %v190 = vld [vmem:[%s1 + $0x4f8] sm:$0xff]
    %v191 = vld [vmem:[%s1 + $0x500] sm:$0xff]
    %v192 = vld [vmem:[%s1 + $0x508] sm:$0xff]
    %v193 = vld [vmem:[%s1 + $0x510] sm:$0xff]
    %v194 = vld [vmem:[%s1 + $0x518] sm:$0xff]
    %v195 = vld [vmem:[%s1 + $0x520] sm:$0xff]
    %v196 = vld [vmem:[%s1 + $0x528] sm:$0xff]
    %v197 = vld [vmem:[%s1 + $0x530] sm:$0xff]
    %v198 = vld [vmem:[%s1 + $0x538] sm:$0xff]
    %v199 = vld [vmem:[%s1 + $0x540] sm:$0xff]
    %v200 = vld [vmem:[%s1 + $0x548] sm:$0xff]
    %v201 = vld [vmem:[%s1 + $0x550] sm:$0xff]
    %v202 = vld [vmem:[%s1 + $0x558] sm:$0xff]
    %v203 = vld [vmem:[%s1 + $0x560] sm:$0xff]
    %v204 = vld [vmem:[%s1 + $0x568] sm:$0xff]
    %v205 = vld [vmem:[%s1 + $0x570] sm:$0xff]
    %v206 = vld [vmem:[%s1 + $0x578] sm:$0xff]
    %v207 = vld [vmem:[%s1 + $0x580] sm:$0xff]
    %v208 = vld [vmem:[%s1 + $0x588] sm:$0xff]
    %v209 = vld [vmem:[%s1 + $0x590] sm:$0xff]
    %v210 = vld [vmem:[%s1 + $0x598] sm:$0xff]
    %v211 = vld [vmem:[%s1 + $0x5a0] sm:$0xff]
    %v212 = vld [vmem:[%s1 + $0x5a8] sm:$0xff]
    %v213 = vld [vmem:[%s1 + $0x5b0] sm:$0xff]
    %v214 = vld [vmem:[%s1 + $0x5b8] sm:$0xff]
    %v215 = vld [vmem:[%s1 + $0x5c0] sm:$0xff]
    %v216 = vld [vmem:[%s1 + $0x5c8] sm:$0xff]
    %v217 = vld [vmem:[%s1 + $0x5d0] sm:$0xff]
    %v218 = vld [vmem:[%s1 + $0x5d8] sm:$0xff]
    %v219 = vld [vmem:[%s1 + $0x5e0] sm:$0xff]
    %v220 = vld [vmem:[%s1 + $0x5e8] sm:$0xff]
    %v221 = vld [vmem:[%s1 + $0x5f0] sm:$0xff]
    %v222 = vld [vmem:[%s1 + $0x5f8] sm:$0xff]
    %v223 = vld [vmem:[%s1 + $0x600] sm:$0xff]
    %v224 = vld [vmem:[%s1 + $0x608] sm:$0xff]
    %v225 = vld [vmem:[%s1 + $0x610] sm:$0xff]
    %v226 = vld [vmem:[%s1 + $0x618] sm:$0xff]
    %v227 = vld [vmem:[%s1 + $0x620] sm:$0xff]
    %v228 = vld [vmem:[%s1 + $0x628] sm:$0xff]
    %v229 = vld [vmem:[%s1 + $0x630] sm:$0xff]
    %v230 = vld [vmem:[%s1 + $0x638] sm:$0xff]
    %v231 = vld [vmem:[%s1 + $0x640] sm:$0xff]
    %v232 = vld [vmem:[%s1 + $0x648] sm:$0xff]
    %v233 = vld [vmem:[%s1 + $0x650] sm:$0xff]
    %v234 = vld [vmem:[%s1 + $0x658] sm:$0xff]
    %v235 = vld [vmem:[%s1 + $0x660] sm:$0xff]
    %v236 = vld [vmem:[%s1 + $0x668] sm:$0xff]
    %v237 = vld [vmem:[%s1 + $0x670] sm:$0xff]
    %v238 = vld [vmem:[%s1 + $0x678] sm:$0xff]
    %v239 = vld [vmem:[%s1 + $0x680] sm:$0xff]
    %v240 = vld [vmem:[%s1 + $0x688] sm:$0xff]
    %v241 = vld [vmem:[%s1 + $0x690] sm:$0xff]
    %v242 = vld [vmem:[%s1 + $0x698] sm:$0xff]
    %v243 = vld [vmem:[%s1 + $0x6a0] sm:$0xff]
    %v244 = vld [vmem:[%s1 + $0x6a8] sm:$0xff]
    %v245 = vld [vmem:[%s1 + $0x6b0] sm:$0xff]
    %v246 = vld [vmem:[%s1 + $0x6b8] sm:$0xff]
    %v247 = vld [vmem:[%s1 + $0x6c0] sm:$0xff]
    %v248 = vld [vmem:[%s1 + $0x6c8] sm:$0xff]
    %v249 = vld [vmem:[%s1 + $0x6d0] sm:$0xff]
    %v250 = vld [vmem:[%s1 + $0x6d8] sm:$0xff]
    %v251 = vld [vmem:[%s1 + $0x6e0] sm:$0xff]
    %v252 = vld [vmem:[%s1 + $0x6e8] sm:$0xff]
    %v253 = vld [vmem:[%s1 + $0x6f0] sm:$0xff]
    %v254 = vld [vmem:[%s1 + $0x6f8] sm:$0xff]
    %v255 = vld [vmem:[%s1 + $0x700] sm:$0xff]
    %v256 = vld [vmem:[%s1 + $0x708] sm:$0xff]
    %v257 = vld [vmem:[%s1 + $0x710] sm:$0xff]
    %v258 = vld [vmem:[%s1 + $0x718] sm:$0xff]
    %v259 = vld [vmem:[%s1 + $0x720] sm:$0xff]
    %v260 = vld [vmem:[%s1 + $0x728] sm:$0xff]
    %v261 = vld [vmem:[%s1 + $0x730] sm:$0xff]
    %v262 = vld [vmem:[%s1 + $0x738] sm:$0xff]
    %v263 = vld [vmem:[%s1 + $0x740] sm:$0xff]
    %v264 = vld [vmem:[%s1 + $0x748] sm:$0xff]
    %v265 = vld [vmem:[%s1 + $0x750] sm:$0xff]
    %v266 = vld [vmem:[%s1 + $0x758] sm:$0xff]
    %v267 = vld [vmem:[%s1 + $0x760] sm:$0xff]
    %v268 = vld [vmem:[%s1 + $0x768] sm:$0xff]
    %v269 = vld [vmem:[%s1 + $0x770] sm:$0xff]
    %v270 = vld [vmem:[%s1 + $0x778] sm:$0xff]
    %v271 = vld [vmem:[%s1 + $0x780] sm:$0xff]
    %v272 = vld [vmem:[%s1 + $0x788] sm:$0xff]
    %v273 = vld [vmem:[%s1 + $0x790] sm:$0xff]
    %v274 = vld [vmem:[%s1 + $0x798] sm:$0xff]
    %v275 = vld [vmem:[%s1 + $0x7a0] sm:$0xff]
    %v276 = vld [vmem:[%s1 + $0x7a8] sm:$0xff]
    %v277 = vld [vmem:[%s1 + $0x7b0] sm:$0xff]
    %v278 = vld [vmem:[%s1 + $0x7b8] sm:$0xff]
    %v279 = vld [vmem:[%s1 + $0x7c0] sm:$0xff]
    %v280 = vld [vmem:[%s1 + $0x7c8] sm:$0xff]
    %v281 = vld [vmem:[%s1 + $0x7d0] sm:$0xff]
    %v282 = vld [vmem:[%s1 + $0x7d8] sm:$0xff]
    %v283 = vld [vmem:[%s1 + $0x7e0] sm:$0xff]
    %v284 = vld [vmem:[%s1 + $0x7e8] sm:$0xff]
    %v285 = vld [vmem:[%s1 + $0x7f0] sm:$0xff]
    %v286 = vld [vmem:[%s1 + $0x7f8] sm:$0xff]
    %v287 = vld [vmem:[%s1 + $0x800] sm:$0xff]
    %v288 = vld [vmem:[%s1 + $0x808] sm:$0xff]
    %v289 = vld [vmem:[%s1 + $0x810] sm:$0xff]
    %v290 = vld [vmem:[%s1 + $0x818] sm:$0xff]
    %v291 = vld [vmem:[%s1 + $0x820] sm:$0xff]
    %v292 = vld [vmem:[%s1 + $0x828] sm:$0xff]
    %v293 = vld [vmem:[%s1 + $0x830] sm:$0xff]
    %v294 = vld [vmem:[%s1 + $0x838] sm:$0xff]
    %v295 = vld [vmem:[%s1 + $0x840] sm:$0xff]
    %v296 = vld [vmem:[%s1 + $0x848] sm:$0xff]
    %v297 = vld [vmem:[%s1 + $0x850] sm:$0xff]
    %v298 = vld [vmem:[%s1 + $0x858] sm:$0xff]
    %v299 = vld [vmem:[%s1 + $0x860] sm:$0xff]
    %v300 = vld [vmem:[%s1 + $0x868] sm:$0xff]
    %v301 = vld [vmem:[%s1 + $0x870] sm:$0xff]
    %v302 = vld [vmem:[%s1 + $0x878] sm:$0xff]
    %v303 = vld [vmem:[%s1 + $0x880] sm:$0xff]
    %v304 = vld [vmem:[%s1 + $0x888] sm:$0xff]
    %v305 = vld [vmem:[%s1 + $0x890] sm:$0xff]
    %v306 = vld [vmem:[%s1 + $0x898] sm:$0xff]
    %v307 = vld [vmem:[%s1 + $0x8a0] sm:$0xff]
    %v308 = vld [vmem:[%s1 + $0x8a8] sm:$0xff]
    %v309 = vld [vmem:[%s1 + $0x8b0] sm:$0xff]
    %v310 = vld [vmem:[%s1 + $0x8b8] sm:$0xff]
    %v311 = vld [vmem:[%s1 + $0x8c0] sm:$0xff]
    %v312 = vld [vmem:[%s1 + $0x8c8] sm:$0xff]
    %v313 = vld [vmem:[%s1 + $0x8d0] sm:$0xff]
    %v314 = vld [vmem:[%s1 + $0x8d8] sm:$0xff]
    %v315 = vld [vmem:[%s1 + $0x8e0] sm:$0xff]
    %v316 = vld [vmem:[%s1 + $0x8e8] sm:$0xff]
    %v317 = vld [vmem:[%s1 + $0x8f0] sm:$0xff]
    %v318 = vld [vmem:[%s1 + $0x8f8] sm:$0xff]
    %v319 = vld [vmem:[%s1 + $0x900] sm:$0xff]
    %v320 = vld [vmem:[%s1 + $0x908] sm:$0xff]
    %v321 = vld [vmem:[%s1 + $0x910] sm:$0xff]
    %v322 = vld [vmem:[%s1 + $0x918] sm:$0xff]
    %v323 = vld [vmem:[%s1 + $0x920] sm:$0xff]
    %v324 = vld [vmem:[%s1 + $0x928] sm:$0xff]
    %v325 = vld [vmem:[%s1 + $0x930] sm:$0xff]
    %v326 = vld [vmem:[%s1 + $0x938] sm:$0xff]
    %v327 = vld [vmem:[%s1 + $0x940] sm:$0xff]
    %v328 = vld [vmem:[%s1 + $0x948] sm:$0xff]
    %v329 = vld [vmem:[%s1 + $0x950] sm:$0xff]
    %v330 = vld [vmem:[%s1 + $0x958] sm:$0xff]
    %v331 = vld [vmem:[%s1 + $0x960] sm:$0xff]
    %v332 = vld [vmem:[%s1 + $0x968] sm:$0xff]
    %v333 = vld [vmem:[%s1 + $0x970] sm:$0xff]
    %v334 = vld [vmem:[%s1 + $0x978] sm:$0xff]
    %v335 = vld [vmem:[%s1 + $0x980] sm:$0xff]
    %v336 = vld [vmem:[%s1 + $0x988] sm:$0xff]
    %v337 = vld [vmem:[%s1 + $0x990] sm:$0xff]
    %v338 = vld [vmem:[%s1 + $0x998] sm:$0xff]
    %v339 = vld [vmem:[%s1 + $0x9a0] sm:$0xff]
    %v340 = vld [vmem:[%s1 + $0x9a8] sm:$0xff]
    %v341 = vld [vmem:[%s1 + $0x9b0] sm:$0xff]
    %v342 = vld [vmem:[%s1 + $0x9b8] sm:$0xff]
    %v343 = vld [vmem:[%s1 + $0x9c0] sm:$0xff]
    %v344 = vld [vmem:[%s1 + $0x9c8] sm:$0xff]
    %v345 = vld [vmem:[%s1 + $0x9d0] sm:$0xff]
    %v346 = vld [vmem:[%s1 + $0x9d8] sm:$0xff]
    %v347 = vld [vmem:[%s1 + $0x9e0] sm:$0xff]
    %v348 = vld [vmem:[%s1 + $0x9e8] sm:$0xff]
    %v349 = vld [vmem:[%s1 + $0x9f0] sm:$0xff]
    %v350 = vld [vmem:[%s1 + $0x9f8] sm:$0xff]
    %v351 = vld [vmem:[%s3] sm:$0xff]
    %v352 = vld [vmem:[%s4] sm:$0xff]
    %v353 = vld [vmem:[%s5] sm:$0xff]
    %v354 = vld [vmem:[%s5 + $0x8] sm:$0xff]
    %v355 = vld [vmem:[%s5 + $0x10] sm:$0xff]
    %v356 = vld [vmem:[%s5 + $0x18] sm:$0xff]
    %v357 = vld [vmem:[%s6] sm:$0xff]
    %v358 = vld [vmem:[%s6 + $0x8] sm:$0xff]
    %v359 = vld [vmem:[%s6 + $0x10] sm:$0xff]
    %v360 = vld [vmem:[%s6 + $0x18] sm:$0xff]
    loop: start=0, step=1, limit=2
    $region30: #{attention_forward.1} parent=1 // loop_pre_header
      _
    $region31: #{attention_forward.1} parent=1 // loop_header
      %s362 = sphi 0, %s366
      %p363 = scmp.ge.s32.totalorder %s362, 2
    $region32: #{attention_forward.1} parent=1 // loop_header_branch
      %365 = sbr.rel (%p363) target = $region36
    $region33: #{attention_forward.1} parent=1 // loop_body
      %s367 = smul.u32 %s362, 80
      %s368 = smul.addr %s367, 8
      %s369 = scalar_lea.vmem %s0, %s368
      %v370 = vld [vmem:[%s369] sm:$0xff]
      %v371 = vld [vmem:[%s369 + $0x8] sm:$0xff]
      %v372 = vld [vmem:[%s369 + $0x10] sm:$0xff]
      %v373 = vld [vmem:[%s369 + $0x18] sm:$0xff]
      %v374 = vld [vmem:[%s369 + $0x20] sm:$0xff]
      %v375 = vld [vmem:[%s369 + $0x28] sm:$0xff]
      %v376 = vld [vmem:[%s369 + $0x30] sm:$0xff]
      %v377 = vld [vmem:[%s369 + $0x38] sm:$0xff]
      %v378 = vld [vmem:[%s369 + $0x40] sm:$0xff]
      %v379 = vld [vmem:[%s369 + $0x48] sm:$0xff]
      %v380 = vld [vmem:[%s369 + $0x50] sm:$0xff]
      %v381 = vld [vmem:[%s369 + $0x58] sm:$0xff]
      %v382 = vld [vmem:[%s369 + $0x60] sm:$0xff]
      %v383 = vld [vmem:[%s369 + $0x68] sm:$0xff]
      %v384 = vld [vmem:[%s369 + $0x70] sm:$0xff]
      %v385 = vld [vmem:[%s369 + $0x78] sm:$0xff]
      %v386 = vld [vmem:[%s369 + $0x80] sm:$0xff]
      %v387 = vld [vmem:[%s369 + $0x88] sm:$0xff]
      %v388 = vld [vmem:[%s369 + $0x90] sm:$0xff]
      %v389 = vld [vmem:[%s369 + $0x98] sm:$0xff]
      %v390 = vld [vmem:[%s369 + $0xa0] sm:$0xff]
      %v391 = vld [vmem:[%s369 + $0xa8] sm:$0xff]
      %v392 = vld [vmem:[%s369 + $0xb0] sm:$0xff]
      %v393 = vld [vmem:[%s369 + $0xb8] sm:$0xff]
      %v394 = vld [vmem:[%s369 + $0xc0] sm:$0xff]
      %v395 = vld [vmem:[%s369 + $0xc8] sm:$0xff]
      %v396 = vld [vmem:[%s369 + $0xd0] sm:$0xff]
      %v397 = vld [vmem:[%s369 + $0xd8] sm:$0xff]
      %v398 = vld [vmem:[%s369 + $0xe0] sm:$0xff]
      %v399 = vld [vmem:[%s369 + $0xe8] sm:$0xff]
      %v400 = vld [vmem:[%s369 + $0xf0] sm:$0xff]
      %v401 = vld [vmem:[%s369 + $0xf8] sm:$0xff]
      %v402 = vld [vmem:[%s369 + $0x100] sm:$0xff]
      %v403 = vld [vmem:[%s369 + $0x108] sm:$0xff]
      %v404 = vld [vmem:[%s369 + $0x110] sm:$0xff]
      %v405 = vld [vmem:[%s369 + $0x118] sm:$0xff]
      %v406 = vld [vmem:[%s369 + $0x120] sm:$0xff]
      %v407 = vld [vmem:[%s369 + $0x128] sm:$0xff]
      %v408 = vld [vmem:[%s369 + $0x130] sm:$0xff]
      %v409 = vld [vmem:[%s369 + $0x138] sm:$0xff]
      %v410 = vld [vmem:[%s369 + $0x140] sm:$0xff]
      %v411 = vld [vmem:[%s369 + $0x148] sm:$0xff]
      %v412 = vld [vmem:[%s369 + $0x150] sm:$0xff]
      %v413 = vld [vmem:[%s369 + $0x158] sm:$0xff]
      %v414 = vld [vmem:[%s369 + $0x160] sm:$0xff]
      %v415 = vld [vmem:[%s369 + $0x168] sm:$0xff]
      %v416 = vld [vmem:[%s369 + $0x170] sm:$0xff]
      %v417 = vld [vmem:[%s369 + $0x178] sm:$0xff]
      %v418 = vld [vmem:[%s369 + $0x180] sm:$0xff]
      %v419 = vld [vmem:[%s369 + $0x188] sm:$0xff]
      %v420 = vld [vmem:[%s369 + $0x190] sm:$0xff]
      %v421 = vld [vmem:[%s369 + $0x198] sm:$0xff]
      %v422 = vld [vmem:[%s369 + $0x1a0] sm:$0xff]
      %v423 = vld [vmem:[%s369 + $0x1a8] sm:$0xff]
      %v424 = vld [vmem:[%s369 + $0x1b0] sm:$0xff]
      %v425 = vld [vmem:[%s369 + $0x1b8] sm:$0xff]
      %v426 = vld [vmem:[%s369 + $0x1c0] sm:$0xff]
      %v427 = vld [vmem:[%s369 + $0x1c8] sm:$0xff]
      %v428 = vld [vmem:[%s369 + $0x1d0] sm:$0xff]
      %v429 = vld [vmem:[%s369 + $0x1d8] sm:$0xff]
      %v430 = vld [vmem:[%s369 + $0x1e0] sm:$0xff]
      %v431 = vld [vmem:[%s369 + $0x1e8] sm:$0xff]
      %v432 = vld [vmem:[%s369 + $0x1f0] sm:$0xff]
      %v433 = vld [vmem:[%s369 + $0x1f8] sm:$0xff]
      %v434 = vld [vmem:[%s369 + $0x200] sm:$0xff]
      %v435 = vld [vmem:[%s369 + $0x208] sm:$0xff]
      %v436 = vld [vmem:[%s369 + $0x210] sm:$0xff]
      %v437 = vld [vmem:[%s369 + $0x218] sm:$0xff]
      %v438 = vld [vmem:[%s369 + $0x220] sm:$0xff]
      %v439 = vld [vmem:[%s369 + $0x228] sm:$0xff]
      %v440 = vld [vmem:[%s369 + $0x230] sm:$0xff]
      %v441 = vld [vmem:[%s369 + $0x238] sm:$0xff]
      %v442 = vld [vmem:[%s369 + $0x240] sm:$0xff]
      %v443 = vld [vmem:[%s369 + $0x248] sm:$0xff]
      %v444 = vld [vmem:[%s369 + $0x250] sm:$0xff]
      %v445 = vld [vmem:[%s369 + $0x258] sm:$0xff]
      %v446 = vld [vmem:[%s369 + $0x260] sm:$0xff]
      %v447 = vld [vmem:[%s369 + $0x268] sm:$0xff]
      %v448 = vld [vmem:[%s369 + $0x270] sm:$0xff]
      %v449 = vld [vmem:[%s369 + $0x278] sm:$0xff]
      %vm450 = vcmask 261120
      %v452 = vsel %vm450, %v27, 0
      %v455 = vsel %vm450, %v28, 0
      %v458 = vsel %vm450, %v29, 0
      %v461 = vsel %vm450, %v30, 0
      %463 = vmatprep.subr.mxu0 %v371
      %464 = vmatpush1.msra.mxu0 %v370
      %465 = vmatprep.subr.mxu0 %v391
      %466 = vmatpush1.msra.mxu0 %v390
      %467 = vmatprep.subr.mxu0 %v411
      %468 = vmatpush1.msra.mxu0 %v410
      %469 = vmatprep.subr.mxu0 %v431
      %470 = vmatpush1.msra.mxu0 %v430
      %471 = vmatprep.subr.mxu0 0.0
      %472 = vmatpush1.msra.mxu0 0.0
      %473 = vmatprep.subr.mxu0 0.0
      %474 = vmatpush1.msra.mxu0 0.0
      %475 = vmatprep.subr.mxu0 0.0
      %476 = vmatpush1.msra.mxu0 0.0
      %477 = vmatprep.subr.mxu0 0.0
      %478 = vmatpush1.msra.mxu0 0.0
      %479 = vmatprep.subr.mxu0 0.0
      %480 = vmatpush1.msra.mxu0 0.0
      %481 = vmatprep.subr.mxu0 0.0
      %482 = vmatpush1.msra.mxu0 0.0
      %483 = vmatprep.subr.mxu0 0.0
      %484 = vmatpush1.msra.mxu0 0.0
      %485 = vmatprep.subr.mxu0 0.0
      %486 = vmatpush1.msra.mxu0 0.0
      %487 = vmatprep.subr.mxu0 0.0
      %488 = vmatpush1.msra.mxu0 0.0
      %489 = vmatprep.subr.mxu0 0.0
      %490 = vmatpush1.msra.mxu0 0.0
      %491 = vmatprep.subr.mxu0 0.0
      %492 = vmatpush1.msra.mxu0 0.0
      %493 = vmatprep.subr.mxu0 0.0
      %494 = vmatpush1.msra.mxu0 0.0
      %495 = vmatprep.subr.mxu0 0.0
      %496 = vmatpush1.msra.mxu0 0.0
      %497 = vmatprep.subr.mxu0 0.0
      %498 = vmatpush1.msra.mxu0 0.0
      %499 = vmatprep.subr.mxu0 0.0
      %500 = vmatpush1.msra.mxu0 0.0
      %501 = vmatprep.subr.mxu0 0.0
      %502 = vmatpush1.msra.mxu0 0.0
      %503 = vmatprep.subr.mxu0 0.0
      %504 = vmatpush1.msra.mxu0 0.0
      %505 = vmatprep.subr.mxu0 0.0
      %506 = vmatpush1.msra.mxu0 0.0
      %507 = vmatprep.subr.mxu0 0.0
      %508 = vmatpush1.msra.mxu0 0.0
      %509 = vmatprep.subr.mxu0 0.0
      %510 = vmatpush1.msra.mxu0 0.0
      %511 = vmatprep.subr.mxu0 0.0
      %512 = vmatpush1.msra.mxu0 0.0
      %513 = vmatprep.subr.mxu0 0.0
      %514 = vmatpush1.msra.mxu0 0.0
      %515 = vmatprep.subr.mxu0 0.0
      %516 = vmatpush1.msra.mxu0 0.0
      %517 = vmatprep.subr.mxu0 0.0
      %518 = vmatpush1.msra.mxu0 0.0
      %519 = vmatprep.subr.mxu0 0.0
      %520 = vmatpush1.msra.mxu0 0.0
      %521 = vmatprep.subr.mxu0 0.0
      %522 = vmatpush1.msra.mxu0 0.0
      %523 = vmatprep.subr.mxu0 0.0
      %524 = vmatpush1.msra.mxu0 0.0
      %525 = vmatprep.subr.mxu0 0.0
      %526 = vmatpush1.msra.mxu0 0.0
      %527 = vmatprep.mubr.f32.mxu0 0.0
      %528 = vmatmul.mubr.f32.gmra.mrb[0].mxu0 %v452
      %v529 = vpop.f32.mrb[0].mxu0
      %v530 = vadd.f32 0.0, %v529
      %v531 = vpop.f32.mrb[0].mxu0
      %v532 = vadd.f32 0.0, %v531
      %533 = vmatprep.mubr.f32.mxu0 0.0
      %534 = vmatmul.mubr.f32.gmra.mrb[0].mxu0 %v455
      %v535 = vpop.f32.mrb[0].mxu0
      %v536 = vadd.f32 0.0, %v535
      %v537 = vpop.f32.mrb[0].mxu0
      %v538 = vadd.f32 0.0, %v537
      %539 = vmatprep.mubr.f32.mxu0 0.0
      %540 = vmatmul.mubr.f32.gmra.mrb[0].mxu0 %v458
      %v541 = vpop.f32.mrb[0].mxu0
      %v542 = vadd.f32 0.0, %v541
      %v543 = vpop.f32.mrb[0].mxu0
      %v544 = vadd.f32 0.0, %v543
      %545 = vmatprep.mubr.f32.mxu0 0.0
      %546 = vmatmul.mubr.f32.gmra.mrb[0].mxu0 %v461
      %v547 = vpop.f32.mrb[0].mxu0
      %v548 = vadd.f32 0.0, %v547
      %v549 = vpop.f32.mrb[0].mxu0
      %v550 = vadd.f32 0.0, %v549
      %551 = vdwg.mxu0
      %552 = vmatprep.subr.mxu0 %v373
      %553 = vmatpush1.msra.mxu0 %v372
      %554 = vmatprep.subr.mxu0 %v393
      %555 = vmatpush1.msra.mxu0 %v392
      %556 = vmatprep.subr.mxu0 %v413
      %557 = vmatpush1.msra.mxu0 %v412
      %558 = vmatprep.subr.mxu0 %v433
      %559 = vmatpush1.msra.mxu0 %v432
      %560 = vmatprep.subr.mxu0 0.0
      %561 = vmatpush1.msra.mxu0 0.0
      %562 = vmatprep.subr.mxu0 0.0
      %563 = vmatpush1.msra.mxu0 0.0
      %564 = vmatprep.subr.mxu0 0.0
      %565 = vmatpush1.msra.mxu0 0.0
      %566 = vmatprep.subr.mxu0 0.0
      %567 = vmatpush1.msra.mxu0 0.0
      %568 = vmatprep.subr.mxu0 0.0
      %569 = vmatpush1.msra.mxu0 0.0
      %570 = vmatprep.subr.mxu0 0.0
      %571 = vmatpush1.msra.mxu0 0.0
      %572 = vmatprep.subr.mxu0 0.0
      %573 = vmatpush1.msra.mxu0 0.0
      %574 = vmatprep.subr.mxu0 0.0
      %575 = vmatpush1.msra.mxu0 0.0
      %576 = vmatprep.subr.mxu0 0.0
      %577 = vmatpush1.msra.mxu0 0.0
      %578 = vmatprep.subr.mxu0 0.0
      %579 = vmatpush1.msra.mxu0 0.0
      %580 = vmatprep.subr.mxu0 0.0
      %581 = vmatpush1.msra.mxu0 0.0
      %582 = vmatprep.subr.mxu0 0.0
      %583 = vmatpush1.msra.mxu0 0.0
      %584 = vmatprep.subr.mxu0 0.0
      %585 = vmatpush1.msra.mxu0 0.0
      %586 = vmatprep.subr.mxu0 0.0
      %587 = vmatpush1.msra.mxu0 0.0
      %588 = vmatprep.subr.mxu0 0.0
      %589 = vmatpush1.msra.mxu0 0.0
      %590 = vmatprep.subr.mxu0 0.0
      %591 = vmatpush1.msra.mxu0 0.0
      %592 = vmatprep.subr.mxu0 0.0
      %593 = vmatpush1.msra.mxu0 0.0
      %594 = vmatprep.subr.mxu0 0.0
      %595 = vmatpush1.msra.mxu0 0.0
      %596 = vmatprep.subr.mxu0 0.0
      %597 = vmatpush1.msra.mxu0 0.0
      %598 = vmatprep.subr.mxu0 0.0
      %599 = vmatpush1.msra.mxu0 0.0
      %600 = vmatprep.subr.mxu0 0.0
      %601 = vmatpush1.msra.mxu0 0.0
      %602 = vmatprep.subr.mxu0 0.0
      %603 = vmatpush1.msra.mxu0 0.0
      %604 = vmatprep.subr.mxu0 0.0
      %605 = vmatpush1.msra.mxu0 0.0
      %606 = vmatprep.subr.mxu0 0.0
      %607 = vmatpush1.msra.mxu0 0.0
      %608 = vmatprep.subr.mxu0 0.0
      %609 = vmatpush1.msra.mxu0 0.0
      %610 = vmatprep.subr.mxu0 0.0
      %611 = vmatpush1.msra.mxu0 0.0
      %612 = vmatprep.subr.mxu0 0.0
      %613 = vmatpush1.msra.mxu0 0.0
      %614 = vmatprep.subr.mxu0 0.0
      %615 = vmatpush1.msra.mxu0 0.0
      %616 = vmatprep.mubr.f32.mxu0 0.0
      %617 = vmatmul.mubr.f32.gmra.mrb[0].mxu0 %v452
      %v618 = vpop.f32.mrb[0].mxu0
      %v619 = vadd.f32 0.0, %v618
      %v620 = vpop.f32.mrb[0].mxu0
      %v621 = vadd.f32 0.0, %v620
      %622 = vmatprep.mubr.f32.mxu0 0.0
      %623 = vmatmul.mubr.f32.gmra.mrb[0].mxu0 %v455
      %v624 = vpop.f32.mrb[0].mxu0
      %v625 = vadd.f32 0.0, %v624
      %v626 = vpop.f32.mrb[0].mxu0
      %v627 = vadd.f32 0.0, %v626
      %628 = vmatprep.mubr.f32.mxu0 0.0
      %629 = vmatmul.mubr.f32.gmra.mrb[0].mxu0 %v458
      %v630 = vpop.f32.mrb[0].mxu0
      %v631 = vadd.f32 0.0, %v630
      %v632 = vpop.f32.mrb[0].mxu0
      %v633 = vadd.f32 0.0, %v632
      %634 = vmatprep.mubr.f32.mxu0 0.0
      %635 = vmatmul.mubr.f32.gmra.mrb[0].mxu0 %v461
      %v636 = vpop.f32.mrb[0].mxu0
      %v637 = vadd.f32 0.0, %v636
      %v638 = vpop.f32.mrb[0].mxu0
      %v639 = vadd.f32 0.0, %v638
      %640 = vdwg.mxu0
      %641 = vmatprep.subr.mxu0 %v375
      %642 = vmatpush1.msra.mxu0 %v374
      %643 = vmatprep.subr.mxu0 %v395
      %644 = vmatpush1.msra.mxu0 %v394
      %645 = vmatprep.subr.mxu0 %v415
      %646 = vmatpush1.msra.mxu0 %v414
      %647 = vmatprep.subr.mxu0 %v435
      %648 = vmatpush1.msra.mxu0 %v434
      %649 = vmatprep.subr.mxu0 0.0
      %650 = vmatpush1.msra.mxu0 0.0
      %651 = vmatprep.subr.mxu0 0.0
      %652 = vmatpush1.msra.mxu0 0.0
      %653 = vmatprep.subr.mxu0 0.0
      %654 = vmatpush1.msra.mxu0 0.0
      %655 = vmatprep.subr.mxu0 0.0
      %656 = vmatpush1.msra.mxu0 0.0
      %657 = vmatprep.subr.mxu0 0.0
      %658 = vmatpush1.msra.mxu0 0.0
      %659 = vmatprep.subr.mxu0 0.0
      %660 = vmatpush1.msra.mxu0 0.0
      %661 = vmatprep.subr.mxu0 0.0
      %662 = vmatpush1.msra.mxu0 0.0
      %663 = vmatprep.subr.mxu0 0.0
      %664 = vmatpush1.msra.mxu0 0.0
      %665 = vmatprep.subr.mxu0 0.0
      %666 = vmatpush1.msra.mxu0 0.0
      %667 = vmatprep.subr.mxu0 0.0
      %668 = vmatpush1.msra.mxu0 0.0
      %669 = vmatprep.subr.mxu0 0.0
      %670 = vmatpush1.msra.mxu0 0.0
      %671 = vmatprep.subr.mxu0 0.0
      %672 = vmatpush1.msra.mxu0 0.0
      %673 = vmatprep.subr.mxu0 0.0
      %674 = vmatpush1.msra.mxu0 0.0
      %675 = vmatprep.subr.mxu0 0.0
      %676 = vmatpush1.msra.mxu0 0.0
      %677 = vmatprep.subr.mxu0 0.0
      %678 = vmatpush1.msra.mxu0 0.0
      %679 = vmatprep.subr.mxu0 0.0
      %680 = vmatpush1.msra.mxu0 0.0
      %681 = vmatprep.subr.mxu0 0.0
      %682 = vmatpush1.msra.mxu0 0.0
      %683 = vmatprep.subr.mxu0 0.0
      %684 = vmatpush1.msra.mxu0 0.0
      %685 = vmatprep.subr.mxu0 0.0
      %686 = vmatpush1.msra.mxu0 0.0
      %687 = vmatprep.subr.mxu0 0.0
      %688 = vmatpush1.msra.mxu0 0.0
      %689 = vmatprep.subr.mxu0 0.0
      %690 = vmatpush1.msra.mxu0 0.0
      %691 = vmatprep.subr.mxu0 0.0
      %692 = vmatpush1.msra.mxu0 0.0
      %693 = vmatprep.subr.mxu0 0.0
      %694 = vmatpush1.msra.mxu0 0.0
      %695 = vmatprep.subr.mxu0 0.0
      %696 = vmatpush1.msra.mxu0 0.0
      %697 = vmatprep.subr.mxu0 0.0
      %698 = vmatpush1.msra.mxu0 0.0
      %699 = vmatprep.subr.mxu0 0.0
      %700 = vmatpush1.msra.mxu0 0.0
      %701 = vmatprep.subr.mxu0 0.0
      %702 = vmatpush1.msra.mxu0 0.0
      %703 = vmatprep.subr.mxu0 0.0
      %704 = vmatpush1.msra.mxu0 0.0
      %705 = vmatprep.mubr.f32.mxu0 0.0
      %706 = vmatmul.mubr.f32.gmra.mrb[0].mxu0 %v452
      %v707 = vpop.f32.mrb[0].mxu0
      %v708 = vadd.f32 0.0, %v707
      %v709 = vpop.f32.mrb[0].mxu0
      %v710 = vadd.f32 0.0, %v709
      %711 = vmatprep.mubr.f32.mxu0 0.0
      %712 = vmatmul.mubr.f32.gmra.mrb[0].mxu0 %v455
      %v713 = vpop.f32.mrb[0].mxu0
      %v714 = vadd.f32 0.0, %v713
      %v715 = vpop.f32.mrb[0].mxu0
      %v716 = vadd.f32 0.0, %v715
      %717 = vmatprep.mubr.f32.mxu0 0.0
      %718 = vmatmul.mubr.f32.gmra.mrb[0].mxu0 %v458
      %v719 = vpop.f32.mrb[0].mxu0
      %v720 = vadd.f32 0.0, %v719
      %v721 = vpop.f32.mrb[0].mxu0
      %v722 = vadd.f32 0.0, %v721
      %723 = vmatprep.mubr.f32.mxu0 0.0
      %724 = vmatmul.mubr.f32.gmra.mrb[0].mxu0 %v461
      %v725 = vpop.f32.mrb[0].mxu0
      %v726 = vadd.f32 0.0, %v725
      %v727 = vpop.f32.mrb[0].mxu0
      %v728 = vadd.f32 0.0, %v727
      %729 = vdwg.mxu0
      %730 = vmatprep.subr.mxu0 %v377
      %731 = vmatpush1.msra.mxu0 %v376
      %732 = vmatprep.subr.mxu0 %v397
      %733 = vmatpush1.msra.mxu0 %v396
      %734 = vmatprep.subr.mxu0 %v417
      %735 = vmatpush1.msra.mxu0 %v416
      %736 = vmatprep.subr.mxu0 %v437
      %737 = vmatpush1.msra.mxu0 %v436
      %738 = vmatprep.subr.mxu0 0.0
      %739 = vmatpush1.msra.mxu0 0.0
      %740 = vmatprep.subr.mxu0 0.0
      %741 = vmatpush1.msra.mxu0 0.0
      %742 = vmatprep.subr.mxu0 0.0
      %743 = vmatpush1.msra.mxu0 0.0
      %744 = vmatprep.subr.mxu0 0.0
      %745 = vmatpush1.msra.mxu0 0.0
      %746 = vmatprep.subr.mxu0 0.0
      %747 = vmatpush1.msra.mxu0 0.0
      %748 = vmatprep.subr.mxu0 0.0
      %749 = vmatpush1.msra.mxu0 0.0
      %750 = vmatprep.subr.mxu0 0.0
      %751 = vmatpush1.msra.mxu0 0.0
      %752 = vmatprep.subr.mxu0 0.0
      %753 = vmatpush1.msra.mxu0 0.0
      %754 = vmatprep.subr.mxu0 0.0
      %755 = vmatpush1.msra.mxu0 0.0
      %756 = vmatprep.subr.mxu0 0.0
      %757 = vmatpush1.msra.mxu0 0.0
      %758 = vmatprep.subr.mxu0 0.0
      %759 = vmatpush1.msra.mxu0 0.0
      %760 = vmatprep.subr.mxu0 0.0
      %761 = vmatpush1.msra.mxu0 0.0
      %762 = vmatprep.subr.mxu0 0.0
      %763 = vmatpush1.msra.mxu0 0.0
      %764 = vmatprep.subr.mxu0 0.0
      %765 = vmatpush1.msra.mxu0 0.0
      %766 = vmatprep.subr.mxu0 0.0
      %767 = vmatpush1.msra.mxu0 0.0
      %768 = vmatprep.subr.mxu0 0.0
      %769 = vmatpush1.msra.mxu0 0.0
      %770 = vmatprep.subr.mxu0 0.0
      %771 = vmatpush1.msra.mxu0 0.0
      %772 = vmatprep.subr.mxu0 0.0
      %773 = vmatpush1.msra.mxu0 0.0
      %774 = vmatprep.subr.mxu0 0.0
      %775 = vmatpush1.msra.mxu0 0.0
      %776 = vmatprep.subr.mxu0 0.0
      %777 = vmatpush1.msra.mxu0 0.0
      %778 = vmatprep.subr.mxu0 0.0
      %779 = vmatpush1.msra.mxu0 0.0
      %780 = vmatprep.subr.mxu0 0.0
      %781 = vmatpush1.msra.mxu0 0.0
      %782 = vmatprep.subr.mxu0 0.0
      %783 = vmatpush1.msra.mxu0 0.0
      %784 = vmatprep.subr.mxu0 0.0
      %785 = vmatpush1.msra.mxu0 0.0
      %786 = vmatprep.subr.mxu0 0.0
      %787 = vmatpush1.msra.mxu0 0.0
      %788 = vmatprep.subr.mxu0 0.0
      %789 = vmatpush1.msra.mxu0 0.0
      %790 = vmatprep.subr.mxu0 0.0
      %791 = vmatpush1.msra.mxu0 0.0
      %792 = vmatprep.subr.mxu0 0.0
      %793 = vmatpush1.msra.mxu0 0.0
      %794 = vmatprep.mubr.f32.mxu0 0.0
      %795 = vmatmul.mubr.f32.gmra.mrb[0].mxu0 %v452
      %v796 = vpop.f32.mrb[0].mxu0
      %v797 = vadd.f32 0.0, %v796
      %v798 = vpop.f32.mrb[0].mxu0
      %v799 = vadd.f32 0.0, %v798
      %800 = vmatprep.mubr.f32.mxu0 0.0
      %801 = vmatmul.mubr.f32.gmra.mrb[0].mxu0 %v455
      %v802 = vpop.f32.mrb[0].mxu0
      %v803 = vadd.f32 0.0, %v802
      %v804 = vpop.f32.mrb[0].mxu0
      %v805 = vadd.f32 0.0, %v804
      %806 = vmatprep.mubr.f32.mxu0 0.0
      %807 = vmatmul.mubr.f32.gmra.mrb[0].mxu0 %v458
      %v808 = vpop.f32.mrb[0].mxu0
      %v809 = vadd.f32 0.0, %v808
      %v810 = vpop.f32.mrb[0].mxu0
      %v811 = vadd.f32 0.0, %v810
      %812 = vmatprep.mubr.f32.mxu0 0.0
      %813 = vmatmul.mubr.f32.gmra.mrb[0].mxu0 %v461
      %v814 = vpop.f32.mrb[0].mxu0
      %v815 = vadd.f32 0.0, %v814
      %v816 = vpop.f32.mrb[0].mxu0
      %v817 = vadd.f32 0.0, %v816
      %818 = vdwg.mxu0
      %819 = vmatprep.subr.mxu0 %v379
      %820 = vmatpush1.msra.mxu0 %v378
      %821 = vmatprep.subr.mxu0 %v399
      %822 = vmatpush1.msra.mxu0 %v398
      %823 = vmatprep.subr.mxu0 %v419
      %824 = vmatpush1.msra.mxu0 %v418
      %825 = vmatprep.subr.mxu0 %v439
      %826 = vmatpush1.msra.mxu0 %v438
      %827 = vmatprep.subr.mxu0 0.0
      %828 = vmatpush1.msra.mxu0 0.0
      %829 = vmatprep.subr.mxu0 0.0
      %830 = vmatpush1.msra.mxu0 0.0
      %831 = vmatprep.subr.mxu0 0.0
      %832 = vmatpush1.msra.mxu0 0.0
      %833 = vmatprep.subr.mxu0 0.0
      %834 = vmatpush1.msra.mxu0 0.0
      %835 = vmatprep.subr.mxu0 0.0
      %836 = vmatpush1.msra.mxu0 0.0
      %837 = vmatprep.subr.mxu0 0.0
      %838 = vmatpush1.msra.mxu0 0.0
      %839 = vmatprep.subr.mxu0 0.0
      %840 = vmatpush1.msra.mxu0 0.0
      %841 = vmatprep.subr.mxu0 0.0
      %842 = vmatpush1.msra.mxu0 0.0
      %843 = vmatprep.subr.mxu0 0.0
      %844 = vmatpush1.msra.mxu0 0.0
      %845 = vmatprep.subr.mxu0 0.0
      %846 = vmatpush1.msra.mxu0 0.0
      %847 = vmatprep.subr.mxu0 0.0
      %848 = vmatpush1.msra.mxu0 0.0
      %849 = vmatprep.subr.mxu0 0.0
      %850 = vmatpush1.msra.mxu0 0.0
      %851 = vmatprep.subr.mxu0 0.0
      %852 = vmatpush1.msra.mxu0 0.0
      %853 = vmatprep.subr.mxu0 0.0
      %854 = vmatpush1.msra.mxu0 0.0
      %855 = vmatprep.subr.mxu0 0.0
      %856 = vmatpush1.msra.mxu0 0.0
      %857 = vmatprep.subr.mxu0 0.0
      %858 = vmatpush1.msra.mxu0 0.0
      %859 = vmatprep.subr.mxu0 0.0
      %860 = vmatpush1.msra.mxu0 0.0
      %861 = vmatprep.subr.mxu0 0.0
      %862 = vmatpush1.msra.mxu0 0.0
      %863 = vmatprep.subr.mxu0 0.0
      %864 = vmatpush1.msra.mxu0 0.0
      %865 = vmatprep.subr.mxu0 0.0
      %866 = vmatpush1.msra.mxu0 0.0
      %867 = vmatprep.subr.mxu0 0.0
      %868 = vmatpush1.msra.mxu0 0.0
      %869 = vmatprep.subr.mxu0 0.0
      %870 = vmatpush1.msra.mxu0 0.0
      %871 = vmatprep.subr.mxu0 0.0
      %872 = vmatpush1.msra.mxu0 0.0
      %873 = vmatprep.subr.mxu0 0.0
      %874 = vmatpush1.msra.mxu0 0.0
      %875 = vmatprep.subr.mxu0 0.0
      %876 = vmatpush1.msra.mxu0 0.0
      %877 = vmatprep.subr.mxu0 0.0
      %878 = vmatpush1.msra.mxu0 0.0
      %879 = vmatprep.subr.mxu0 0.0
      %880 = vmatpush1.msra.mxu0 0.0
      %881 = vmatprep.subr.mxu0 0.0
      %882 = vmatpush1.msra.mxu0 0.0
      %883 = vmatprep.mubr.f32.mxu0 0.0
      %884 = vmatmul.mubr.f32.gmra.mrb[0].mxu0 %v452
      %v885 = vpop.f32.mrb[0].mxu0
      %v886 = vadd.f32 0.0, %v885
      %v887 = vpop.f32.mrb[0].mxu0
      %v888 = vadd.f32 0.0, %v887
      %889 = vmatprep.mubr.f32.mxu0 0.0
      %890 = vmatmul.mubr.f32.gmra.mrb[0].mxu0 %v455
      %v891 = vpop.f32.mrb[0].mxu0
      %v892 = vadd.f32 0.0, %v891
      %v893 = vpop.f32.mrb[0].mxu0
      %v894 = vadd.f32 0.0, %v893
      %895 = vmatprep.mubr.f32.mxu0 0.0
      %896 = vmatmul.mubr.f32.gmra.mrb[0].mxu0 %v458
      %v897 = vpop.f32.mrb[0].mxu0
      %v898 = vadd.f32 0.0, %v897
      %v899 = vpop.f32.mrb[0].mxu0
      %v900 = vadd.f32 0.0, %v899
      %901 = vmatprep.mubr.f32.mxu0 0.0
      %902 = vmatmul.mubr.f32.gmra.mrb[0].mxu0 %v461
      %v903 = vpop.f32.mrb[0].mxu0
      %v904 = vadd.f32 0.0, %v903
      %v905 = vpop.f32.mrb[0].mxu0
      %v906 = vadd.f32 0.0, %v905
      %907 = vdwg.mxu0
      %908 = vmatprep.subr.mxu0 %v381
      %909 = vmatpush1.msra.mxu0 %v380
      %910 = vmatprep.subr.mxu0 %v401
      %911 = vmatpush1.msra.mxu0 %v400
      %912 = vmatprep.subr.mxu0 %v421
      %913 = vmatpush1.msra.mxu0 %v420
      %914 = vmatprep.subr.mxu0 %v441
      %915 = vmatpush1.msra.mxu0 %v440
      %916 = vmatprep.subr.mxu0 0.0
      %917 = vmatpush1.msra.mxu0 0.0
      %918 = vmatprep.subr.mxu0 0.0
      %919 = vmatpush1.msra.mxu0 0.0
      %920 = vmatprep.subr.mxu0 0.0
      %921 = vmatpush1.msra.mxu0 0.0
      %922 = vmatprep.subr.mxu0 0.0
      %923 = vmatpush1.msra.mxu0 0.0
      %924 = vmatprep.subr.mxu0 0.0
      %925 = vmatpush1.msra.mxu0 0.0
      %926 = vmatprep.subr.mxu0 0.0
      %927 = vmatpush1.msra.mxu0 0.0
      %928 = vmatprep.subr.mxu0 0.0
      %929 = vmatpush1.msra.mxu0 0.0
      %930 = vmatprep.subr.mxu0 0.0
      %931 = vmatpush1.msra.mxu0 0.0
      %932 = vmatprep.subr.mxu0 0.0
      %933 = vmatpush1.msra.mxu0 0.0
      %934 = vmatprep.subr.mxu0 0.0
      %935 = vmatpush1.msra.mxu0 0.0
      %936 = vmatprep.subr.mxu0 0.0
      %937 = vmatpush1.msra.mxu0 0.0
      %938 = vmatprep.subr.mxu0 0.0
      %939 = vmatpush1.msra.mxu0 0.0
      %940 = vmatprep.subr.mxu0 0.0
      %941 = vmatpush1.msra.mxu0 0.0
      %942 = vmatprep.subr.mxu0 0.0
      %943 = vmatpush1.msra.mxu0 0.0
      %944 = vmatprep.subr.mxu0 0.0
      %945 = vmatpush1.msra.mxu0 0.0
      %946 = vmatprep.subr.mxu0 0.0
      %947 = vmatpush1.msra.mxu0 0.0
      %948 = vmatprep.subr.mxu0 0.0
      %949 = vmatpush1.msra.mxu0 0.0
      %950 = vmatprep.subr.mxu0 0.0
      %951 = vmatpush1.msra.mxu0 0.0
      %952 = vmatprep.subr.mxu0 0.0
      %953 = vmatpush1.msra.mxu0 0.0
      %954 = vmatprep.subr.mxu0 0.0
      %955 = vmatpush1.msra.mxu0 0.0
      %956 = vmatprep.subr.mxu0 0.0
      %957 = vmatpush1.msra.mxu0 0.0
      %958 = vmatprep.subr.mxu0 0.0
      %959 = vmatpush1.msra.mxu0 0.0
      %960 = vmatprep.subr.mxu0 0.0
      %961 = vmatpush1.msra.mxu0 0.0
      %962 = vmatprep.subr.mxu0 0.0
      %963 = vmatpush1.msra.mxu0 0.0
      %964 = vmatprep.subr.mxu0 0.0
      %965 = vmatpush1.msra.mxu0 0.0
      %966 = vmatprep.subr.mxu0 0.0
      %967 = vmatpush1.msra.mxu0 0.0
      %968 = vmatprep.subr.mxu0 0.0
      %969 = vmatpush1.msra.mxu0 0.0
      %970 = vmatprep.subr.mxu0 0.0
      %971 = vmatpush1.msra.mxu0 0.0
      %972 = vmatprep.mubr.f32.mxu0 0.0
      %973 = vmatmul.mubr.f32.gmra.mrb[0].mxu0 %v452
      %v974 = vpop.f32.mrb[0].mxu0
      %v975 = vadd.f32 0.0, %v974
      %v976 = vpop.f32.mrb[0].mxu0
      %v977 = vadd.f32 0.0, %v976
      %978 = vmatprep.mubr.f32.mxu0 0.0
      %979 = vmatmul.mubr.f32.gmra.mrb[0].mxu0 %v455
      %v980 = vpop.f32.mrb[0].mxu0
      %v981 = vadd.f32 0.0, %v980
      %v982 = vpop.f32.mrb[0].mxu0
      %v983 = vadd.f32 0.0, %v982
      %984 = vmatprep.mubr.f32.mxu0 0.0
      %985 = vmatmul.mubr.f32.gmra.mrb[0].mxu0 %v458
      %v986 = vpop.f32.mrb[0].mxu0
      %v987 = vadd.f32 0.0, %v986
      %v988 = vpop.f32.mrb[0].mxu0
      %v989 = vadd.f32 0.0, %v988
      %990 = vmatprep.mubr.f32.mxu0 0.0
      %991 = vmatmul.mubr.f32.gmra.mrb[0].mxu0 %v461
      %v992 = vpop.f32.mrb[0].mxu0
      %v993 = vadd.f32 0.0, %v992
      %v994 = vpop.f32.mrb[0].mxu0
      %v995 = vadd.f32 0.0, %v994
      %996 = vdwg.mxu0
      %997 = vmatprep.subr.mxu0 %v383
      %998 = vmatpush1.msra.mxu0 %v382
      %999 = vmatprep.subr.mxu0 %v403
      %1000 = vmatpush1.msra.mxu0 %v402
      %1001 = vmatprep.subr.mxu0 %v423
      %1002 = vmatpush1.msra.mxu0 %v422
      %1003 = vmatprep.subr.mxu0 %v443
      %1004 = vmatpush1.msra.mxu0 %v442
      %1005 = vmatprep.subr.mxu0 0.0
      %1006 = vmatpush1.msra.mxu0 0.0
      %1007 = vmatprep.subr.mxu0 0.0
      %1008 = vmatpush1.msra.mxu0 0.0
      %1009 = vmatprep.subr.mxu0 0.0
      %1010 = vmatpush1.msra.mxu0 0.0
      %1011 = vmatprep.subr.mxu0 0.0
      %1012 = vmatpush1.msra.mxu0 0.0
      %1013 = vmatprep.subr.mxu0 0.0
      %1014 = vmatpush1.msra.mxu0 0.0
      %1015 = vmatprep.subr.mxu0 0.0
      %1016 = vmatpush1.msra.mxu0 0.0
      %1017 = vmatprep.subr.mxu0 0.0
      %1018 = vmatpush1.msra.mxu0 0.0
      %1019 = vmatprep.subr.mxu0 0.0
      %1020 = vmatpush1.msra.mxu0 0.0
      %1021 = vmatprep.subr.mxu0 0.0
      %1022 = vmatpush1.msra.mxu0 0.0
      %1023 = vmatprep.subr.mxu0 0.0
      %1024 = vmatpush1.msra.mxu0 0.0
      %1025 = vmatprep.subr.mxu0 0.0
      %1026 = vmatpush1.msra.mxu0 0.0
      %1027 = vmatprep.subr.mxu0 0.0
      %1028 = vmatpush1.msra.mxu0 0.0
      %1029 = vmatprep.subr.mxu0 0.0
      %1030 = vmatpush1.msra.mxu0 0.0
      %1031 = vmatprep.subr.mxu0 0.0
      %1032 = vmatpush1.msra.mxu0 0.0
      %1033 = vmatprep.subr.mxu0 0.0
      %1034 = vmatpush1.msra.mxu0 0.0
      %1035 = vmatprep.subr.mxu0 0.0
      %1036 = vmatpush1.msra.mxu0 0.0
      %1037 = vmatprep.subr.mxu0 0.0
      %1038 = vmatpush1.msra.mxu0 0.0
      %1039 = vmatprep.subr.mxu0 0.0
      %1040 = vmatpush1.msra.mxu0 0.0
      %1041 = vmatprep.subr.mxu0 0.0
      %1042 = vmatpush1.msra.mxu0 0.0
      %1043 = vmatprep.subr.mxu0 0.0
      %1044 = vmatpush1.msra.mxu0 0.0
      %1045 = vmatprep.subr.mxu0 0.0
      %1046 = vmatpush1.msra.mxu0 0.0
      %1047 = vmatprep.subr.mxu0 0.0
      %1048 = vmatpush1.msra.mxu0 0.0
      %1049 = vmatprep.subr.mxu0 0.0
      %1050 = vmatpush1.msra.mxu0 0.0
      %1051 = vmatprep.subr.mxu0 0.0
      %1052 = vmatpush1.msra.mxu0 0.0
      %1053 = vmatprep.subr.mxu0 0.0
      %1054 = vmatpush1.msra.mxu0 0.0
      %1055 = vmatprep.subr.mxu0 0.0
      %1056 = vmatpush1.msra.mxu0 0.0
      %1057 = vmatprep.subr.mxu0 0.0
      %1058 = vmatpush1.msra.mxu0 0.0
      %1059 = vmatprep.subr.mxu0 0.0
      %1060 = vmatpush1.msra.mxu0 0.0
      %1061 = vmatprep.mubr.f32.mxu0 0.0
      %1062 = vmatmul.mubr.f32.gmra.mrb[0].mxu0 %v452
      %v1063 = vpop.f32.mrb[0].mxu0
      %v1064 = vadd.f32 0.0, %v1063
      %v1065 = vpop.f32.mrb[0].mxu0
      %v1066 = vadd.f32 0.0, %v1065
      %1067 = vmatprep.mubr.f32.mxu0 0.0
      %1068 = vmatmul.mubr.f32.gmra.mrb[0].mxu0 %v455
      %v1069 = vpop.f32.mrb[0].mxu0
      %v1070 = vadd.f32 0.0, %v1069
      %v1071 = vpop.f32.mrb[0].mxu0
      %v1072 = vadd.f32 0.0, %v1071
      %1073 = vmatprep.mubr.f32.mxu0 0.0
      %1074 = vmatmul.mubr.f32.gmra.mrb[0].mxu0 %v458
      %v1075 = vpop.f32.mrb[0].mxu0
      %v1076 = vadd.f32 0.0, %v1075
      %v1077 = vpop.f32.mrb[0].mxu0
      %v1078 = vadd.f32 0.0, %v1077
      %1079 = vmatprep.mubr.f32.mxu0 0.0
      %1080 = vmatmul.mubr.f32.gmra.mrb[0].mxu0 %v461
      %v1081 = vpop.f32.mrb[0].mxu0
      %v1082 = vadd.f32 0.0, %v1081
      %v1083 = vpop.f32.mrb[0].mxu0
      %v1084 = vadd.f32 0.0, %v1083
      %1085 = vdwg.mxu0
      %1086 = vmatprep.subr.mxu0 %v385
      %1087 = vmatpush1.msra.mxu0 %v384
      %1088 = vmatprep.subr.mxu0 %v405
      %1089 = vmatpush1.msra.mxu0 %v404
      %1090 = vmatprep.subr.mxu0 %v425
      %1091 = vmatpush1.msra.mxu0 %v424
      %1092 = vmatprep.subr.mxu0 %v445
      %1093 = vmatpush1.msra.mxu0 %v444
      %1094 = vmatprep.subr.mxu0 0.0
      %1095 = vmatpush1.msra.mxu0 0.0
      %1096 = vmatprep.subr.mxu0 0.0
      %1097 = vmatpush1.msra.mxu0 0.0
      %1098 = vmatprep.subr.mxu0 0.0
      %1099 = vmatpush1.msra.mxu0 0.0
      %1100 = vmatprep.subr.mxu0 0.0
      %1101 = vmatpush1.msra.mxu0 0.0
      %1102 = vmatprep.subr.mxu0 0.0
      %1103 = vmatpush1.msra.mxu0 0.0
      %1104 = vmatprep.subr.mxu0 0.0
      %1105 = vmatpush1.msra.mxu0 0.0
      %1106 = vmatprep.subr.mxu0 0.0
      %1107 = vmatpush1.msra.mxu0 0.0
      %1108 = vmatprep.subr.mxu0 0.0
      %1109 = vmatpush1.msra.mxu0 0.0
      %1110 = vmatprep.subr.mxu0 0.0
      %1111 = vmatpush1.msra.mxu0 0.0
      %1112 = vmatprep.subr.mxu0 0.0
      %1113 = vmatpush1.msra.mxu0 0.0
      %1114 = vmatprep.subr.mxu0 0.0
      %1115 = vmatpush1.msra.mxu0 0.0
      %1116 = vmatprep.subr.mxu0 0.0
      %1117 = vmatpush1.msra.mxu0 0.0
      %1118 = vmatprep.subr.mxu0 0.0
      %1119 = vmatpush1.msra.mxu0 0.0
      %1120 = vmatprep.subr.mxu0 0.0
      %1121 = vmatpush1.msra.mxu0 0.0
      %1122 = vmatprep.subr.mxu0 0.0
      %1123 = vmatpush1.msra.mxu0 0.0
      %1124 = vmatprep.subr.mxu0 0.0
      %1125 = vmatpush1.msra.mxu0 0.0
      %1126 = vmatprep.subr.mxu0 0.0
      %1127 = vmatpush1.msra.mxu0 0.0
      %1128 = vmatprep.subr.mxu0 0.0
      %1129 = vmatpush1.msra.mxu0 0.0
      %1130 = vmatprep.subr.mxu0 0.0
      %1131 = vmatpush1.msra.mxu0 0.0
      %1132 = vmatprep.subr.mxu0 0.0
      %1133 = vmatpush1.msra.mxu0 0.0
      %1134 = vmatprep.subr.mxu0 0.0
      %1135 = vmatpush1.msra.mxu0 0.0
      %1136 = vmatprep.subr.mxu0 0.0
      %1137 = vmatpush1.msra.mxu0 0.0
      %1138 = vmatprep.subr.mxu0 0.0
      %1139 = vmatpush1.msra.mxu0 0.0
      %1140 = vmatprep.subr.mxu0 0.0
      %1141 = vmatpush1.msra.mxu0 0.0
      %1142 = vmatprep.subr.mxu0 0.0
      %1143 = vmatpush1.msra.mxu0 0.0
      %1144 = vmatprep.subr.mxu0 0.0
      %1145 = vmatpush1.msra.mxu0 0.0
      %1146 = vmatprep.subr.mxu0 0.0
      %1147 = vmatpush1.msra.mxu0 0.0
      %1148 = vmatprep.subr.mxu0 0.0
      %1149 = vmatpush1.msra.mxu0 0.0
      %1150 = vmatprep.mubr.f32.mxu0 0.0
      %1151 = vmatmul.mubr.f32.gmra.mrb[0].mxu0 %v452
      %v1152 = vpop.f32.mrb[0].mxu0
      %v1153 = vadd.f32 0.0, %v1152
      %v1154 = vpop.f32.mrb[0].mxu0
      %v1155 = vadd.f32 0.0, %v1154
      %1156 = vmatprep.mubr.f32.mxu0 0.0
      %1157 = vmatmul.mubr.f32.gmra.mrb[0].mxu0 %v455
      %v1158 = vpop.f32.mrb[0].mxu0
      %v1159 = vadd.f32 0.0, %v1158
      %v1160 = vpop.f32.mrb[0].mxu0
      %v1161 = vadd.f32 0.0, %v1160
      %1162 = vmatprep.mubr.f32.mxu0 0.0
      %1163 = vmatmul.mubr.f32.gmra.mrb[0].mxu0 %v458
      %v1164 = vpop.f32.mrb[0].mxu0
      %v1165 = vadd.f32 0.0, %v1164
      %v1166 = vpop.f32.mrb[0].mxu0
      %v1167 = vadd.f32 0.0, %v1166
      %1168 = vmatprep.mubr.f32.mxu0 0.0
      %1169 = vmatmul.mubr.f32.gmra.mrb[0].mxu0 %v461
      %v1170 = vpop.f32.mrb[0].mxu0
      %v1171 = vadd.f32 0.0, %v1170
      %v1172 = vpop.f32.mrb[0].mxu0
      %v1173 = vadd.f32 0.0, %v1172
      %1174 = vdwg.mxu0
      %1175 = vmatprep.subr.mxu0 %v387
      %1176 = vmatpush1.msra.mxu0 %v386
      %1177 = vmatprep.subr.mxu0 %v407
      %1178 = vmatpush1.msra.mxu0 %v406
      %1179 = vmatprep.subr.mxu0 %v427
      %1180 = vmatpush1.msra.mxu0 %v426
      %1181 = vmatprep.subr.mxu0 %v447
      %1182 = vmatpush1.msra.mxu0 %v446
      %1183 = vmatprep.subr.mxu0 0.0
      %1184 = vmatpush1.msra.mxu0 0.0
      %1185 = vmatprep.subr.mxu0 0.0
      %1186 = vmatpush1.msra.mxu0 0.0
      %1187 = vmatprep.subr.mxu0 0.0
      %1188 = vmatpush1.msra.mxu0 0.0
      %1189 = vmatprep.subr.mxu0 0.0
      %1190 = vmatpush1.msra.mxu0 0.0
      %1191 = vmatprep.subr.mxu0 0.0
      %1192 = vmatpush1.msra.mxu0 0.0
      %1193 = vmatprep.subr.mxu0 0.0
      %1194 = vmatpush1.msra.mxu0 0.0
      %1195 = vmatprep.subr.mxu0 0.0
      %1196 = vmatpush1.msra.mxu0 0.0
      %1197 = vmatprep.subr.mxu0 0.0
      %1198 = vmatpush1.msra.mxu0 0.0
      %1199 = vmatprep.subr.mxu0 0.0
      %1200 = vmatpush1.msra.mxu0 0.0
      %1201 = vmatprep.subr.mxu0 0.0
      %1202 = vmatpush1.msra.mxu0 0.0
      %1203 = vmatprep.subr.mxu0 0.0
      %1204 = vmatpush1.msra.mxu0 0.0
      %1205 = vmatprep.subr.mxu0 0.0
      %1206 = vmatpush1.msra.mxu0 0.0
      %1207 = vmatprep.subr.mxu0 0.0
      %1208 = vmatpush1.msra.mxu0 0.0
      %1209 = vmatprep.subr.mxu0 0.0
      %1210 = vmatpush1.msra.mxu0 0.0
      %1211 = vmatprep.subr.mxu0 0.0
      %1212 = vmatpush1.msra.mxu0 0.0
      %1213 = vmatprep.subr.mxu0 0.0
      %1214 = vmatpush1.msra.mxu0 0.0
      %1215 = vmatprep.subr.mxu0 0.0
      %1216 = vmatpush1.msra.mxu0 0.0
      %1217 = vmatprep.subr.mxu0 0.0
      %1218 = vmatpush1.msra.mxu0 0.0
      %1219 = vmatprep.subr.mxu0 0.0
      %1220 = vmatpush1.msra.mxu0 0.0
      %1221 = vmatprep.subr.mxu0 0.0
      %1222 = vmatpush1.msra.mxu0 0.0
      %1223 = vmatprep.subr.mxu0 0.0
      %1224 = vmatpush1.msra.mxu0 0.0
      %1225 = vmatprep.subr.mxu0 0.0
      %1226 = vmatpush1.msra.mxu0 0.0
      %1227 = vmatprep.subr.mxu0 0.0
      %1228 = vmatpush1.msra.mxu0 0.0
      %1229 = vmatprep.subr.mxu0 0.0
      %1230 = vmatpush1.msra.mxu0 0.0
      %1231 = vmatprep.subr.mxu0 0.0
      %1232 = vmatpush1.msra.mxu0 0.0
      %1233 = vmatprep.subr.mxu0 0.0
      %1234 = vmatpush1.msra.mxu0 0.0
      %1235 = vmatprep.subr.mxu0 0.0
      %1236 = vmatpush1.msra.mxu0 0.0
      %1237 = vmatprep.subr.mxu0 0.0
      %1238 = vmatpush1.msra.mxu0 0.0
      %1239 = vmatprep.mubr.f32.mxu0 0.0
      %1240 = vmatmul.mubr.f32.gmra.mrb[0].mxu0 %v452
      %v1241 = vpop.f32.mrb[0].mxu0
      %v1242 = vadd.f32 0.0, %v1241
      %v1243 = vpop.f32.mrb[0].mxu0
      %v1244 = vadd.f32 0.0, %v1243
      %1245 = vmatprep.mubr.f32.mxu0 0.0
      %1246 = vmatmul.mubr.f32.gmra.mrb[0].mxu0 %v455
      %v1247 = vpop.f32.mrb[0].mxu0
      %v1248 = vadd.f32 0.0, %v1247
      %v1249 = vpop.f32.mrb[0].mxu0
      %v1250 = vadd.f32 0.0, %v1249
      %1251 = vmatprep.mubr.f32.mxu0 0.0
      %1252 = vmatmul.mubr.f32.gmra.mrb[0].mxu0 %v458
      %v1253 = vpop.f32.mrb[0].mxu0
      %v1254 = vadd.f32 0.0, %v1253
      %v1255 = vpop.f32.mrb[0].mxu0
      %v1256 = vadd.f32 0.0, %v1255
      %1257 = vmatprep.mubr.f32.mxu0 0.0
      %1258 = vmatmul.mubr.f32.gmra.mrb[0].mxu0 %v461
      %v1259 = vpop.f32.mrb[0].mxu0
      %v1260 = vadd.f32 0.0, %v1259
      %v1261 = vpop.f32.mrb[0].mxu0
      %v1262 = vadd.f32 0.0, %v1261
      %1263 = vdwg.mxu0
      %1264 = vmatprep.subr.mxu0 %v389
      %1265 = vmatpush1.msra.mxu0 %v388
      %1266 = vmatprep.subr.mxu0 %v409
      %1267 = vmatpush1.msra.mxu0 %v408
      %1268 = vmatprep.subr.mxu0 %v429
      %1269 = vmatpush1.msra.mxu0 %v428
      %1270 = vmatprep.subr.mxu0 %v449
      %1271 = vmatpush1.msra.mxu0 %v448
      %1272 = vmatprep.subr.mxu0 0.0
      %1273 = vmatpush1.msra.mxu0 0.0
      %1274 = vmatprep.subr.mxu0 0.0
      %1275 = vmatpush1.msra.mxu0 0.0
      %1276 = vmatprep.subr.mxu0 0.0
      %1277 = vmatpush1.msra.mxu0 0.0
      %1278 = vmatprep.subr.mxu0 0.0
      %1279 = vmatpush1.msra.mxu0 0.0
      %1280 = vmatprep.subr.mxu0 0.0
      %1281 = vmatpush1.msra.mxu0 0.0
      %1282 = vmatprep.subr.mxu0 0.0
      %1283 = vmatpush1.msra.mxu0 0.0
      %1284 = vmatprep.subr.mxu0 0.0
      %1285 = vmatpush1.msra.mxu0 0.0
      %1286 = vmatprep.subr.mxu0 0.0
      %1287 = vmatpush1.msra.mxu0 0.0
      %1288 = vmatprep.subr.mxu0 0.0
      %1289 = vmatpush1.msra.mxu0 0.0
      %1290 = vmatprep.subr.mxu0 0.0
      %1291 = vmatpush1.msra.mxu0 0.0
      %1292 = vmatprep.subr.mxu0 0.0
      %1293 = vmatpush1.msra.mxu0 0.0
      %1294 = vmatprep.subr.mxu0 0.0
      %1295 = vmatpush1.msra.mxu0 0.0
      %1296 = vmatprep.subr.mxu0 0.0
      %1297 = vmatpush1.msra.mxu0 0.0
      %1298 = vmatprep.subr.mxu0 0.0
      %1299 = vmatpush1.msra.mxu0 0.0
      %1300 = vmatprep.subr.mxu0 0.0
      %1301 = vmatpush1.msra.mxu0 0.0
      %1302 = vmatprep.subr.mxu0 0.0
      %1303 = vmatpush1.msra.mxu0 0.0
      %1304 = vmatprep.subr.mxu0 0.0
      %1305 = vmatpush1.msra.mxu0 0.0
      %1306 = vmatprep.subr.mxu0 0.0
      %1307 = vmatpush1.msra.mxu0 0.0
      %1308 = vmatprep.subr.mxu0 0.0
      %1309 = vmatpush1.msra.mxu0 0.0
      %1310 = vmatprep.subr.mxu0 0.0
      %1311 = vmatpush1.msra.mxu0 0.0
      %1312 = vmatprep.subr.mxu0 0.0
      %1313 = vmatpush1.msra.mxu0 0.0
      %1314 = vmatprep.subr.mxu0 0.0
      %1315 = vmatpush1.msra.mxu0 0.0
      %1316 = vmatprep.subr.mxu0 0.0
      %1317 = vmatpush1.msra.mxu0 0.0
      %1318 = vmatprep.subr.mxu0 0.0
      %1319 = vmatpush1.msra.mxu0 0.0
      %1320 = vmatprep.subr.mxu0 0.0
      %1321 = vmatpush1.msra.mxu0 0.0
      %1322 = vmatprep.subr.mxu0 0.0
      %1323 = vmatpush1.msra.mxu0 0.0
      %1324 = vmatprep.subr.mxu0 0.0
      %1325 = vmatpush1.msra.mxu0 0.0
      %1326 = vmatprep.subr.mxu0 0.0
      %1327 = vmatpush1.msra.mxu0 0.0
      %1328 = vmatprep.mubr.f32.mxu0 0.0
      %1329 = vmatmul.mubr.f32.gmra.mrb[0].mxu0 %v452
      %v1330 = vpop.f32.mrb[0].mxu0
      %v1331 = vadd.f32 0.0, %v1330
      %v1332 = vpop.f32.mrb[0].mxu0
      %v1333 = vadd.f32 0.0, %v1332
      %1334 = vmatprep.mubr.f32.mxu0 0.0
      %1335 = vmatmul.mubr.f32.gmra.mrb[0].mxu0 %v455
      %v1336 = vpop.f32.mrb[0].mxu0
      %v1337 = vadd.f32 0.0, %v1336
      %v1338 = vpop.f32.mrb[0].mxu0
      %v1339 = vadd.f32 0.0, %v1338
      %1340 = vmatprep.mubr.f32.mxu0 0.0
      %1341 = vmatmul.mubr.f32.gmra.mrb[0].mxu0 %v458
      %v1342 = vpop.f32.mrb[0].mxu0
      %v1343 = vadd.f32 0.0, %v1342
      %v1344 = vpop.f32.mrb[0].mxu0
      %v1345 = vadd.f32 0.0, %v1344
      %1346 = vmatprep.mubr.f32.mxu0 0.0
      %1347 = vmatmul.mubr.f32.gmra.mrb[0].mxu0 %v461
      %v1348 = vpop.f32.mrb[0].mxu0
      %v1349 = vadd.f32 0.0, %v1348
      %v1350 = vpop.f32.mrb[0].mxu0
      %v1351 = vadd.f32 0.0, %v1350
      %1352 = vdwg.mxu0
      %v1353 = vadd.f32 %v530, %v532
      %v1354 = vadd.f32 %v1353, %v619
      %v1355 = vadd.f32 %v1354, %v621
      %v1356 = vadd.f32 %v1355, %v708
      %v1357 = vadd.f32 %v1356, %v710
      %v1358 = vadd.f32 %v1357, %v797
      %v1359 = vadd.f32 %v1358, %v799
      %v1360 = vadd.f32 %v1359, %v886
      %v1361 = vadd.f32 %v1360, %v888
      %v1362 = vadd.f32 %v1361, %v975
      %v1363 = vadd.f32 %v1362, %v977
      %v1364 = vadd.f32 %v1363, %v1064
      %v1365 = vadd.f32 %v1364, %v1066
      %v1366 = vadd.f32 %v1365, %v1153
      %v1367 = vadd.f32 %v1366, %v1155
      %v1368 = vadd.f32 %v1367, %v1242
      %v1369 = vadd.f32 %v1368, %v1244
      %v1370 = vadd.f32 %v1369, %v1331
      %v1371 = vadd.f32 %v1370, %v1333
      %1372 = vadd.xlane.f32.xlu0 %v1371
      %v1373 = vpop.xlane.xlu0 %1372
      %v1374 = vadd.f32 %v536, %v538
      %v1375 = vadd.f32 %v1374, %v625
      %v1376 = vadd.f32 %v1375, %v627
      %v1377 = vadd.f32 %v1376, %v714
      %v1378 = vadd.f32 %v1377, %v716
      %v1379 = vadd.f32 %v1378, %v803
      %v1380 = vadd.f32 %v1379, %v805
      %v1381 = vadd.f32 %v1380, %v892
      %v1382 = vadd.f32 %v1381, %v894
      %v1383 = vadd.f32 %v1382, %v981
      %v1384 = vadd.f32 %v1383, %v983
      %v1385 = vadd.f32 %v1384, %v1070
      %v1386 = vadd.f32 %v1385, %v1072
      %v1387 = vadd.f32 %v1386, %v1159
      %v1388 = vadd.f32 %v1387, %v1161
      %v1389 = vadd.f32 %v1388, %v1248
      %v1390 = vadd.f32 %v1389, %v1250
      %v1391 = vadd.f32 %v1390, %v1337
      %v1392 = vadd.f32 %v1391, %v1339
      %1393 = vadd.xlane.f32.xlu0 %v1392
      %v1394 = vpop.xlane.xlu0 %1393
      %v1395 = vadd.f32 %v542, %v544
      %v1396 = vadd.f32 %v1395, %v631
      %v1397 = vadd.f32 %v1396, %v633
      %v1398 = vadd.f32 %v1397, %v720
      %v1399 = vadd.f32 %v1398, %v722
      %v1400 = vadd.f32 %v1399, %v809
      %v1401 = vadd.f32 %v1400, %v811
      %v1402 = vadd.f32 %v1401, %v898
      %v1403 = vadd.f32 %v1402, %v900
      %v1404 = vadd.f32 %v1403, %v987
      %v1405 = vadd.f32 %v1404, %v989
      %v1406 = vadd.f32 %v1405, %v1076
      %v1407 = vadd.f32 %v1406, %v1078
      %v1408 = vadd.f32 %v1407, %v1165
      %v1409 = vadd.f32 %v1408, %v1167
      %v1410 = vadd.f32 %v1409, %v1254
      %v1411 = vadd.f32 %v1410, %v1256
      %v1412 = vadd.f32 %v1411, %v1343
      %v1413 = vadd.f32 %v1412, %v1345
      %1414 = vadd.xlane.f32.xlu0 %v1413
      %v1415 = vpop.xlane.xlu0 %1414
      %v1416 = vadd.f32 %v548, %v550
      %v1417 = vadd.f32 %v1416, %v637
      %v1418 = vadd.f32 %v1417, %v639
      %v1419 = vadd.f32 %v1418, %v726
      %v1420 = vadd.f32 %v1419, %v728
      %v1421 = vadd.f32 %v1420, %v815
      %v1422 = vadd.f32 %v1421, %v817
      %v1423 = vadd.f32 %v1422, %v904
      %v1424 = vadd.f32 %v1423, %v906
      %v1425 = vadd.f32 %v1424, %v993
      %v1426 = vadd.f32 %v1425, %v995
      %v1427 = vadd.f32 %v1426, %v1082
      %v1428 = vadd.f32 %v1427, %v1084
      %v1429 = vadd.f32 %v1428, %v1171
      %v1430 = vadd.f32 %v1429, %v1173
      %v1431 = vadd.f32 %v1430, %v1260
      %v1432 = vadd.f32 %v1431, %v1262
      %v1433 = vadd.f32 %v1432, %v1349
      %v1434 = vadd.f32 %v1433, %v1351
      %1435 = vadd.xlane.f32.xlu0 %v1434
      %v1436 = vpop.xlane.xlu0 %1435
      %v1437 = vrcp.pop 2560.0
      %v1438 = vmul.f32 %v1373, %v1437
      %v1439 = vmul.f32 %v1394, %v1437
      %v1440 = vmul.f32 %v1415, %v1437
      %v1441 = vmul.f32 %v1436, %v1437
      %v1442 = vsub.f32 %v530, %v1438
      %v1443 = vsub.f32 %v532, %v1438
      %v1444 = vsub.f32 %v619, %v1438
      %v1445 = vsub.f32 %v621, %v1438
      %v1446 = vsub.f32 %v708, %v1438
      %v1447 = vsub.f32 %v710, %v1438
      %v1448 = vsub.f32 %v797, %v1438
      %v1449 = vsub.f32 %v799, %v1438
      %v1450 = vsub.f32 %v886, %v1438
      %v1451 = vsub.f32 %v888, %v1438
      %v1452 = vsub.f32 %v975, %v1438
      %v1453 = vsub.f32 %v977, %v1438
      %v1454 = vsub.f32 %v1064, %v1438
      %v1455 = vsub.f32 %v1066, %v1438
      %v1456 = vsub.f32 %v1153, %v1438
      %v1457 = vsub.f32 %v1155, %v1438
      %v1458 = vsub.f32 %v1242, %v1438
      %v1459 = vsub.f32 %v1244, %v1438
      %v1460 = vsub.f32 %v1331, %v1438
      %v1461 = vsub.f32 %v1333, %v1438
      %v1462 = vsub.f32 %v536, %v1439
      %v1463 = vsub.f32 %v538, %v1439
      %v1464 = vsub.f32 %v625, %v1439
      %v1465 = vsub.f32 %v627, %v1439
      %v1466 = vsub.f32 %v714, %v1439
      %v1467 = vsub.f32 %v716, %v1439
      %v1468 = vsub.f32 %v803, %v1439
      %v1469 = vsub.f32 %v805, %v1439
      %v1470 = vsub.f32 %v892, %v1439
      %v1471 = vsub.f32 %v894, %v1439
      %v1472 = vsub.f32 %v981, %v1439
      %v1473 = vsub.f32 %v983, %v1439
      %v1474 = vsub.f32 %v1070, %v1439
      %v1475 = vsub.f32 %v1072, %v1439
      %v1476 = vsub.f32 %v1159, %v1439
      %v1477 = vsub.f32 %v1161, %v1439
      %v1478 = vsub.f32 %v1248, %v1439
      %v1479 = vsub.f32 %v1250, %v1439
      %v1480 = vsub.f32 %v1337, %v1439
      %v1481 = vsub.f32 %v1339, %v1439
      %v1482 = vsub.f32 %v542, %v1440
      %v1483 = vsub.f32 %v544, %v1440
      %v1484 = vsub.f32 %v631, %v1440
      %v1485 = vsub.f32 %v633, %v1440
      %v1486 = vsub.f32 %v720, %v1440
      %v1487 = vsub.f32 %v722, %v1440
      %v1488 = vsub.f32 %v809, %v1440
      %v1489 = vsub.f32 %v811, %v1440
      %v1490 = vsub.f32 %v898, %v1440
      %v1491 = vsub.f32 %v900, %v1440
      %v1492 = vsub.f32 %v987, %v1440
      %v1493 = vsub.f32 %v989, %v1440
      %v1494 = vsub.f32 %v1076, %v1440
      %v1495 = vsub.f32 %v1078, %v1440
      %v1496 = vsub.f32 %v1165, %v1440
      %v1497 = vsub.f32 %v1167, %v1440
      %v1498 = vsub.f32 %v1254, %v1440
      %v1499 = vsub.f32 %v1256, %v1440
      %v1500 = vsub.f32 %v1343, %v1440
      %v1501 = vsub.f32 %v1345, %v1440
      %v1502 = vsub.f32 %v548, %v1441
      %v1503 = vsub.f32 %v550, %v1441
      %v1504 = vsub.f32 %v637, %v1441
      %v1505 = vsub.f32 %v639, %v1441
      %v1506 = vsub.f32 %v726, %v1441
      %v1507 = vsub.f32 %v728, %v1441
      %v1508 = vsub.f32 %v815, %v1441
      %v1509 = vsub.f32 %v817, %v1441
      %v1510 = vsub.f32 %v904, %v1441
      %v1511 = vsub.f32 %v906, %v1441
      %v1512 = vsub.f32 %v993, %v1441
      %v1513 = vsub.f32 %v995, %v1441
      %v1514 = vsub.f32 %v1082, %v1441
      %v1515 = vsub.f32 %v1084, %v1441
      %v1516 = vsub.f32 %v1171, %v1441
      %v1517 = vsub.f32 %v1173, %v1441
      %v1518 = vsub.f32 %v1260, %v1441
      %v1519 = vsub.f32 %v1262, %v1441
      %v1520 = vsub.f32 %v1349, %v1441
      %v1521 = vsub.f32 %v1351, %v1441
      %v1522 = vmul.f32 %v1442, %v1442
      %v1523 = vmul.f32 %v1443, %v1443
      %v1524 = vmul.f32 %v1444, %v1444
      %v1525 = vmul.f32 %v1445, %v1445
      %v1526 = vmul.f32 %v1446, %v1446
      %v1527 = vmul.f32 %v1447, %v1447
      %v1528 = vmul.f32 %v1448, %v1448
      %v1529 = vmul.f32 %v1449, %v1449
      %v1530 = vmul.f32 %v1450, %v1450
      %v1531 = vmul.f32 %v1451, %v1451
      %v1532 = vmul.f32 %v1452, %v1452
      %v1533 = vmul.f32 %v1453, %v1453
      %v1534 = vmul.f32 %v1454, %v1454
      %v1535 = vmul.f32 %v1455, %v1455
      %v1536 = vmul.f32 %v1456, %v1456
      %v1537 = vmul.f32 %v1457, %v1457
      %v1538 = vmul.f32 %v1458, %v1458
      %v1539 = vmul.f32 %v1459, %v1459
      %v1540 = vmul.f32 %v1460, %v1460
      %v1541 = vmul.f32 %v1461, %v1461
      %v1542 = vmul.f32 %v1462, %v1462
      %v1543 = vmul.f32 %v1463, %v1463
      %v1544 = vmul.f32 %v1464, %v1464
      %v1545 = vmul.f32 %v1465, %v1465
      %v1546 = vmul.f32 %v1466, %v1466
      %v1547 = vmul.f32 %v1467, %v1467
      %v1548 = vmul.f32 %v1468, %v1468
      %v1549 = vmul.f32 %v1469, %v1469
      %v1550 = vmul.f32 %v1470, %v1470
      %v1551 = vmul.f32 %v1471, %v1471
      %v1552 = vmul.f32 %v1472, %v1472
      %v1553 = vmul.f32 %v1473, %v1473
      %v1554 = vmul.f32 %v1474, %v1474
      %v1555 = vmul.f32 %v1475, %v1475
      %v1556 = vmul.f32 %v1476, %v1476
      %v1557 = vmul.f32 %v1477, %v1477
      %v1558 = vmul.f32 %v1478, %v1478
      %v1559 = vmul.f32 %v1479, %v1479
      %v1560 = vmul.f32 %v1480, %v1480
      %v1561 = vmul.f32 %v1481, %v1481
      %v1562 = vmul.f32 %v1482, %v1482
      %v1563 = vmul.f32 %v1483, %v1483
      %v1564 = vmul.f32 %v1484, %v1484
      %v1565 = vmul.f32 %v1485, %v1485
      %v1566 = vmul.f32 %v1486, %v1486
      %v1567 = vmul.f32 %v1487, %v1487
      %v1568 = vmul.f32 %v1488, %v1488
      %v1569 = vmul.f32 %v1489, %v1489
      %v1570 = vmul.f32 %v1490, %v1490
      %v1571 = vmul.f32 %v1491, %v1491
      %v1572 = vmul.f32 %v1492, %v1492
      %v1573 = vmul.f32 %v1493, %v1493
      %v1574 = vmul.f32 %v1494, %v1494
      %v1575 = vmul.f32 %v1495, %v1495
      %v1576 = vmul.f32 %v1496, %v1496
      %v1577 = vmul.f32 %v1497, %v1497
      %v1578 = vmul.f32 %v1498, %v1498
      %v1579 = vmul.f32 %v1499, %v1499
      %v1580 = vmul.f32 %v1500, %v1500
      %v1581 = vmul.f32 %v1501, %v1501
      %v1582 = vmul.f32 %v1502, %v1502
      %v1583 = vmul.f32 %v1503, %v1503
      %v1584 = vmul.f32 %v1504, %v1504
      %v1585 = vmul.f32 %v1505, %v1505
      %v1586 = vmul.f32 %v1506, %v1506
      %v1587 = vmul.f32 %v1507, %v1507
      %v1588 = vmul.f32 %v1508, %v1508
      %v1589 = vmul.f32 %v1509, %v1509
      %v1590 = vmul.f32 %v1510, %v1510
      %v1591 = vmul.f32 %v1511, %v1511
      %v1592 = vmul.f32 %v1512, %v1512
      %v1593 = vmul.f32 %v1513, %v1513
      %v1594 = vmul.f32 %v1514, %v1514
      %v1595 = vmul.f32 %v1515, %v1515
      %v1596 = vmul.f32 %v1516, %v1516
      %v1597 = vmul.f32 %v1517, %v1517
      %v1598 = vmul.f32 %v1518, %v1518
      %v1599 = vmul.f32 %v1519, %v1519
      %v1600 = vmul.f32 %v1520, %v1520
      %v1601 = vmul.f32 %v1521, %v1521
      %v1602 = vadd.f32 %v1522, %v1523
      %v1603 = vadd.f32 %v1602, %v1524
      %v1604 = vadd.f32 %v1603, %v1525
      %v1605 = vadd.f32 %v1604, %v1526
      %v1606 = vadd.f32 %v1605, %v1527
      %v1607 = vadd.f32 %v1606, %v1528
      %v1608 = vadd.f32 %v1607, %v1529
      %v1609 = vadd.f32 %v1608, %v1530
      %v1610 = vadd.f32 %v1609, %v1531
      %v1611 = vadd.f32 %v1610, %v1532
      %v1612 = vadd.f32 %v1611, %v1533
      %v1613 = vadd.f32 %v1612, %v1534
      %v1614 = vadd.f32 %v1613, %v1535
      %v1615 = vadd.f32 %v1614, %v1536
      %v1616 = vadd.f32 %v1615, %v1537
      %v1617 = vadd.f32 %v1616, %v1538
      %v1618 = vadd.f32 %v1617, %v1539
      %v1619 = vadd.f32 %v1618, %v1540
      %v1620 = vadd.f32 %v1619, %v1541
      %1621 = vadd.xlane.f32.xlu0 %v1620
      %v1622 = vpop.xlane.xlu0 %1621
      %v1623 = vadd.f32 %v1542, %v1543
      %v1624 = vadd.f32 %v1623, %v1544
      %v1625 = vadd.f32 %v1624, %v1545
      %v1626 = vadd.f32 %v1625, %v1546
      %v1627 = vadd.f32 %v1626, %v1547
      %v1628 = vadd.f32 %v1627, %v1548
      %v1629 = vadd.f32 %v1628, %v1549
      %v1630 = vadd.f32 %v1629, %v1550
      %v1631 = vadd.f32 %v1630, %v1551
      %v1632 = vadd.f32 %v1631, %v1552
      %v1633 = vadd.f32 %v1632, %v1553
      %v1634 = vadd.f32 %v1633, %v1554
      %v1635 = vadd.f32 %v1634, %v1555
      %v1636 = vadd.f32 %v1635, %v1556
      %v1637 = vadd.f32 %v1636, %v1557
      %v1638 = vadd.f32 %v1637, %v1558
      %v1639 = vadd.f32 %v1638, %v1559
      %v1640 = vadd.f32 %v1639, %v1560
      %v1641 = vadd.f32 %v1640, %v1561
      %1642 = vadd.xlane.f32.xlu0 %v1641
      %v1643 = vpop.xlane.xlu0 %1642
      %v1644 = vadd.f32 %v1562, %v1563
      %v1645 = vadd.f32 %v1644, %v1564
      %v1646 = vadd.f32 %v1645, %v1565
      %v1647 = vadd.f32 %v1646, %v1566
      %v1648 = vadd.f32 %v1647, %v1567
      %v1649 = vadd.f32 %v1648, %v1568
      %v1650 = vadd.f32 %v1649, %v1569
      %v1651 = vadd.f32 %v1650, %v1570
      %v1652 = vadd.f32 %v1651, %v1571
      %v1653 = vadd.f32 %v1652, %v1572
      %v1654 = vadd.f32 %v1653, %v1573
      %v1655 = vadd.f32 %v1654, %v1574
      %v1656 = vadd.f32 %v1655, %v1575
      %v1657 = vadd.f32 %v1656, %v1576
      %v1658 = vadd.f32 %v1657, %v1577
      %v1659 = vadd.f32 %v1658, %v1578
      %v1660 = vadd.f32 %v1659, %v1579
      %v1661 = vadd.f32 %v1660, %v1580
      %v1662 = vadd.f32 %v1661, %v1581
      %1663 = vadd.xlane.f32.xlu0 %v1662
      %v1664 = vpop.xlane.xlu0 %1663
      %v1665 = vadd.f32 %v1582, %v1583
      %v1666 = vadd.f32 %v1665, %v1584
      %v1667 = vadd.f32 %v1666, %v1585
      %v1668 = vadd.f32 %v1667, %v1586
      %v1669 = vadd.f32 %v1668, %v1587
      %v1670 = vadd.f32 %v1669, %v1588
      %v1671 = vadd.f32 %v1670, %v1589
      %v1672 = vadd.f32 %v1671, %v1590
      %v1673 = vadd.f32 %v1672, %v1591
      %v1674 = vadd.f32 %v1673, %v1592
      %v1675 = vadd.f32 %v1674, %v1593
      %v1676 = vadd.f32 %v1675, %v1594
      %v1677 = vadd.f32 %v1676, %v1595
      %v1678 = vadd.f32 %v1677, %v1596
      %v1679 = vadd.f32 %v1678, %v1597
      %v1680 = vadd.f32 %v1679, %v1598
      %v1681 = vadd.f32 %v1680, %v1599
      %v1682 = vadd.f32 %v1681, %v1600
      %v1683 = vadd.f32 %v1682, %v1601
      %1684 = vadd.xlane.f32.xlu0 %v1683
      %v1685 = vpop.xlane.xlu0 %1684
      %v1686 = vmul.f32 %v1622, %v1437
      %v1687 = vmul.f32 %v1643, %v1437
      %v1688 = vmul.f32 %v1664, %v1437
      %v1689 = vmul.f32 %v1685, %v1437
      %v1690 = vadd.f32 %v1686, 1e-05
      %v1691 = vadd.f32 %v1687, 1e-05
      %v1692 = vadd.f32 %v1688, 1e-05
      %v1693 = vadd.f32 %v1689, 1e-05
      %v1694 = vrsqrt.pop %v1690
      %v1695 = vrsqrt.pop %v1691
      %v1696 = vrsqrt.pop %v1692
      %v1697 = vrsqrt.pop %v1693
      %v1698 = vmul.f32 %v1442, %v1694
      %v1699 = vmul.f32 %v1443, %v1694
      %v1700 = vmul.f32 %v1444, %v1694
      %v1701 = vmul.f32 %v1445, %v1694
      %v1702 = vmul.f32 %v1446, %v1694
      %v1703 = vmul.f32 %v1447, %v1694
      %v1704 = vmul.f32 %v1448, %v1694
      %v1705 = vmul.f32 %v1449, %v1694
      %v1706 = vmul.f32 %v1450, %v1694
      %v1707 = vmul.f32 %v1451, %v1694
      %v1708 = vmul.f32 %v1452, %v1694
      %v1709 = vmul.f32 %v1453, %v1694
      %v1710 = vmul.f32 %v1454, %v1694
      %v1711 = vmul.f32 %v1455, %v1694
      %v1712 = vmul.f32 %v1456, %v1694
      %v1713 = vmul.f32 %v1457, %v1694
      %v1714 = vmul.f32 %v1458, %v1694
      %v1715 = vmul.f32 %v1459, %v1694
      %v1716 = vmul.f32 %v1460, %v1694
      %v1717 = vmul.f32 %v1461, %v1694
      %v1718 = vmul.f32 %v1462, %v1695
      %v1719 = vmul.f32 %v1463, %v1695
      %v1720 = vmul.f32 %v1464, %v1695
      %v1721 = vmul.f32 %v1465, %v1695
      %v1722 = vmul.f32 %v1466, %v1695
      %v1723 = vmul.f32 %v1467, %v1695
      %v1724 = vmul.f32 %v1468, %v1695
      %v1725 = vmul.f32 %v1469, %v1695
      %v1726 = vmul.f32 %v1470, %v1695
      %v1727 = vmul.f32 %v1471, %v1695
      %v1728 = vmul.f32 %v1472, %v1695
      %v1729 = vmul.f32 %v1473, %v1695
      %v1730 = vmul.f32 %v1474, %v1695
      %v1731 = vmul.f32 %v1475, %v1695
      %v1732 = vmul.f32 %v1476, %v1695
      %v1733 = vmul.f32 %v1477, %v1695
      %v1734 = vmul.f32 %v1478, %v1695
      %v1735 = vmul.f32 %v1479, %v1695
      %v1736 = vmul.f32 %v1480, %v1695
      %v1737 = vmul.f32 %v1481, %v1695
      %v1738 = vmul.f32 %v1482, %v1696
      %v1739 = vmul.f32 %v1483, %v1696
      %v1740 = vmul.f32 %v1484, %v1696
      %v1741 = vmul.f32 %v1485, %v1696
      %v1742 = vmul.f32 %v1486, %v1696
      %v1743 = vmul.f32 %v1487, %v1696
      %v1744 = vmul.f32 %v1488, %v1696
      %v1745 = vmul.f32 %v1489, %v1696
      %v1746 = vmul.f32 %v1490, %v1696
      %v1747 = vmul.f32 %v1491, %v1696
      %v1748 = vmul.f32 %v1492, %v1696
      %v1749 = vmul.f32 %v1493, %v1696
      %v1750 = vmul.f32 %v1494, %v1696
      %v1751 = vmul.f32 %v1495, %v1696
      %v1752 = vmul.f32 %v1496, %v1696
      %v1753 = vmul.f32 %v1497, %v1696
      %v1754 = vmul.f32 %v1498, %v1696
      %v1755 = vmul.f32 %v1499, %v1696
      %v1756 = vmul.f32 %v1500, %v1696
      %v1757 = vmul.f32 %v1501, %v1696
      %v1758 = vmul.f32 %v1502, %v1697
      %v1759 = vmul.f32 %v1503, %v1697
      %v1760 = vmul.f32 %v1504, %v1697
      %v1761 = vmul.f32 %v1505, %v1697
      %v1762 = vmul.f32 %v1506, %v1697
      %v1763 = vmul.f32 %v1507, %v1697
      %v1764 = vmul.f32 %v1508, %v1697
      %v1765 = vmul.f32 %v1509, %v1697
      %v1766 = vmul.f32 %v1510, %v1697
      %v1767 = vmul.f32 %v1511, %v1697
      %v1768 = vmul.f32 %v1512, %v1697
      %v1769 = vmul.f32 %v1513, %v1697
      %v1770 = vmul.f32 %v1514, %v1697
      %v1771 = vmul.f32 %v1515, %v1697
      %v1772 = vmul.f32 %v1516, %v1697
      %v1773 = vmul.f32 %v1517, %v1697
      %v1774 = vmul.f32 %v1518, %v1697
      %v1775 = vmul.f32 %v1519, %v1697
      %v1776 = vmul.f32 %v1520, %v1697
      %v1777 = vmul.f32 %v1521, %v1697
      %v1778 = vxor.u32 %v1698, 2147483648
      %v1779 = vxor.u32 %v1699, 2147483648
      %v1780 = vxor.u32 %v1700, 2147483648
      %v1781 = vxor.u32 %v1701, 2147483648
      %v1782 = vxor.u32 %v1702, 2147483648
      %v1783 = vxor.u32 %v1703, 2147483648
      %v1784 = vxor.u32 %v1704, 2147483648
      %v1785 = vxor.u32 %v1705, 2147483648
      %v1786 = vxor.u32 %v1706, 2147483648
      %v1787 = vxor.u32 %v1707, 2147483648
      %v1788 = vxor.u32 %v1708, 2147483648
      %v1789 = vxor.u32 %v1709, 2147483648
      %v1790 = vxor.u32 %v1710, 2147483648
      %v1791 = vxor.u32 %v1711, 2147483648
      %v1792 = vxor.u32 %v1712, 2147483648
      %v1793 = vxor.u32 %v1713, 2147483648
      %v1794 = vxor.u32 %v1714, 2147483648
      %v1795 = vxor.u32 %v1715, 2147483648
      %v1796 = vxor.u32 %v1716, 2147483648
      %v1797 = vxor.u32 %v1717, 2147483648
      %v1798 = vxor.u32 %v1718, 2147483648
      %v1799 = vxor.u32 %v1719, 2147483648
      %v1800 = vxor.u32 %v1720, 2147483648
      %v1801 = vxor.u32 %v1721, 2147483648
      %v1802 = vxor.u32 %v1722, 2147483648
      %v1803 = vxor.u32 %v1723, 2147483648
      %v1804 = vxor.u32 %v1724, 2147483648
      %v1805 = vxor.u32 %v1725, 2147483648
      %v1806 = vxor.u32 %v1726, 2147483648
      %v1807 = vxor.u32 %v1727, 2147483648
      %v1808 = vxor.u32 %v1728, 2147483648
      %v1809 = vxor.u32 %v1729, 2147483648
      %v1810 = vxor.u32 %v1730, 2147483648
      %v1811 = vxor.u32 %v1731, 2147483648
      %v1812 = vxor.u32 %v1732, 2147483648
      %v1813 = vxor.u32 %v1733, 2147483648
      %v1814 = vxor.u32 %v1734, 2147483648
      %v1815 = vxor.u32 %v1735, 2147483648
      %v1816 = vxor.u32 %v1736, 2147483648
      %v1817 = vxor.u32 %v1737, 2147483648
      %v1818 = vxor.u32 %v1738, 2147483648
      %v1819 = vxor.u32 %v1739, 2147483648
      %v1820 = vxor.u32 %v1740, 2147483648
      %v1821 = vxor.u32 %v1741, 2147483648
      %v1822 = vxor.u32 %v1742, 2147483648
      %v1823 = vxor.u32 %v1743, 2147483648
      %v1824 = vxor.u32 %v1744, 2147483648
      %v1825 = vxor.u32 %v1745, 2147483648
      %v1826 = vxor.u32 %v1746, 2147483648
      %v1827 = vxor.u32 %v1747, 2147483648
      %v1828 = vxor.u32 %v1748, 2147483648
      %v1829 = vxor.u32 %v1749, 2147483648
      %v1830 = vxor.u32 %v1750, 2147483648
      %v1831 = vxor.u32 %v1751, 2147483648
      %v1832 = vxor.u32 %v1752, 2147483648
      %v1833 = vxor.u32 %v1753, 2147483648
      %v1834 = vxor.u32 %v1754, 2147483648
      %v1835 = vxor.u32 %v1755, 2147483648
      %v1836 = vxor.u32 %v1756, 2147483648
      %v1837 = vxor.u32 %v1757, 2147483648
      %v1838 = vxor.u32 %v1758, 2147483648
      %v1839 = vxor.u32 %v1759, 2147483648
      %v1840 = vxor.u32 %v1760, 2147483648
      %v1841 = vxor.u32 %v1761, 2147483648
      %v1842 = vxor.u32 %v1762, 2147483648
      %v1843 = vxor.u32 %v1763, 2147483648
      %v1844 = vxor.u32 %v1764, 2147483648
      %v1845 = vxor.u32 %v1765, 2147483648
      %v1846 = vxor.u32 %v1766, 2147483648
      %v1847 = vxor.u32 %v1767, 2147483648
      %v1848 = vxor.u32 %v1768, 2147483648
      %v1849 = vxor.u32 %v1769, 2147483648
      %v1850 = vxor.u32 %v1770, 2147483648
      %v1851 = vxor.u32 %v1771, 2147483648
      %v1852 = vxor.u32 %v1772, 2147483648
      %v1853 = vxor.u32 %v1773, 2147483648
      %v1854 = vxor.u32 %v1774, 2147483648
      %v1855 = vxor.u32 %v1775, 2147483648
      %v1856 = vxor.u32 %v1776, 2147483648
      %v1857 = vxor.u32 %v1777, 2147483648
      %v1858 = vmul.f32 %v1778, 1.442695
      %v1859 = vpow.pop %v1858
      %v1860 = vmul.f32 %v1779, 1.442695
      %v1861 = vpow.pop %v1860
      %v1862 = vmul.f32 %v1780, 1.442695
      %v1863 = vpow.pop %v1862
      %v1864 = vmul.f32 %v1781, 1.442695
      %v1865 = vpow.pop %v1864
      %v1866 = vmul.f32 %v1782, 1.442695
      %v1867 = vpow.pop %v1866
      %v1868 = vmul.f32 %v1783, 1.442695
      %v1869 = vpow.pop %v1868
      %v1870 = vmul.f32 %v1784, 1.442695
      %v1871 = vpow.pop %v1870
      %v1872 = vmul.f32 %v1785, 1.442695
      %v1873 = vpow.pop %v1872
      %v1874 = vmul.f32 %v1786, 1.442695
      %v1875 = vpow.pop %v1874
      %v1876 = vmul.f32 %v1787, 1.442695
      %v1877 = vpow.pop %v1876
      %v1878 = vmul.f32 %v1788, 1.442695
      %v1879 = vpow.pop %v1878
      %v1880 = vmul.f32 %v1789, 1.442695
      %v1881 = vpow.pop %v1880
      %v1882 = vmul.f32 %v1790, 1.442695
      %v1883 = vpow.pop %v1882
      %v1884 = vmul.f32 %v1791, 1.442695
      %v1885 = vpow.pop %v1884
      %v1886 = vmul.f32 %v1792, 1.442695
      %v1887 = vpow.pop %v1886
      %v1888 = vmul.f32 %v1793, 1.442695
      %v1889 = vpow.pop %v1888
      %v1890 = vmul.f32 %v1794, 1.442695
      %v1891 = vpow.pop %v1890
      %v1892 = vmul.f32 %v1795, 1.442695
      %v1893 = vpow.pop %v1892
      %v1894 = vmul.f32 %v1796, 1.442695
      %v1895 = vpow.pop %v1894
      %v1896 = vmul.f32 %v1797, 1.442695
      %v1897 = vpow.pop %v1896
      %v1898 = vmul.f32 %v1798, 1.442695
      %v1899 = vpow.pop %v1898
      %v1900 = vmul.f32 %v1799, 1.442695
      %v1901 = vpow.pop %v1900
      %v1902 = vmul.f32 %v1800, 1.442695
      %v1903 = vpow.pop %v1902
      %v1904 = vmul.f32 %v1801, 1.442695
      %v1905 = vpow.pop %v1904
      %v1906 = vmul.f32 %v1802, 1.442695
      %v1907 = vpow.pop %v1906
      %v1908 = vmul.f32 %v1803, 1.442695
      %v1909 = vpow.pop %v1908
      %v1910 = vmul.f32 %v1804, 1.442695
      %v1911 = vpow.pop %v1910
      %v1912 = vmul.f32 %v1805, 1.442695
      %v1913 = vpow.pop %v1912
      %v1914 = vmul.f32 %v1806, 1.442695
      %v1915 = vpow.pop %v1914
      %v1916 = vmul.f32 %v1807, 1.442695
      %v1917 = vpow.pop %v1916
      %v1918 = vmul.f32 %v1808, 1.442695
      %v1919 = vpow.pop %v1918
      %v1920 = vmul.f32 %v1809, 1.442695
      %v1921 = vpow.pop %v1920
      %v1922 = vmul.f32 %v1810, 1.442695
      %v1923 = vpow.pop %v1922
      %v1924 = vmul.f32 %v1811, 1.442695
      %v1925 = vpow.pop %v1924
      %v1926 = vmul.f32 %v1812, 1.442695
      %v1927 = vpow.pop %v1926
      %v1928 = vmul.f32 %v1813, 1.442695
      %v1929 = vpow.pop %v1928
      %v1930 = vmul.f32 %v1814, 1.442695
      %v1931 = vpow.pop %v1930
      %v1932 = vmul.f32 %v1815, 1.442695
      %v1933 = vpow.pop %v1932
      %v1934 = vmul.f32 %v1816, 1.442695
      %v1935 = vpow.pop %v1934
      %v1936 = vmul.f32 %v1817, 1.442695
      %v1937 = vpow.pop %v1936
      %v1938 = vmul.f32 %v1818, 1.442695
      %v1939 = vpow.pop %v1938
      %v1940 = vmul.f32 %v1819, 1.442695
      %v1941 = vpow.pop %v1940
      %v1942 = vmul.f32 %v1820, 1.442695
      %v1943 = vpow.pop %v1942
      %v1944 = vmul.f32 %v1821, 1.442695
      %v1945 = vpow.pop %v1944
      %v1946 = vmul.f32 %v1822, 1.442695
      %v1947 = vpow.pop %v1946
      %v1948 = vmul.f32 %v1823, 1.442695
      %v1949 = vpow.pop %v1948
      %v1950 = vmul.f32 %v1824, 1.442695
      %v1951 = vpow.pop %v1950
      %v1952 = vmul.f32 %v1825, 1.442695
      %v1953 = vpow.pop %v1952
      %v1954 = vmul.f32 %v1826, 1.442695
      %v1955 = vpow.pop %v1954
      %v1956 = vmul.f32 %v1827, 1.442695
      %v1957 = vpow.pop %v1956
      %v1958 = vmul.f32 %v1828, 1.442695
      %v1959 = vpow.pop %v1958
      %v1960 = vmul.f32 %v1829, 1.442695
      %v1961 = vpow.pop %v1960
      %v1962 = vmul.f32 %v1830, 1.442695
      %v1963 = vpow.pop %v1962
      %v1964 = vmul.f32 %v1831, 1.442695
      %v1965 = vpow.pop %v1964
      %v1966 = vmul.f32 %v1832, 1.442695
      %v1967 = vpow.pop %v1966
      %v1968 = vmul.f32 %v1833, 1.442695
      %v1969 = vpow.pop %v1968
      %v1970 = vmul.f32 %v1834, 1.442695
      %v1971 = vpow.pop %v1970
      %v1972 = vmul.f32 %v1835, 1.442695
      %v1973 = vpow.pop %v1972
      %v1974 = vmul.f32 %v1836, 1.442695
      %v1975 = vpow.pop %v1974
      %v1976 = vmul.f32 %v1837, 1.442695
      %v1977 = vpow.pop %v1976
      %v1978 = vmul.f32 %v1838, 1.442695
      %v1979 = vpow.pop %v1978
      %v1980 = vmul.f32 %v1839, 1.442695
      %v1981 = vpow.pop %v1980
      %v1982 = vmul.f32 %v1840, 1.442695
      %v1983 = vpow.pop %v1982
      %v1984 = vmul.f32 %v1841, 1.442695
      %v1985 = vpow.pop %v1984
      %v1986 = vmul.f32 %v1842, 1.442695
      %v1987 = vpow.pop %v1986
      %v1988 = vmul.f32 %v1843, 1.442695
      %v1989 = vpow.pop %v1988
      %v1990 = vmul.f32 %v1844, 1.442695
      %v1991 = vpow.pop %v1990
      %v1992 = vmul.f32 %v1845, 1.442695
      %v1993 = vpow.pop %v1992
      %v1994 = vmul.f32 %v1846, 1.442695
      %v1995 = vpow.pop %v1994
      %v1996 = vmul.f32 %v1847, 1.442695
      %v1997 = vpow.pop %v1996
      %v1998 = vmul.f32 %v1848, 1.442695
      %v1999 = vpow.pop %v1998
      %v2000 = vmul.f32 %v1849, 1.442695
      %v2001 = vpow.pop %v2000
      %v2002 = vmul.f32 %v1850, 1.442695
      %v2003 = vpow.pop %v2002
      %v2004 = vmul.f32 %v1851, 1.442695
      %v2005 = vpow.pop %v2004
      %v2006 = vmul.f32 %v1852, 1.442695
      %v2007 = vpow.pop %v2006
      %v2008 = vmul.f32 %v1853, 1.442695
      %v2009 = vpow.pop %v2008
      %v2010 = vmul.f32 %v1854, 1.442695
      %v2011 = vpow.pop %v2010
      %v2012 = vmul.f32 %v1855, 1.442695
      %v2013 = vpow.pop %v2012
      %v2014 = vmul.f32 %v1856, 1.442695
      %v2015 = vpow.pop %v2014
      %v2016 = vmul.f32 %v1857, 1.442695
      %v2017 = vpow.pop %v2016
      %v2018 = vadd.f32 %v1859, 1.0
      %v2019 = vadd.f32 %v1861, 1.0
      %v2020 = vadd.f32 %v1863, 1.0
      %v2021 = vadd.f32 %v1865, 1.0
      %v2022 = vadd.f32 %v1867, 1.0
      %v2023 = vadd.f32 %v1869, 1.0
      %v2024 = vadd.f32 %v1871, 1.0
      %v2025 = vadd.f32 %v1873, 1.0
      %v2026 = vadd.f32 %v1875, 1.0
      %v2027 = vadd.f32 %v1877, 1.0
      %v2028 = vadd.f32 %v1879, 1.0
      %v2029 = vadd.f32 %v1881, 1.0
      %v2030 = vadd.f32 %v1883, 1.0
      %v2031 = vadd.f32 %v1885, 1.0
      %v2032 = vadd.f32 %v1887, 1.0
      %v2033 = vadd.f32 %v1889, 1.0
      %v2034 = vadd.f32 %v1891, 1.0
      %v2035 = vadd.f32 %v1893, 1.0
      %v2036 = vadd.f32 %v1895, 1.0
      %v2037 = vadd.f32 %v1897, 1.0
      %v2038 = vadd.f32 %v1899, 1.0
      %v2039 = vadd.f32 %v1901, 1.0
      %v2040 = vadd.f32 %v1903, 1.0
      %v2041 = vadd.f32 %v1905, 1.0
      %v2042 = vadd.f32 %v1907, 1.0
      %v2043 = vadd.f32 %v1909, 1.0
      %v2044 = vadd.f32 %v1911, 1.0
      %v2045 = vadd.f32 %v1913, 1.0
      %v2046 = vadd.f32 %v1915, 1.0
      %v2047 = vadd.f32 %v1917, 1.0
      %v2048 = vadd.f32 %v1919, 1.0
      %v2049 = vadd.f32 %v1921, 1.0
      %v2050 = vadd.f32 %v1923, 1.0
      %v2051 = vadd.f32 %v1925, 1.0
      %v2052 = vadd.f32 %v1927, 1.0
      %v2053 = vadd.f32 %v1929, 1.0
      %v2054 = vadd.f32 %v1931, 1.0
      %v2055 = vadd.f32 %v1933, 1.0
      %v2056 = vadd.f32 %v1935, 1.0
      %v2057 = vadd.f32 %v1937, 1.0
      %v2058 = vadd.f32 %v1939, 1.0
      %v2059 = vadd.f32 %v1941, 1.0
      %v2060 = vadd.f32 %v1943, 1.0
      %v2061 = vadd.f32 %v1945, 1.0
      %v2062 = vadd.f32 %v1947, 1.0
      %v2063 = vadd.f32 %v1949, 1.0
      %v2064 = vadd.f32 %v1951, 1.0
      %v2065 = vadd.f32 %v1953, 1.0
      %v2066 = vadd.f32 %v1955, 1.0
      %v2067 = vadd.f32 %v1957, 1.0
      %v2068 = vadd.f32 %v1959, 1.0
      %v2069 = vadd.f32 %v1961, 1.0
      %v2070 = vadd.f32 %v1963, 1.0
      %v2071 = vadd.f32 %v1965, 1.0
      %v2072 = vadd.f32 %v1967, 1.0
      %v2073 = vadd.f32 %v1969, 1.0
      %v2074 = vadd.f32 %v1971, 1.0
      %v2075 = vadd.f32 %v1973, 1.0
      %v2076 = vadd.f32 %v1975, 1.0
      %v2077 = vadd.f32 %v1977, 1.0
      %v2078 = vadd.f32 %v1979, 1.0
      %v2079 = vadd.f32 %v1981, 1.0
      %v2080 = vadd.f32 %v1983, 1.0
      %v2081 = vadd.f32 %v1985, 1.0
      %v2082 = vadd.f32 %v1987, 1.0
      %v2083 = vadd.f32 %v1989, 1.0
      %v2084 = vadd.f32 %v1991, 1.0
      %v2085 = vadd.f32 %v1993, 1.0
      %v2086 = vadd.f32 %v1995, 1.0
      %v2087 = vadd.f32 %v1997, 1.0
      %v2088 = vadd.f32 %v1999, 1.0
      %v2089 = vadd.f32 %v2001, 1.0
      %v2090 = vadd.f32 %v2003, 1.0
      %v2091 = vadd.f32 %v2005, 1.0
      %v2092 = vadd.f32 %v2007, 1.0
      %v2093 = vadd.f32 %v2009, 1.0
      %v2094 = vadd.f32 %v2011, 1.0
      %v2095 = vadd.f32 %v2013, 1.0
      %v2096 = vadd.f32 %v2015, 1.0
      %v2097 = vadd.f32 %v2017, 1.0
      %v2098 = vrcp.pop %v2018
      %v2099 = vmul.f32 1.0, %v2098
      %v2100 = vrcp.pop %v2019
      %v2101 = vmul.f32 1.0, %v2100
      %v2102 = vrcp.pop %v2020
      %v2103 = vmul.f32 1.0, %v2102
      %v2104 = vrcp.pop %v2021
      %v2105 = vmul.f32 1.0, %v2104
      %v2106 = vrcp.pop %v2022
      %v2107 = vmul.f32 1.0, %v2106
      %v2108 = vrcp.pop %v2023
      %v2109 = vmul.f32 1.0, %v2108
      %v2110 = vrcp.pop %v2024
      %v2111 = vmul.f32 1.0, %v2110
      %v2112 = vrcp.pop %v2025
      %v2113 = vmul.f32 1.0, %v2112
      %v2114 = vrcp.pop %v2026
      %v2115 = vmul.f32 1.0, %v2114
      %v2116 = vrcp.pop %v2027
      %v2117 = vmul.f32 1.0, %v2116
      %v2118 = vrcp.pop %v2028
      %v2119 = vmul.f32 1.0, %v2118
      %v2120 = vrcp.pop %v2029
      %v2121 = vmul.f32 1.0, %v2120
      %v2122 = vrcp.pop %v2030
      %v2123 = vmul.f32 1.0, %v2122
      %v2124 = vrcp.pop %v2031
      %v2125 = vmul.f32 1.0, %v2124
      %v2126 = vrcp.pop %v2032
      %v2127 = vmul.f32 1.0, %v2126
      %v2128 = vrcp.pop %v2033
      %v2129 = vmul.f32 1.0, %v2128
      %v2130 = vrcp.pop %v2034
      %v2131 = vmul.f32 1.0, %v2130
      %v2132 = vrcp.pop %v2035
      %v2133 = vmul.f32 1.0, %v2132
      %v2134 = vrcp.pop %v2036
      %v2135 = vmul.f32 1.0, %v2134
      %v2136 = vrcp.pop %v2037
      %v2137 = vmul.f32 1.0, %v2136
      %v2138 = vrcp.pop %v2038
      %v2139 = vmul.f32 1.0, %v2138
      %v2140 = vrcp.pop %v2039
      %v2141 = vmul.f32 1.0, %v2140
      %v2142 = vrcp.pop %v2040
      %v2143 = vmul.f32 1.0, %v2142
      %v2144 = vrcp.pop %v2041
      %v2145 = vmul.f32 1.0, %v2144
      %v2146 = vrcp.pop %v2042
      %v2147 = vmul.f32 1.0, %v2146
      %v2148 = vrcp.pop %v2043
      %v2149 = vmul.f32 1.0, %v2148
      %v2150 = vrcp.pop %v2044
      %v2151 = vmul.f32 1.0, %v2150
      %v2152 = vrcp.pop %v2045
      %v2153 = vmul.f32 1.0, %v2152
      %v2154 = vrcp.pop %v2046
      %v2155 = vmul.f32 1.0, %v2154
      %v2156 = vrcp.pop %v2047
      %v2157 = vmul.f32 1.0, %v2156
      %v2158 = vrcp.pop %v2048
      %v2159 = vmul.f32 1.0, %v2158
      %v2160 = vrcp.pop %v2049
      %v2161 = vmul.f32 1.0, %v2160
      %v2162 = vrcp.pop %v2050
      %v2163 = vmul.f32 1.0, %v2162
      %v2164 = vrcp.pop %v2051
      %v2165 = vmul.f32 1.0, %v2164
      %v2166 = vrcp.pop %v2052
      %v2167 = vmul.f32 1.0, %v2166
      %v2168 = vrcp.pop %v2053
      %v2169 = vmul.f32 1.0, %v2168
      %v2170 = vrcp.pop %v2054
      %v2171 = vmul.f32 1.0, %v2170
      %v2172 = vrcp.pop %v2055
      %v2173 = vmul.f32 1.0, %v2172
      %v2174 = vrcp.pop %v2056
      %v2175 = vmul.f32 1.0, %v2174
      %v2176 = vrcp.pop %v2057
      %v2177 = vmul.f32 1.0, %v2176
      %v2178 = vrcp.pop %v2058
      %v2179 = vmul.f32 1.0, %v2178
      %v2180 = vrcp.pop %v2059
      %v2181 = vmul.f32 1.0, %v2180
      %v2182 = vrcp.pop %v2060
      %v2183 = vmul.f32 1.0, %v2182
      %v2184 = vrcp.pop %v2061
      %v2185 = vmul.f32 1.0, %v2184
      %v2186 = vrcp.pop %v2062
      %v2187 = vmul.f32 1.0, %v2186
      %v2188 = vrcp.pop %v2063
      %v2189 = vmul.f32 1.0, %v2188
      %v2190 = vrcp.pop %v2064
      %v2191 = vmul.f32 1.0, %v2190
      %v2192 = vrcp.pop %v2065
      %v2193 = vmul.f32 1.0, %v2192
      %v2194 = vrcp.pop %v2066
      %v2195 = vmul.f32 1.0, %v2194
      %v2196 = vrcp.pop %v2067
      %v2197 = vmul.f32 1.0, %v2196
      %v2198 = vrcp.pop %v2068
      %v2199 = vmul.f32 1.0, %v2198
      %v2200 = vrcp.pop %v2069
      %v2201 = vmul.f32 1.0, %v2200
      %v2202 = vrcp.pop %v2070
      %v2203 = vmul.f32 1.0, %v2202
      %v2204 = vrcp.pop %v2071
      %v2205 = vmul.f32 1.0, %v2204
      %v2206 = vrcp.pop %v2072
      %v2207 = vmul.f32 1.0, %v2206
      %v2208 = vrcp.pop %v2073
      %v2209 = vmul.f32 1.0, %v2208
      %v2210 = vrcp.pop %v2074
      %v2211 = vmul.f32 1.0, %v2210
      %v2212 = vrcp.pop %v2075
      %v2213 = vmul.f32 1.0, %v2212
      %v2214 = vrcp.pop %v2076
      %v2215 = vmul.f32 1.0, %v2214
      %v2216 = vrcp.pop %v2077
      %v2217 = vmul.f32 1.0, %v2216
      %v2218 = vrcp.pop %v2078
      %v2219 = vmul.f32 1.0, %v2218
      %v2220 = vrcp.pop %v2079
      %v2221 = vmul.f32 1.0, %v2220
      %v2222 = vrcp.pop %v2080
      %v2223 = vmul.f32 1.0, %v2222
      %v2224 = vrcp.pop %v2081
      %v2225 = vmul.f32 1.0, %v2224
      %v2226 = vrcp.pop %v2082
      %v2227 = vmul.f32 1.0, %v2226
      %v2228 = vrcp.pop %v2083
      %v2229 = vmul.f32 1.0, %v2228
      %v2230 = vrcp.pop %v2084
      %v2231 = vmul.f32 1.0, %v2230
      %v2232 = vrcp.pop %v2085
      %v2233 = vmul.f32 1.0, %v2232
      %v2234 = vrcp.pop %v2086
      %v2235 = vmul.f32 1.0, %v2234
      %v2236 = vrcp.pop %v2087
      %v2237 = vmul.f32 1.0, %v2236
      %v2238 = vrcp.pop %v2088
      %v2239 = vmul.f32 1.0, %v2238
      %v2240 = vrcp.pop %v2089
      %v2241 = vmul.f32 1.0, %v2240
      %v2242 = vrcp.pop %v2090
      %v2243 = vmul.f32 1.0, %v2242
      %v2244 = vrcp.pop %v2091
      %v2245 = vmul.f32 1.0, %v2244
      %v2246 = vrcp.pop %v2092
      %v2247 = vmul.f32 1.0, %v2246
      %v2248 = vrcp.pop %v2093
      %v2249 = vmul.f32 1.0, %v2248
      %v2250 = vrcp.pop %v2094
      %v2251 = vmul.f32 1.0, %v2250
      %v2252 = vrcp.pop %v2095
      %v2253 = vmul.f32 1.0, %v2252
      %v2254 = vrcp.pop %v2096
      %v2255 = vmul.f32 1.0, %v2254
      %v2256 = vrcp.pop %v2097
      %v2257 = vmul.f32 1.0, %v2256
      %v2258 = vmul.f32 %v2099, 1.442695
      %v2259 = vpow.pop %v2258
      %v2260 = vmul.f32 %v2101, 1.442695
      %v2261 = vpow.pop %v2260
      %v2262 = vmul.f32 %v2103, 1.442695
      %v2263 = vpow.pop %v2262
      %v2264 = vmul.f32 %v2105, 1.442695
      %v2265 = vpow.pop %v2264
      %v2266 = vmul.f32 %v2107, 1.442695
      %v2267 = vpow.pop %v2266
      %v2268 = vmul.f32 %v2109, 1.442695
      %v2269 = vpow.pop %v2268
      %v2270 = vmul.f32 %v2111, 1.442695
      %v2271 = vpow.pop %v2270
      %v2272 = vmul.f32 %v2113, 1.442695
      %v2273 = vpow.pop %v2272
      %v2274 = vmul.f32 %v2115, 1.442695
      %v2275 = vpow.pop %v2274
      %v2276 = vmul.f32 %v2117, 1.442695
      %v2277 = vpow.pop %v2276
      %v2278 = vmul.f32 %v2119, 1.442695
      %v2279 = vpow.pop %v2278
      %v2280 = vmul.f32 %v2121, 1.442695
      %v2281 = vpow.pop %v2280
      %v2282 = vmul.f32 %v2123, 1.442695
      %v2283 = vpow.pop %v2282
      %v2284 = vmul.f32 %v2125, 1.442695
      %v2285 = vpow.pop %v2284
      %v2286 = vmul.f32 %v2127, 1.442695
      %v2287 = vpow.pop %v2286
      %v2288 = vmul.f32 %v2129, 1.442695
      %v2289 = vpow.pop %v2288
      %v2290 = vmul.f32 %v2131, 1.442695
      %v2291 = vpow.pop %v2290
      %v2292 = vmul.f32 %v2133, 1.442695
      %v2293 = vpow.pop %v2292
      %v2294 = vmul.f32 %v2135, 1.442695
      %v2295 = vpow.pop %v2294
      %v2296 = vmul.f32 %v2137, 1.442695
      %v2297 = vpow.pop %v2296
      %v2298 = vmul.f32 %v2139, 1.442695
      %v2299 = vpow.pop %v2298
      %v2300 = vmul.f32 %v2141, 1.442695
      %v2301 = vpow.pop %v2300
      %v2302 = vmul.f32 %v2143, 1.442695
      %v2303 = vpow.pop %v2302
      %v2304 = vmul.f32 %v2145, 1.442695
      %v2305 = vpow.pop %v2304
      %v2306 = vmul.f32 %v2147, 1.442695
      %v2307 = vpow.pop %v2306
      %v2308 = vmul.f32 %v2149, 1.442695
      %v2309 = vpow.pop %v2308
      %v2310 = vmul.f32 %v2151, 1.442695
      %v2311 = vpow.pop %v2310
      %v2312 = vmul.f32 %v2153, 1.442695
      %v2313 = vpow.pop %v2312
      %v2314 = vmul.f32 %v2155, 1.442695
      %v2315 = vpow.pop %v2314
      %v2316 = vmul.f32 %v2157, 1.442695
      %v2317 = vpow.pop %v2316
      %v2318 = vmul.f32 %v2159, 1.442695
      %v2319 = vpow.pop %v2318
      %v2320 = vmul.f32 %v2161, 1.442695
      %v2321 = vpow.pop %v2320
      %v2322 = vmul.f32 %v2163, 1.442695
      %v2323 = vpow.pop %v2322
      %v2324 = vmul.f32 %v2165, 1.442695
      %v2325 = vpow.pop %v2324
      %v2326 = vmul.f32 %v2167, 1.442695
      %v2327 = vpow.pop %v2326
      %v2328 = vmul.f32 %v2169, 1.442695
      %v2329 = vpow.pop %v2328
      %v2330 = vmul.f32 %v2171, 1.442695
      %v2331 = vpow.pop %v2330
      %v2332 = vmul.f32 %v2173, 1.442695
      %v2333 = vpow.pop %v2332
      %v2334 = vmul.f32 %v2175, 1.442695
      %v2335 = vpow.pop %v2334
      %v2336 = vmul.f32 %v2177, 1.442695
      %v2337 = vpow.pop %v2336
      %v2338 = vmul.f32 %v2179, 1.442695
      %v2339 = vpow.pop %v2338
      %v2340 = vmul.f32 %v2181, 1.442695
      %v2341 = vpow.pop %v2340
      %v2342 = vmul.f32 %v2183, 1.442695
      %v2343 = vpow.pop %v2342
      %v2344 = vmul.f32 %v2185, 1.442695
      %v2345 = vpow.pop %v2344
      %v2346 = vmul.f32 %v2187, 1.442695
      %v2347 = vpow.pop %v2346
      %v2348 = vmul.f32 %v2189, 1.442695
      %v2349 = vpow.pop %v2348
      %v2350 = vmul.f32 %v2191, 1.442695
      %v2351 = vpow.pop %v2350
      %v2352 = vmul.f32 %v2193, 1.442695
      %v2353 = vpow.pop %v2352
      %v2354 = vmul.f32 %v2195, 1.442695
      %v2355 = vpow.pop %v2354
      %v2356 = vmul.f32 %v2197, 1.442695
      %v2357 = vpow.pop %v2356
      %v2358 = vmul.f32 %v2199, 1.442695
      %v2359 = vpow.pop %v2358
      %v2360 = vmul.f32 %v2201, 1.442695
      %v2361 = vpow.pop %v2360
      %v2362 = vmul.f32 %v2203, 1.442695
      %v2363 = vpow.pop %v2362
      %v2364 = vmul.f32 %v2205, 1.442695
      %v2365 = vpow.pop %v2364
      %v2366 = vmul.f32 %v2207, 1.442695
      %v2367 = vpow.pop %v2366
      %v2368 = vmul.f32 %v2209, 1.442695
      %v2369 = vpow.pop %v2368
      %v2370 = vmul.f32 %v2211, 1.442695
      %v2371 = vpow.pop %v2370
      %v2372 = vmul.f32 %v2213, 1.442695
      %v2373 = vpow.pop %v2372
      %v2374 = vmul.f32 %v2215, 1.442695
      %v2375 = vpow.pop %v2374
      %v2376 = vmul.f32 %v2217, 1.442695
      %v2377 = vpow.pop %v2376
      %v2378 = vmul.f32 %v2219, 1.442695
      %v2379 = vpow.pop %v2378
      %v2380 = vmul.f32 %v2221, 1.442695
      %v2381 = vpow.pop %v2380
      %v2382 = vmul.f32 %v2223, 1.442695
      %v2383 = vpow.pop %v2382
      %v2384 = vmul.f32 %v2225, 1.442695
      %v2385 = vpow.pop %v2384
      %v2386 = vmul.f32 %v2227, 1.442695
      %v2387 = vpow.pop %v2386
      %v2388 = vmul.f32 %v2229, 1.442695
      %v2389 = vpow.pop %v2388
      %v2390 = vmul.f32 %v2231, 1.442695
      %v2391 = vpow.pop %v2390
      %v2392 = vmul.f32 %v2233, 1.442695
      %v2393 = vpow.pop %v2392
      %v2394 = vmul.f32 %v2235, 1.442695
      %v2395 = vpow.pop %v2394
      %v2396 = vmul.f32 %v2237, 1.442695
      %v2397 = vpow.pop %v2396
      %v2398 = vmul.f32 %v2239, 1.442695
      %v2399 = vpow.pop %v2398
      %v2400 = vmul.f32 %v2241, 1.442695
      %v2401 = vpow.pop %v2400
      %v2402 = vmul.f32 %v2243, 1.442695
      %v2403 = vpow.pop %v2402
      %v2404 = vmul.f32 %v2245, 1.442695
      %v2405 = vpow.pop %v2404
      %v2406 = vmul.f32 %v2247, 1.442695
      %v2407 = vpow.pop %v2406
      %v2408 = vmul.f32 %v2249, 1.442695
      %v2409 = vpow.pop %v2408
      %v2410 = vmul.f32 %v2251, 1.442695
      %v2411 = vpow.pop %v2410
      %v2412 = vmul.f32 %v2253, 1.442695
      %v2413 = vpow.pop %v2412
      %v2414 = vmul.f32 %v2255, 1.442695
      %v2415 = vpow.pop %v2414
      %v2416 = vmul.f32 %v2257, 1.442695
      %v2417 = vpow.pop %v2416
      %v2418 = vmul.f32 %v2259, %v370
      %v2419 = vmul.f32 %v2261, %v371
      %v2420 = vmul.f32 %v2263, %v372
      %v2421 = vmul.f32 %v2265, %v373
      %v2422 = vmul.f32 %v2267, %v374
      %v2423 = vmul.f32 %v2269, %v375
      %v2424 = vmul.f32 %v2271, %v376
      %v2425 = vmul.f32 %v2273, %v377
      %v2426 = vmul.f32 %v2275, %v378
      %v2427 = vmul.f32 %v2277, %v379
      %v2428 = vmul.f32 %v2279, %v380
      %v2429 = vmul.f32 %v2281, %v381
      %v2430 = vmul.f32 %v2283, %v382
      %v2431 = vmul.f32 %v2285, %v383
      %v2432 = vmul.f32 %v2287, %v384
      %v2433 = vmul.f32 %v2289, %v385
      %v2434 = vmul.f32 %v2291, %v386
      %v2435 = vmul.f32 %v2293, %v387
      %v2436 = vmul.f32 %v2295, %v388
      %v2437 = vmul.f32 %v2297, %v389
      %v2438 = vmul.f32 %v2299, %v390
      %v2439 = vmul.f32 %v2301, %v391
      %v2440 = vmul.f32 %v2303, %v392
      %v2441 = vmul.f32 %v2305, %v393
      %v2442 = vmul.f32 %v2307, %v394
      %v2443 = vmul.f32 %v2309, %v395
      %v2444 = vmul.f32 %v2311, %v396
      %v2445 = vmul.f32 %v2313, %v397
      %v2446 = vmul.f32 %v2315, %v398
      %v2447 = vmul.f32 %v2317, %v399
      %v2448 = vmul.f32 %v2319, %v400
      %v2449 = vmul.f32 %v2321, %v401
      %v2450 = vmul.f32 %v2323, %v402
      %v2451 = vmul.f32 %v2325, %v403
      %v2452 = vmul.f32 %v2327, %v404
      %v2453 = vmul.f32 %v2329, %v405
      %v2454 = vmul.f32 %v2331, %v406
      %v2455 = vmul.f32 %v2333, %v407
      %v2456 = vmul.f32 %v2335, %v408
      %v2457 = vmul.f32 %v2337, %v409
      %v2458 = vmul.f32 %v2339, %v410
      %v2459 = vmul.f32 %v2341, %v411
      %v2460 = vmul.f32 %v2343, %v412
      %v2461 = vmul.f32 %v2345, %v413
      %v2462 = vmul.f32 %v2347, %v414
      %v2463 = vmul.f32 %v2349, %v415
      %v2464 = vmul.f32 %v2351, %v416
      %v2465 = vmul.f32 %v2353, %v417
      %v2466 = vmul.f32 %v2355, %v418
      %v2467 = vmul.f32 %v2357, %v419
      %v2468 = vmul.f32 %v2359, %v420
      %v2469 = vmul.f32 %v2361, %v421
      %v2470 = vmul.f32 %v2363, %v422
      %v2471 = vmul.f32 %v2365, %v423
      %v2472 = vmul.f32 %v2367, %v424
      %v2473 = vmul.f32 %v2369, %v425
      %v2474 = vmul.f32 %v2371, %v426
      %v2475 = vmul.f32 %v2373, %v427
      %v2476 = vmul.f32 %v2375, %v428
      %v2477 = vmul.f32 %v2377, %v429
      %v2478 = vmul.f32 %v2379, %v430
      %v2479 = vmul.f32 %v2381, %v431
      %v2480 = vmul.f32 %v2383, %v432
      %v2481 = vmul.f32 %v2385, %v433
      %v2482 = vmul.f32 %v2387, %v434
      %v2483 = vmul.f32 %v2389, %v435
      %v2484 = vmul.f32 %v2391, %v436
      %v2485 = vmul.f32 %v2393, %v437
      %v2486 = vmul.f32 %v2395, %v438
      %v2487 = vmul.f32 %v2397, %v439
      %v2488 = vmul.f32 %v2399, %v440
      %v2489 = vmul.f32 %v2401, %v441
      %v2490 = vmul.f32 %v2403, %v442
      %v2491 = vmul.f32 %v2405, %v443
      %v2492 = vmul.f32 %v2407, %v444
      %v2493 = vmul.f32 %v2409, %v445
      %v2494 = vmul.f32 %v2411, %v446
      %v2495 = vmul.f32 %v2413, %v447
      %v2496 = vmul.f32 %v2415, %v448
      %v2497 = vmul.f32 %v2417, %v449
      %2498 = vmatprep.subr.mxu0 0.0
      %2499 = vmatpush1.msra.mxu0 %v31
      %2500 = vmatprep.subr.mxu0 0.0
      %2501 = vmatpush1.msra.mxu0 %v32
      %2502 = vmatprep.subr.mxu0 0.0
      %2503 = vmatpush1.msra.mxu0 %v33
      %2504 = vmatprep.subr.mxu0 0.0
      %2505 = vmatpush1.msra.mxu0 %v34
      %2506 = vmatprep.subr.mxu0 0.0
      %2507 = vmatpush1.msra.mxu0 %v35
      %2508 = vmatprep.subr.mxu0 0.0
      %2509 = vmatpush1.msra.mxu0 %v36
      %2510 = vmatprep.subr.mxu0 0.0
      %2511 = vmatpush1.msra.mxu0 %v37
      %2512 = vmatprep.subr.mxu0 0.0
      %2513 = vmatpush1.msra.mxu0 %v38
      %2514 = vmatprep.subr.mxu0 0.0
      %2515 = vmatpush1.msra.mxu0 %v39
      %2516 = vmatprep.subr.mxu0 0.0
      %2517 = vmatpush1.msra.mxu0 %v40
      %2518 = vmatprep.subr.mxu0 0.0
      %2519 = vmatpush1.msra.mxu0 %v41
      %2520 = vmatprep.subr.mxu0 0.0
      %2521 = vmatpush1.msra.mxu0 %v42
      %2522 = vmatprep.subr.mxu0 0.0
      %2523 = vmatpush1.msra.mxu0 %v43
      %2524 = vmatprep.subr.mxu0 0.0
      %2525 = vmatpush1.msra.mxu0 %v44
      %2526 = vmatprep.subr.mxu0 0.0
      %2527 = vmatpush1.msra.mxu0 %v45
      %2528 = vmatprep.subr.mxu0 0.0
      %2529 = vmatpush1.msra.mxu0 %v46
      %2530 = vmatprep.subr.mxu0 0.0
      %2531 = vmatpush1.msra.mxu0 %v47
      %2532 = vmatprep.subr.mxu0 0.0
      %2533 = vmatpush1.msra.mxu0 %v48
      %2534 = vmatprep.subr.mxu0 0.0
      %2535 = vmatpush1.msra.mxu0 %v49
      %2536 = vmatprep.subr.mxu0 0.0
      %2537 = vmatpush1.msra.mxu0 %v50
      %2538 = vmatprep.subr.mxu0 0.0
      %2539 = vmatpush1.msra.mxu0 %v51
      %2540 = vmatprep.subr.mxu0 0.0
      %2541 = vmatpush1.msra.mxu0 %v52
      %2542 = vmatprep.subr.mxu0 0.0
      %2543 = vmatpush1.msra.mxu0 %v53
      %2544 = vmatprep.subr.mxu0 0.0
      %2545 = vmatpush1.msra.mxu0 %v54
      %2546 = vmatprep.subr.mxu0 0.0
      %2547 = vmatpush1.msra.mxu0 %v55
      %2548 = vmatprep.subr.mxu0 0.0
      %2549 = vmatpush1.msra.mxu0 %v56
      %2550 = vmatprep.subr.mxu0 0.0
      %2551 = vmatpush1.msra.mxu0 %v57
      %2552 = vmatprep.subr.mxu0 0.0
      %2553 = vmatpush1.msra.mxu0 %v58
      %2554 = vmatprep.subr.mxu0 0.0
      %2555 = vmatpush1.msra.mxu0 %v59
      %2556 = vmatprep.subr.mxu0 0.0
      %2557 = vmatpush1.msra.mxu0 %v60
      %2558 = vmatprep.subr.mxu0 0.0
      %2559 = vmatpush1.msra.mxu0 %v61
      %2560 = vmatprep.subr.mxu0 0.0
      %2561 = vmatpush1.msra.mxu0 %v62
      %2562 = vmatprep.mubr.f32.mxu0 %v2261
      %2563 = vmatmul.mubr.f32.gmra.mrb[0].mxu0 %v2259
      %v2564 = vpop.f32.mrb[0].mxu0
      %v2565 = vadd.f32 0.0, %v2564
      %v2566 = vpop.f32.mrb[0].mxu0
      %2567 = vmatprep.mubr.f32.mxu0 %v2301
      %2568 = vmatmul.mubr.f32.gmra.mrb[0].mxu0 %v2299
      %v2569 = vpop.f32.mrb[0].mxu0
      %v2570 = vadd.f32 0.0, %v2569
      %v2571 = vpop.f32.mrb[0].mxu0
      %2572 = vmatprep.mubr.f32.mxu0 %v2341
      %2573 = vmatmul.mubr.f32.gmra.mrb[0].mxu0 %v2339
      %v2574 = vpop.f32.mrb[0].mxu0
      %v2575 = vadd.f32 0.0, %v2574
      %v2576 = vpop.f32.mrb[0].mxu0
      %2577 = vmatprep.mubr.f32.mxu0 %v2381
      %2578 = vmatmul.mubr.f32.gmra.mrb[0].mxu0 %v2379
      %v2579 = vpop.f32.mrb[0].mxu0
      %v2580 = vadd.f32 0.0, %v2579
      %v2581 = vpop.f32.mrb[0].mxu0
      %2582 = vmatprep.mubr.f32.mxu0 %v2419
      %2583 = vmatmul.mubr.f32.gmra.mrb[0].mxu0 %v2418
      %v2584 = vpop.f32.mrb[0].mxu0
      %v2585 = vadd.f32 0.0, %v2584
      %v2586 = vpop.f32.mrb[0].mxu0
      %2587 = vmatprep.mubr.f32.mxu0 %v2439
      %2588 = vmatmul.mubr.f32.gmra.mrb[0].mxu0 %v2438
      %v2589 = vpop.f32.mrb[0].mxu0
      %v2590 = vadd.f32 0.0, %v2589
      %v2591 = vpop.f32.mrb[0].mxu0
      %2592 = vmatprep.mubr.f32.mxu0 %v2459
      %2593 = vmatmul.mubr.f32.gmra.mrb[0].mxu0 %v2458
      %v2594 = vpop.f32.mrb[0].mxu0
      %v2595 = vadd.f32 0.0, %v2594
      %v2596 = vpop.f32.mrb[0].mxu0
      %2597 = vmatprep.mubr.f32.mxu0 %v2479
      %2598 = vmatmul.mubr.f32.gmra.mrb[0].mxu0 %v2478
      %v2599 = vpop.f32.mrb[0].mxu0
      %v2600 = vadd.f32 0.0, %v2599
      %v2601 = vpop.f32.mrb[0].mxu0
      %2602 = vdwg.mxu0
      %2603 = vmatprep.subr.mxu0 0.0
      %2604 = vmatpush1.msra.mxu0 %v63
      %2605 = vmatprep.subr.mxu0 0.0
      %2606 = vmatpush1.msra.mxu0 %v64
      %2607 = vmatprep.subr.mxu0 0.0
      %2608 = vmatpush1.msra.mxu0 %v65
      %2609 = vmatprep.subr.mxu0 0.0
      %2610 = vmatpush1.msra.mxu0 %v66
      %2611 = vmatprep.subr.mxu0 0.0
      %2612 = vmatpush1.msra.mxu0 %v67
      %2613 = vmatprep.subr.mxu0 0.0
      %2614 = vmatpush1.msra.mxu0 %v68
      %2615 = vmatprep.subr.mxu0 0.0
      %2616 = vmatpush1.msra.mxu0 %v69
      %2617 = vmatprep.subr.mxu0 0.0
      %2618 = vmatpush1.msra.mxu0 %v70
      %2619 = vmatprep.subr.mxu0 0.0
      %2620 = vmatpush1.msra.mxu0 %v71
      %2621 = vmatprep.subr.mxu0 0.0
      %2622 = vmatpush1.msra.mxu0 %v72
      %2623 = vmatprep.subr.mxu0 0.0
      %2624 = vmatpush1.msra.mxu0 %v73
      %2625 = vmatprep.subr.mxu0 0.0
      %2626 = vmatpush1.msra.mxu0 %v74
      %2627 = vmatprep.subr.mxu0 0.0
      %2628 = vmatpush1.msra.mxu0 %v75
      %2629 = vmatprep.subr.mxu0 0.0
      %2630 = vmatpush1.msra.mxu0 %v76
      %2631 = vmatprep.subr.mxu0 0.0
      %2632 = vmatpush1.msra.mxu0 %v77
      %2633 = vmatprep.subr.mxu0 0.0
      %2634 = vmatpush1.msra.mxu0 %v78
      %2635 = vmatprep.subr.mxu0 0.0
      %2636 = vmatpush1.msra.mxu0 %v79
      %2637 = vmatprep.subr.mxu0 0.0
      %2638 = vmatpush1.msra.mxu0 %v80
      %2639 = vmatprep.subr.mxu0 0.0
      %2640 = vmatpush1.msra.mxu0 %v81
      %2641 = vmatprep.subr.mxu0 0.0
      %2642 = vmatpush1.msra.mxu0 %v82
      %2643 = vmatprep.subr.mxu0 0.0
      %2644 = vmatpush1.msra.mxu0 %v83
      %2645 = vmatprep.subr.mxu0 0.0
      %2646 = vmatpush1.msra.mxu0 %v84
      %2647 = vmatprep.subr.mxu0 0.0
      %2648 = vmatpush1.msra.mxu0 %v85
      %2649 = vmatprep.subr.mxu0 0.0
      %2650 = vmatpush1.msra.mxu0 %v86
      %2651 = vmatprep.subr.mxu0 0.0
      %2652 = vmatpush1.msra.mxu0 %v87
      %2653 = vmatprep.subr.mxu0 0.0
      %2654 = vmatpush1.msra.mxu0 %v88
      %2655 = vmatprep.subr.mxu0 0.0
      %2656 = vmatpush1.msra.mxu0 %v89
      %2657 = vmatprep.subr.mxu0 0.0
      %2658 = vmatpush1.msra.mxu0 %v90
      %2659 = vmatprep.subr.mxu0 0.0
      %2660 = vmatpush1.msra.mxu0 %v91
      %2661 = vmatprep.subr.mxu0 0.0
      %2662 = vmatpush1.msra.mxu0 %v92
      %2663 = vmatprep.subr.mxu0 0.0
      %2664 = vmatpush1.msra.mxu0 %v93
      %2665 = vmatprep.subr.mxu0 0.0
      %2666 = vmatpush1.msra.mxu0 %v94
      %2667 = vmatprep.mubr.f32.mxu0 %v2265
      %2668 = vmatmul.mubr.f32.gmra.mrb[0].mxu0 %v2263
      %v2669 = vpop.f32.mrb[0].mxu0
      %v2670 = vadd.f32 %v2565, %v2669
      %v2671 = vpop.f32.mrb[0].mxu0
      %2672 = vmatprep.mubr.f32.mxu0 %v2305
      %2673 = vmatmul.mubr.f32.gmra.mrb[0].mxu0 %v2303
      %v2674 = vpop.f32.mrb[0].mxu0
      %v2675 = vadd.f32 %v2570, %v2674
      %v2676 = vpop.f32.mrb[0].mxu0
      %2677 = vmatprep.mubr.f32.mxu0 %v2345
      %2678 = vmatmul.mubr.f32.gmra.mrb[0].mxu0 %v2343
      %v2679 = vpop.f32.mrb[0].mxu0
      %v2680 = vadd.f32 %v2575, %v2679
      %v2681 = vpop.f32.mrb[0].mxu0
      %2682 = vmatprep.mubr.f32.mxu0 %v2385
      %2683 = vmatmul.mubr.f32.gmra.mrb[0].mxu0 %v2383
      %v2684 = vpop.f32.mrb[0].mxu0
      %v2685 = vadd.f32 %v2580, %v2684
      %v2686 = vpop.f32.mrb[0].mxu0
      %2687 = vmatprep.mubr.f32.mxu0 %v2421
      %2688 = vmatmul.mubr.f32.gmra.mrb[0].mxu0 %v2420
      %v2689 = vpop.f32.mrb[0].mxu0
      %v2690 = vadd.f32 %v2585, %v2689
      %v2691 = vpop.f32.mrb[0].mxu0
      %2692 = vmatprep.mubr.f32.mxu0 %v2441
      %2693 = vmatmul.mubr.f32.gmra.mrb[0].mxu0 %v2440
      %v2694 = vpop.f32.mrb[0].mxu0
      %v2695 = vadd.f32 %v2590, %v2694
      %v2696 = vpop.f32.mrb[0].mxu0
      %2697 = vmatprep.mubr.f32.mxu0 %v2461
      %2698 = vmatmul.mubr.f32.gmra.mrb[0].mxu0 %v2460
      %v2699 = vpop.f32.mrb[0].mxu0
      %v2700 = vadd.f32 %v2595, %v2699
      %v2701 = vpop.f32.mrb[0].mxu0
      %2702 = vmatprep.mubr.f32.mxu0 %v2481
      %2703 = vmatmul.mubr.f32.gmra.mrb[0].mxu0 %v2480
      %v2704 = vpop.f32.mrb[0].mxu0
      %v2705 = vadd.f32 %v2600, %v2704
      %v2706 = vpop.f32.mrb[0].mxu0
      %2707 = vdwg.mxu0
      %2708 = vmatprep.subr.mxu0 0.0
      %2709 = vmatpush1.msra.mxu0 %v95
      %2710 = vmatprep.subr.mxu0 0.0
      %2711 = vmatpush1.msra.mxu0 %v96
      %2712 = vmatprep.subr.mxu0 0.0
      %2713 = vmatpush1.msra.mxu0 %v97
      %2714 = vmatprep.subr.mxu0 0.0
      %2715 = vmatpush1.msra.mxu0 %v98
      %2716 = vmatprep.subr.mxu0 0.0
      %2717 = vmatpush1.msra.mxu0 %v99
      %2718 = vmatprep.subr.mxu0 0.0
      %2719 = vmatpush1.msra.mxu0 %v100
      %2720 = vmatprep.subr.mxu0 0.0
      %2721 = vmatpush1.msra.mxu0 %v101
      %2722 = vmatprep.subr.mxu0 0.0
      %2723 = vmatpush1.msra.mxu0 %v102
      %2724 = vmatprep.subr.mxu0 0.0
      %2725 = vmatpush1.msra.mxu0 %v103
      %2726 = vmatprep.subr.mxu0 0.0
      %2727 = vmatpush1.msra.mxu0 %v104
      %2728 = vmatprep.subr.mxu0 0.0
      %2729 = vmatpush1.msra.mxu0 %v105
      %2730 = vmatprep.subr.mxu0 0.0
      %2731 = vmatpush1.msra.mxu0 %v106
      %2732 = vmatprep.subr.mxu0 0.0
      %2733 = vmatpush1.msra.mxu0 %v107
      %2734 = vmatprep.subr.mxu0 0.0
      %2735 = vmatpush1.msra.mxu0 %v108
      %2736 = vmatprep.subr.mxu0 0.0
      %2737 = vmatpush1.msra.mxu0 %v109
      %2738 = vmatprep.subr.mxu0 0.0
      %2739 = vmatpush1.msra.mxu0 %v110
      %2740 = vmatprep.subr.mxu0 0.0
      %2741 = vmatpush1.msra.mxu0 %v111
      %2742 = vmatprep.subr.mxu0 0.0
      %2743 = vmatpush1.msra.mxu0 %v112
      %2744 = vmatprep.subr.mxu0 0.0
      %2745 = vmatpush1.msra.mxu0 %v113
      %2746 = vmatprep.subr.mxu0 0.0
      %2747 = vmatpush1.msra.mxu0 %v114
      %2748 = vmatprep.subr.mxu0 0.0
      %2749 = vmatpush1.msra.mxu0 %v115
      %2750 = vmatprep.subr.mxu0 0.0
      %2751 = vmatpush1.msra.mxu0 %v116
      %2752 = vmatprep.subr.mxu0 0.0
      %2753 = vmatpush1.msra.mxu0 %v117
      %2754 = vmatprep.subr.mxu0 0.0
      %2755 = vmatpush1.msra.mxu0 %v118
      %2756 = vmatprep.subr.mxu0 0.0
      %2757 = vmatpush1.msra.mxu0 %v119
      %2758 = vmatprep.subr.mxu0 0.0
      %2759 = vmatpush1.msra.mxu0 %v120
      %2760 = vmatprep.subr.mxu0 0.0
      %2761 = vmatpush1.msra.mxu0 %v121
      %2762 = vmatprep.subr.mxu0 0.0
      %2763 = vmatpush1.msra.mxu0 %v122
      %2764 = vmatprep.subr.mxu0 0.0
      %2765 = vmatpush1.msra.mxu0 %v123
      %2766 = vmatprep.subr.mxu0 0.0
      %2767 = vmatpush1.msra.mxu0 %v124
      %2768 = vmatprep.subr.mxu0 0.0
      %2769 = vmatpush1.msra.mxu0 %v125
      %2770 = vmatprep.subr.mxu0 0.0
      %2771 = vmatpush1.msra.mxu0 %v126
      %2772 = vmatprep.mubr.f32.mxu0 %v2269
      %2773 = vmatmul.mubr.f32.gmra.mrb[0].mxu0 %v2267
      %v2774 = vpop.f32.mrb[0].mxu0
      %v2775 = vadd.f32 %v2670, %v2774
      %v2776 = vpop.f32.mrb[0].mxu0
      %2777 = vmatprep.mubr.f32.mxu0 %v2309
      %2778 = vmatmul.mubr.f32.gmra.mrb[0].mxu0 %v2307
      %v2779 = vpop.f32.mrb[0].mxu0
      %v2780 = vadd.f32 %v2675, %v2779
      %v2781 = vpop.f32.mrb[0].mxu0
      %2782 = vmatprep.mubr.f32.mxu0 %v2349
      %2783 = vmatmul.mubr.f32.gmra.mrb[0].mxu0 %v2347
      %v2784 = vpop.f32.mrb[0].mxu0
      %v2785 = vadd.f32 %v2680, %v2784
      %v2786 = vpop.f32.mrb[0].mxu0
      %2787 = vmatprep.mubr.f32.mxu0 %v2389
      %2788 = vmatmul.mubr.f32.gmra.mrb[0].mxu0 %v2387
      %v2789 = vpop.f32.mrb[0].mxu0
      %v2790 = vadd.f32 %v2685, %v2789
      %v2791 = vpop.f32.mrb[0].mxu0
      %2792 = vmatprep.mubr.f32.mxu0 %v2423
      %2793 = vmatmul.mubr.f32.gmra.mrb[0].mxu0 %v2422
      %v2794 = vpop.f32.mrb[0].mxu0
      %v2795 = vadd.f32 %v2690, %v2794
      %v2796 = vpop.f32.mrb[0].mxu0
      %2797 = vmatprep.mubr.f32.mxu0 %v2443
      %2798 = vmatmul.mubr.f32.gmra.mrb[0].mxu0 %v2442
      %v2799 = vpop.f32.mrb[0].mxu0
      %v2800 = vadd.f32 %v2695, %v2799
      %v2801 = vpop.f32.mrb[0].mxu0
      %2802 = vmatprep.mubr.f32.mxu0 %v2463
      %2803 = vmatmul.mubr.f32.gmra.mrb[0].mxu0 %v2462
      %v2804 = vpop.f32.mrb[0].mxu0
      %v2805 = vadd.f32 %v2700, %v2804
      %v2806 = vpop.f32.mrb[0].mxu0
      %2807 = vmatprep.mubr.f32.mxu0 %v2483
      %2808 = vmatmul.mubr.f32.gmra.mrb[0].mxu0 %v2482
      %v2809 = vpop.f32.mrb[0].mxu0
      %v2810 = vadd.f32 %v2705, %v2809
      %v2811 = vpop.f32.mrb[0].mxu0
      %2812 = vdwg.mxu0
      %2813 = vmatprep.subr.mxu0 0.0
      %2814 = vmatpush1.msra.mxu0 %v127
      %2815 = vmatprep.subr.mxu0 0.0
      %2816 = vmatpush1.msra.mxu0 %v128
      %2817 = vmatprep.subr.mxu0 0.0
      %2818 = vmatpush1.msra.mxu0 %v129
      %2819 = vmatprep.subr.mxu0 0.0
      %2820 = vmatpush1.msra.mxu0 %v130
      %2821 = vmatprep.subr.mxu0 0.0
      %2822 = vmatpush1.msra.mxu0 %v131
      %2823 = vmatprep.subr.mxu0 0.0
      %2824 = vmatpush1.msra.mxu0 %v132
      %2825 = vmatprep.subr.mxu0 0.0
      %2826 = vmatpush1.msra.mxu0 %v133
      %2827 = vmatprep.subr.mxu0 0.0
      %2828 = vmatpush1.msra.mxu0 %v134
      %2829 = vmatprep.subr.mxu0 0.0
      %2830 = vmatpush1.msra.mxu0 %v135
      %2831 = vmatprep.subr.mxu0 0.0
      %2832 = vmatpush1.msra.mxu0 %v136
      %2833 = vmatprep.subr.mxu0 0.0
      %2834 = vmatpush1.msra.mxu0 %v137
      %2835 = vmatprep.subr.mxu0 0.0
      %2836 = vmatpush1.msra.mxu0 %v138
      %2837 = vmatprep.subr.mxu0 0.0
      %2838 = vmatpush1.msra.mxu0 %v139
      %2839 = vmatprep.subr.mxu0 0.0
      %2840 = vmatpush1.msra.mxu0 %v140
      %2841 = vmatprep.subr.mxu0 0.0
      %2842 = vmatpush1.msra.mxu0 %v141
      %2843 = vmatprep.subr.mxu0 0.0
      %2844 = vmatpush1.msra.mxu0 %v142
      %2845 = vmatprep.subr.mxu0 0.0
      %2846 = vmatpush1.msra.mxu0 %v143
      %2847 = vmatprep.subr.mxu0 0.0
      %2848 = vmatpush1.msra.mxu0 %v144
      %2849 = vmatprep.subr.mxu0 0.0
      %2850 = vmatpush1.msra.mxu0 %v145
      %2851 = vmatprep.subr.mxu0 0.0
      %2852 = vmatpush1.msra.mxu0 %v146
      %2853 = vmatprep.subr.mxu0 0.0
      %2854 = vmatpush1.msra.mxu0 %v147
      %2855 = vmatprep.subr.mxu0 0.0
      %2856 = vmatpush1.msra.mxu0 %v148
      %2857 = vmatprep.subr.mxu0 0.0
      %2858 = vmatpush1.msra.mxu0 %v149
      %2859 = vmatprep.subr.mxu0 0.0
      %2860 = vmatpush1.msra.mxu0 %v150
      %2861 = vmatprep.subr.mxu0 0.0
      %2862 = vmatpush1.msra.mxu0 %v151
      %2863 = vmatprep.subr.mxu0 0.0
      %2864 = vmatpush1.msra.mxu0 %v152
      %2865 = vmatprep.subr.mxu0 0.0
      %2866 = vmatpush1.msra.mxu0 %v153
      %2867 = vmatprep.subr.mxu0 0.0
      %2868 = vmatpush1.msra.mxu0 %v154
      %2869 = vmatprep.subr.mxu0 0.0
      %2870 = vmatpush1.msra.mxu0 %v155
      %2871 = vmatprep.subr.mxu0 0.0
      %2872 = vmatpush1.msra.mxu0 %v156
      %2873 = vmatprep.subr.mxu0 0.0
      %2874 = vmatpush1.msra.mxu0 %v157
      %2875 = vmatprep.subr.mxu0 0.0
      %2876 = vmatpush1.msra.mxu0 %v158
      %2877 = vmatprep.mubr.f32.mxu0 %v2273
      %2878 = vmatmul.mubr.f32.gmra.mrb[0].mxu0 %v2271
      %v2879 = vpop.f32.mrb[0].mxu0
      %v2880 = vadd.f32 %v2775, %v2879
      %v2881 = vpop.f32.mrb[0].mxu0
      %2882 = vmatprep.mubr.f32.mxu0 %v2313
      %2883 = vmatmul.mubr.f32.gmra.mrb[0].mxu0 %v2311
      %v2884 = vpop.f32.mrb[0].mxu0
      %v2885 = vadd.f32 %v2780, %v2884
      %v2886 = vpop.f32.mrb[0].mxu0
      %2887 = vmatprep.mubr.f32.mxu0 %v2353
      %2888 = vmatmul.mubr.f32.gmra.mrb[0].mxu0 %v2351
      %v2889 = vpop.f32.mrb[0].mxu0
      %v2890 = vadd.f32 %v2785, %v2889
      %v2891 = vpop.f32.mrb[0].mxu0
      %2892 = vmatprep.mubr.f32.mxu0 %v2393
      %2893 = vmatmul.mubr.f32.gmra.mrb[0].mxu0 %v2391
      %v2894 = vpop.f32.mrb[0].mxu0
      %v2895 = vadd.f32 %v2790, %v2894
      %v2896 = vpop.f32.mrb[0].mxu0
      %2897 = vmatprep.mubr.f32.mxu0 %v2425
      %2898 = vmatmul.mubr.f32.gmra.mrb[0].mxu0 %v2424
      %v2899 = vpop.f32.mrb[0].mxu0
      %v2900 = vadd.f32 %v2795, %v2899
      %v2901 = vpop.f32.mrb[0].mxu0
      %2902 = vmatprep.mubr.f32.mxu0 %v2445
      %2903 = vmatmul.mubr.f32.gmra.mrb[0].mxu0 %v2444
      %v2904 = vpop.f32.mrb[0].mxu0
      %v2905 = vadd.f32 %v2800, %v2904
      %v2906 = vpop.f32.mrb[0].mxu0
      %2907 = vmatprep.mubr.f32.mxu0 %v2465
      %2908 = vmatmul.mubr.f32.gmra.mrb[0].mxu0 %v2464
      %v2909 = vpop.f32.mrb[0].mxu0
      %v2910 = vadd.f32 %v2805, %v2909
      %v2911 = vpop.f32.mrb[0].mxu0
      %2912 = vmatprep.mubr.f32.mxu0 %v2485
      %2913 = vmatmul.mubr.f32.gmra.mrb[0].mxu0 %v2484
      %v2914 = vpop.f32.mrb[0].mxu0
      %v2915 = vadd.f32 %v2810, %v2914
      %v2916 = vpop.f32.mrb[0].mxu0
      %2917 = vdwg.mxu0
      %2918 = vmatprep.subr.mxu0 0.0
      %2919 = vmatpush1.msra.mxu0 %v159
      %2920 = vmatprep.subr.mxu0 0.0
      %2921 = vmatpush1.msra.mxu0 %v160
      %2922 = vmatprep.subr.mxu0 0.0
      %2923 = vmatpush1.msra.mxu0 %v161
      %2924 = vmatprep.subr.mxu0 0.0
      %2925 = vmatpush1.msra.mxu0 %v162
      %2926 = vmatprep.subr.mxu0 0.0
      %2927 = vmatpush1.msra.mxu0 %v163
      %2928 = vmatprep.subr.mxu0 0.0
      %2929 = vmatpush1.msra.mxu0 %v164
      %2930 = vmatprep.subr.mxu0 0.0
      %2931 = vmatpush1.msra.mxu0 %v165
      %2932 = vmatprep.subr.mxu0 0.0
      %2933 = vmatpush1.msra.mxu0 %v166
      %2934 = vmatprep.subr.mxu0 0.0
      %2935 = vmatpush1.msra.mxu0 %v167
      %2936 = vmatprep.subr.mxu0 0.0
      %2937 = vmatpush1.msra.mxu0 %v168
      %2938 = vmatprep.subr.mxu0 0.0
      %2939 = vmatpush1.msra.mxu0 %v169
      %2940 = vmatprep.subr.mxu0 0.0
      %2941 = vmatpush1.msra.mxu0 %v170
      %2942 = vmatprep.subr.mxu0 0.0
      %2943 = vmatpush1.msra.mxu0 %v171
      %2944 = vmatprep.subr.mxu0 0.0
      %2945 = vmatpush1.msra.mxu0 %v172
      %2946 = vmatprep.subr.mxu0 0.0
      %2947 = vmatpush1.msra.mxu0 %v173
      %2948 = vmatprep.subr.mxu0 0.0
      %2949 = vmatpush1.msra.mxu0 %v174
      %2950 = vmatprep.subr.mxu0 0.0
      %2951 = vmatpush1.msra.mxu0 %v175
      %2952 = vmatprep.subr.mxu0 0.0
      %2953 = vmatpush1.msra.mxu0 %v176
      %2954 = vmatprep.subr.mxu0 0.0
      %2955 = vmatpush1.msra.mxu0 %v177
      %2956 = vmatprep.subr.mxu0 0.0
      %2957 = vmatpush1.msra.mxu0 %v178
      %2958 = vmatprep.subr.mxu0 0.0
      %2959 = vmatpush1.msra.mxu0 %v179
      %2960 = vmatprep.subr.mxu0 0.0
      %2961 = vmatpush1.msra.mxu0 %v180
      %2962 = vmatprep.subr.mxu0 0.0
      %2963 = vmatpush1.msra.mxu0 %v181
      %2964 = vmatprep.subr.mxu0 0.0
      %2965 = vmatpush1.msra.mxu0 %v182
      %2966 = vmatprep.subr.mxu0 0.0
      %2967 = vmatpush1.msra.mxu0 %v183
      %2968 = vmatprep.subr.mxu0 0.0
      %2969 = vmatpush1.msra.mxu0 %v184
      %2970 = vmatprep.subr.mxu0 0.0
      %2971 = vmatpush1.msra.mxu0 %v185
      %2972 = vmatprep.subr.mxu0 0.0
      %2973 = vmatpush1.msra.mxu0 %v186
      %2974 = vmatprep.subr.mxu0 0.0
      %2975 = vmatpush1.msra.mxu0 %v187
      %2976 = vmatprep.subr.mxu0 0.0
      %2977 = vmatpush1.msra.mxu0 %v188
      %2978 = vmatprep.subr.mxu0 0.0
      %2979 = vmatpush1.msra.mxu0 %v189
      %2980 = vmatprep.subr.mxu0 0.0
      %2981 = vmatpush1.msra.mxu0 %v190
      %2982 = vmatprep.mubr.f32.mxu0 %v2277
      %2983 = vmatmul.mubr.f32.gmra.mrb[0].mxu0 %v2275
      %v2984 = vpop.f32.mrb[0].mxu0
      %v2985 = vadd.f32 %v2880, %v2984
      %v2986 = vpop.f32.mrb[0].mxu0
      %2987 = vmatprep.mubr.f32.mxu0 %v2317
      %2988 = vmatmul.mubr.f32.gmra.mrb[0].mxu0 %v2315
      %v2989 = vpop.f32.mrb[0].mxu0
      %v2990 = vadd.f32 %v2885, %v2989
      %v2991 = vpop.f32.mrb[0].mxu0
      %2992 = vmatprep.mubr.f32.mxu0 %v2357
      %2993 = vmatmul.mubr.f32.gmra.mrb[0].mxu0 %v2355
      %v2994 = vpop.f32.mrb[0].mxu0
      %v2995 = vadd.f32 %v2890, %v2994
      %v2996 = vpop.f32.mrb[0].mxu0
      %2997 = vmatprep.mubr.f32.mxu0 %v2397
      %2998 = vmatmul.mubr.f32.gmra.mrb[0].mxu0 %v2395
      %v2999 = vpop.f32.mrb[0].mxu0
      %v3000 = vadd.f32 %v2895, %v2999
      %v3001 = vpop.f32.mrb[0].mxu0
      %3002 = vmatprep.mubr.f32.mxu0 %v2427
      %3003 = vmatmul.mubr.f32.gmra.mrb[0].mxu0 %v2426
      %v3004 = vpop.f32.mrb[0].mxu0
      %v3005 = vadd.f32 %v2900, %v3004
      %v3006 = vpop.f32.mrb[0].mxu0
      %3007 = vmatprep.mubr.f32.mxu0 %v2447
      %3008 = vmatmul.mubr.f32.gmra.mrb[0].mxu0 %v2446
      %v3009 = vpop.f32.mrb[0].mxu0
      %v3010 = vadd.f32 %v2905, %v3009
      %v3011 = vpop.f32.mrb[0].mxu0
      %3012 = vmatprep.mubr.f32.mxu0 %v2467
      %3013 = vmatmul.mubr.f32.gmra.mrb[0].mxu0 %v2466
      %v3014 = vpop.f32.mrb[0].mxu0
      %v3015 = vadd.f32 %v2910, %v3014
      %v3016 = vpop.f32.mrb[0].mxu0
      %3017 = vmatprep.mubr.f32.mxu0 %v2487
      %3018 = vmatmul.mubr.f32.gmra.mrb[0].mxu0 %v2486
      %v3019 = vpop.f32.mrb[0].mxu0
      %v3020 = vadd.f32 %v2915, %v3019
      %v3021 = vpop.f32.mrb[0].mxu0
      %3022 = vdwg.mxu0
      %3023 = vmatprep.subr.mxu0 0.0
      %3024 = vmatpush1.msra.mxu0 %v191
      %3025 = vmatprep.subr.mxu0 0.0
      %3026 = vmatpush1.msra.mxu0 %v192
      %3027 = vmatprep.subr.mxu0 0.0
      %3028 = vmatpush1.msra.mxu0 %v193
      %3029 = vmatprep.subr.mxu0 0.0
      %3030 = vmatpush1.msra.mxu0 %v194
      %3031 = vmatprep.subr.mxu0 0.0
      %3032 = vmatpush1.msra.mxu0 %v195
      %3033 = vmatprep.subr.mxu0 0.0
      %3034 = vmatpush1.msra.mxu0 %v196
      %3035 = vmatprep.subr.mxu0 0.0
      %3036 = vmatpush1.msra.mxu0 %v197
      %3037 = vmatprep.subr.mxu0 0.0
      %3038 = vmatpush1.msra.mxu0 %v198
      %3039 = vmatprep.subr.mxu0 0.0
      %3040 = vmatpush1.msra.mxu0 %v199
      %3041 = vmatprep.subr.mxu0 0.0
      %3042 = vmatpush1.msra.mxu0 %v200
      %3043 = vmatprep.subr.mxu0 0.0
      %3044 = vmatpush1.msra.mxu0 %v201
      %3045 = vmatprep.subr.mxu0 0.0
      %3046 = vmatpush1.msra.mxu0 %v202
      %3047 = vmatprep.subr.mxu0 0.0
      %3048 = vmatpush1.msra.mxu0 %v203
      %3049 = vmatprep.subr.mxu0 0.0
      %3050 = vmatpush1.msra.mxu0 %v204
      %3051 = vmatprep.subr.mxu0 0.0
      %3052 = vmatpush1.msra.mxu0 %v205
      %3053 = vmatprep.subr.mxu0 0.0
      %3054 = vmatpush1.msra.mxu0 %v206
      %3055 = vmatprep.subr.mxu0 0.0
      %3056 = vmatpush1.msra.mxu0 %v207
      %3057 = vmatprep.subr.mxu0 0.0
      %3058 = vmatpush1.msra.mxu0 %v208
      %3059 = vmatprep.subr.mxu0 0.0
      %3060 = vmatpush1.msra.mxu0 %v209
      %3061 = vmatprep.subr.mxu0 0.0
      %3062 = vmatpush1.msra.mxu0 %v210
      %3063 = vmatprep.subr.mxu0 0.0
      %3064 = vmatpush1.msra.mxu0 %v211
      %3065 = vmatprep.subr.mxu0 0.0
      %3066 = vmatpush1.msra.mxu0 %v212
      %3067 = vmatprep.subr.mxu0 0.0
      %3068 = vmatpush1.msra.mxu0 %v213
      %3069 = vmatprep.subr.mxu0 0.0
      %3070 = vmatpush1.msra.mxu0 %v214
      %3071 = vmatprep.subr.mxu0 0.0
      %3072 = vmatpush1.msra.mxu0 %v215
      %3073 = vmatprep.subr.mxu0 0.0
      %3074 = vmatpush1.msra.mxu0 %v216
      %3075 = vmatprep.subr.mxu0 0.0
      %3076 = vmatpush1.msra.mxu0 %v217
      %3077 = vmatprep.subr.mxu0 0.0
      %3078 = vmatpush1.msra.mxu0 %v218
      %3079 = vmatprep.subr.mxu0 0.0
      %3080 = vmatpush1.msra.mxu0 %v219
      %3081 = vmatprep.subr.mxu0 0.0
      %3082 = vmatpush1.msra.mxu0 %v220
      %3083 = vmatprep.subr.mxu0 0.0
      %3084 = vmatpush1.msra.mxu0 %v221
      %3085 = vmatprep.subr.mxu0 0.0
      %3086 = vmatpush1.msra.mxu0 %v222
      %3087 = vmatprep.mubr.f32.mxu0 %v2281
      %3088 = vmatmul.mubr.f32.gmra.mrb[0].mxu0 %v2279
      %v3089 = vpop.f32.mrb[0].mxu0
      %v3090 = vadd.f32 %v2985, %v3089
      %v3091 = vpop.f32.mrb[0].mxu0
      %3092 = vmatprep.mubr.f32.mxu0 %v2321
      %3093 = vmatmul.mubr.f32.gmra.mrb[0].mxu0 %v2319
      %v3094 = vpop.f32.mrb[0].mxu0
      %v3095 = vadd.f32 %v2990, %v3094
      %v3096 = vpop.f32.mrb[0].mxu0
      %3097 = vmatprep.mubr.f32.mxu0 %v2361
      %3098 = vmatmul.mubr.f32.gmra.mrb[0].mxu0 %v2359
      %v3099 = vpop.f32.mrb[0].mxu0
      %v3100 = vadd.f32 %v2995, %v3099
      %v3101 = vpop.f32.mrb[0].mxu0
      %3102 = vmatprep.mubr.f32.mxu0 %v2401
      %3103 = vmatmul.mubr.f32.gmra.mrb[0].mxu0 %v2399
      %v3104 = vpop.f32.mrb[0].mxu0
      %v3105 = vadd.f32 %v3000, %v3104
      %v3106 = vpop.f32.mrb[0].mxu0
      %3107 = vmatprep.mubr.f32.mxu0 %v2429
      %3108 = vmatmul.mubr.f32.gmra.mrb[0].mxu0 %v2428
      %v3109 = vpop.f32.mrb[0].mxu0
      %v3110 = vadd.f32 %v3005, %v3109
      %v3111 = vpop.f32.mrb[0].mxu0
      %3112 = vmatprep.mubr.f32.mxu0 %v2449
      %3113 = vmatmul.mubr.f32.gmra.mrb[0].mxu0 %v2448
      %v3114 = vpop.f32.mrb[0].mxu0
      %v3115 = vadd.f32 %v3010, %v3114
      %v3116 = vpop.f32.mrb[0].mxu0
      %3117 = vmatprep.mubr.f32.mxu0 %v2469
      %3118 = vmatmul.mubr.f32.gmra.mrb[0].mxu0 %v2468
      %v3119 = vpop.f32.mrb[0].mxu0
      %v3120 = vadd.f32 %v3015, %v3119
      %v3121 = vpop.f32.mrb[0].mxu0
      %3122 = vmatprep.mubr.f32.mxu0 %v2489
      %3123 = vmatmul.mubr.f32.gmra.mrb[0].mxu0 %v2488
      %v3124 = vpop.f32.mrb[0].mxu0
      %v3125 = vadd.f32 %v3020, %v3124
      %v3126 = vpop.f32.mrb[0].mxu0
      %3127 = vdwg.mxu0
      %3128 = vmatprep.subr.mxu0 0.0
      %3129 = vmatpush1.msra.mxu0 %v223
      %3130 = vmatprep.subr.mxu0 0.0
      %3131 = vmatpush1.msra.mxu0 %v224
      %3132 = vmatprep.subr.mxu0 0.0
      %3133 = vmatpush1.msra.mxu0 %v225
      %3134 = vmatprep.subr.mxu0 0.0
      %3135 = vmatpush1.msra.mxu0 %v226
      %3136 = vmatprep.subr.mxu0 0.0
      %3137 = vmatpush1.msra.mxu0 %v227
      %3138 = vmatprep.subr.mxu0 0.0
      %3139 = vmatpush1.msra.mxu0 %v228
      %3140 = vmatprep.subr.mxu0 0.0
      %3141 = vmatpush1.msra.mxu0 %v229
      %3142 = vmatprep.subr.mxu0 0.0
      %3143 = vmatpush1.msra.mxu0 %v230
      %3144 = vmatprep.subr.mxu0 0.0
      %3145 = vmatpush1.msra.mxu0 %v231
      %3146 = vmatprep.subr.mxu0 0.0
      %3147 = vmatpush1.msra.mxu0 %v232
      %3148 = vmatprep.subr.mxu0 0.0
      %3149 = vmatpush1.msra.mxu0 %v233
      %3150 = vmatprep.subr.mxu0 0.0
      %3151 = vmatpush1.msra.mxu0 %v234
      %3152 = vmatprep.subr.mxu0 0.0
      %3153 = vmatpush1.msra.mxu0 %v235
      %3154 = vmatprep.subr.mxu0 0.0
      %3155 = vmatpush1.msra.mxu0 %v236
      %3156 = vmatprep.subr.mxu0 0.0
      %3157 = vmatpush1.msra.mxu0 %v237
      %3158 = vmatprep.subr.mxu0 0.0
      %3159 = vmatpush1.msra.mxu0 %v238
      %3160 = vmatprep.subr.mxu0 0.0
      %3161 = vmatpush1.msra.mxu0 %v239
      %3162 = vmatprep.subr.mxu0 0.0
      %3163 = vmatpush1.msra.mxu0 %v240
      %3164 = vmatprep.subr.mxu0 0.0
      %3165 = vmatpush1.msra.mxu0 %v241
      %3166 = vmatprep.subr.mxu0 0.0
      %3167 = vmatpush1.msra.mxu0 %v242
      %3168 = vmatprep.subr.mxu0 0.0
      %3169 = vmatpush1.msra.mxu0 %v243
      %3170 = vmatprep.subr.mxu0 0.0
      %3171 = vmatpush1.msra.mxu0 %v244
      %3172 = vmatprep.subr.mxu0 0.0
      %3173 = vmatpush1.msra.mxu0 %v245
      %3174 = vmatprep.subr.mxu0 0.0
      %3175 = vmatpush1.msra.mxu0 %v246
      %3176 = vmatprep.subr.mxu0 0.0
      %3177 = vmatpush1.msra.mxu0 %v247
      %3178 = vmatprep.subr.mxu0 0.0
      %3179 = vmatpush1.msra.mxu0 %v248
      %3180 = vmatprep.subr.mxu0 0.0
      %3181 = vmatpush1.msra.mxu0 %v249
      %3182 = vmatprep.subr.mxu0 0.0
      %3183 = vmatpush1.msra.mxu0 %v250
      %3184 = vmatprep.subr.mxu0 0.0
      %3185 = vmatpush1.msra.mxu0 %v251
      %3186 = vmatprep.subr.mxu0 0.0
      %3187 = vmatpush1.msra.mxu0 %v252
      %3188 = vmatprep.subr.mxu0 0.0
      %3189 = vmatpush1.msra.mxu0 %v253
      %3190 = vmatprep.subr.mxu0 0.0
      %3191 = vmatpush1.msra.mxu0 %v254
      %3192 = vmatprep.mubr.f32.mxu0 %v2285
      %3193 = vmatmul.mubr.f32.gmra.mrb[0].mxu0 %v2283
      %v3194 = vpop.f32.mrb[0].mxu0
      %v3195 = vadd.f32 %v3090, %v3194
      %v3196 = vpop.f32.mrb[0].mxu0
      %3197 = vmatprep.mubr.f32.mxu0 %v2325
      %3198 = vmatmul.mubr.f32.gmra.mrb[0].mxu0 %v2323
      %v3199 = vpop.f32.mrb[0].mxu0
      %v3200 = vadd.f32 %v3095, %v3199
      %v3201 = vpop.f32.mrb[0].mxu0
      %3202 = vmatprep.mubr.f32.mxu0 %v2365
      %3203 = vmatmul.mubr.f32.gmra.mrb[0].mxu0 %v2363
      %v3204 = vpop.f32.mrb[0].mxu0
      %v3205 = vadd.f32 %v3100, %v3204
      %v3206 = vpop.f32.mrb[0].mxu0
      %3207 = vmatprep.mubr.f32.mxu0 %v2405
      %3208 = vmatmul.mubr.f32.gmra.mrb[0].mxu0 %v2403
      %v3209 = vpop.f32.mrb[0].mxu0
      %v3210 = vadd.f32 %v3105, %v3209
      %v3211 = vpop.f32.mrb[0].mxu0
      %3212 = vmatprep.mubr.f32.mxu0 %v2431
      %3213 = vmatmul.mubr.f32.gmra.mrb[0].mxu0 %v2430
      %v3214 = vpop.f32.mrb[0].mxu0
      %v3215 = vadd.f32 %v3110, %v3214
      %v3216 = vpop.f32.mrb[0].mxu0
      %3217 = vmatprep.mubr.f32.mxu0 %v2451
      %3218 = vmatmul.mubr.f32.gmra.mrb[0].mxu0 %v2450
      %v3219 = vpop.f32.mrb[0].mxu0
      %v3220 = vadd.f32 %v3115, %v3219
      %v3221 = vpop.f32.mrb[0].mxu0
      %3222 = vmatprep.mubr.f32.mxu0 %v2471
      %3223 = vmatmul.mubr.f32.gmra.mrb[0].mxu0 %v2470
      %v3224 = vpop.f32.mrb[0].mxu0
      %v3225 = vadd.f32 %v3120, %v3224
      %v3226 = vpop.f32.mrb[0].mxu0
      %3227 = vmatprep.mubr.f32.mxu0 %v2491
      %3228 = vmatmul.mubr.f32.gmra.mrb[0].mxu0 %v2490
      %v3229 = vpop.f32.mrb[0].mxu0
      %v3230 = vadd.f32 %v3125, %v3229
      %v3231 = vpop.f32.mrb[0].mxu0
      %3232 = vdwg.mxu0
      %3233 = vmatprep.subr.mxu0 0.0
      %3234 = vmatpush1.msra.mxu0 %v255
      %3235 = vmatprep.subr.mxu0 0.0
      %3236 = vmatpush1.msra.mxu0 %v256
      %3237 = vmatprep.subr.mxu0 0.0
      %3238 = vmatpush1.msra.mxu0 %v257
      %3239 = vmatprep.subr.mxu0 0.0
      %3240 = vmatpush1.msra.mxu0 %v258
      %3241 = vmatprep.subr.mxu0 0.0
      %3242 = vmatpush1.msra.mxu0 %v259
      %3243 = vmatprep.subr.mxu0 0.0
      %3244 = vmatpush1.msra.mxu0 %v260
      %3245 = vmatprep.subr.mxu0 0.0
      %3246 = vmatpush1.msra.mxu0 %v261
      %3247 = vmatprep.subr.mxu0 0.0
      %3248 = vmatpush1.msra.mxu0 %v262
      %3249 = vmatprep.subr.mxu0 0.0
      %3250 = vmatpush1.msra.mxu0 %v263
      %3251 = vmatprep.subr.mxu0 0.0
      %3252 = vmatpush1.msra.mxu0 %v264
      %3253 = vmatprep.subr.mxu0 0.0
      %3254 = vmatpush1.msra.mxu0 %v265
      %3255 = vmatprep.subr.mxu0 0.0
      %3256 = vmatpush1.msra.mxu0 %v266
      %3257 = vmatprep.subr.mxu0 0.0
      %3258 = vmatpush1.msra.mxu0 %v267
      %3259 = vmatprep.subr.mxu0 0.0
      %3260 = vmatpush1.msra.mxu0 %v268
      %3261 = vmatprep.subr.mxu0 0.0
      %3262 = vmatpush1.msra.mxu0 %v269
      %3263 = vmatprep.subr.mxu0 0.0
      %3264 = vmatpush1.msra.mxu0 %v270
      %3265 = vmatprep.subr.mxu0 0.0
      %3266 = vmatpush1.msra.mxu0 %v271
      %3267 = vmatprep.subr.mxu0 0.0
      %3268 = vmatpush1.msra.mxu0 %v272
      %3269 = vmatprep.subr.mxu0 0.0
      %3270 = vmatpush1.msra.mxu0 %v273
      %3271 = vmatprep.subr.mxu0 0.0
      %3272 = vmatpush1.msra.mxu0 %v274
      %3273 = vmatprep.subr.mxu0 0.0
      %3274 = vmatpush1.msra.mxu0 %v275
      %3275 = vmatprep.subr.mxu0 0.0
      %3276 = vmatpush1.msra.mxu0 %v276
      %3277 = vmatprep.subr.mxu0 0.0
      %3278 = vmatpush1.msra.mxu0 %v277
      %3279 = vmatprep.subr.mxu0 0.0
      %3280 = vmatpush1.msra.mxu0 %v278
      %3281 = vmatprep.subr.mxu0 0.0
      %3282 = vmatpush1.msra.mxu0 %v279
      %3283 = vmatprep.subr.mxu0 0.0
      %3284 = vmatpush1.msra.mxu0 %v280
      %3285 = vmatprep.subr.mxu0 0.0
      %3286 = vmatpush1.msra.mxu0 %v281
      %3287 = vmatprep.subr.mxu0 0.0
      %3288 = vmatpush1.msra.mxu0 %v282
      %3289 = vmatprep.subr.mxu0 0.0
      %3290 = vmatpush1.msra.mxu0 %v283
      %3291 = vmatprep.subr.mxu0 0.0
      %3292 = vmatpush1.msra.mxu0 %v284
      %3293 = vmatprep.subr.mxu0 0.0
      %3294 = vmatpush1.msra.mxu0 %v285
      %3295 = vmatprep.subr.mxu0 0.0
      %3296 = vmatpush1.msra.mxu0 %v286
      %3297 = vmatprep.mubr.f32.mxu0 %v2289
      %3298 = vmatmul.mubr.f32.gmra.mrb[0].mxu0 %v2287
      %v3299 = vpop.f32.mrb[0].mxu0
      %v3300 = vadd.f32 %v3195, %v3299
      %v3301 = vpop.f32.mrb[0].mxu0
      %3302 = vmatprep.mubr.f32.mxu0 %v2329
      %3303 = vmatmul.mubr.f32.gmra.mrb[0].mxu0 %v2327
      %v3304 = vpop.f32.mrb[0].mxu0
      %v3305 = vadd.f32 %v3200, %v3304
      %v3306 = vpop.f32.mrb[0].mxu0
      %3307 = vmatprep.mubr.f32.mxu0 %v2369
      %3308 = vmatmul.mubr.f32.gmra.mrb[0].mxu0 %v2367
      %v3309 = vpop.f32.mrb[0].mxu0
      %v3310 = vadd.f32 %v3205, %v3309
      %v3311 = vpop.f32.mrb[0].mxu0
      %3312 = vmatprep.mubr.f32.mxu0 %v2409
      %3313 = vmatmul.mubr.f32.gmra.mrb[0].mxu0 %v2407
      %v3314 = vpop.f32.mrb[0].mxu0
      %v3315 = vadd.f32 %v3210, %v3314
      %v3316 = vpop.f32.mrb[0].mxu0
      %3317 = vmatprep.mubr.f32.mxu0 %v2433
      %3318 = vmatmul.mubr.f32.gmra.mrb[0].mxu0 %v2432
      %v3319 = vpop.f32.mrb[0].mxu0
      %v3320 = vadd.f32 %v3215, %v3319
      %v3321 = vpop.f32.mrb[0].mxu0
      %3322 = vmatprep.mubr.f32.mxu0 %v2453
      %3323 = vmatmul.mubr.f32.gmra.mrb[0].mxu0 %v2452
      %v3324 = vpop.f32.mrb[0].mxu0
      %v3325 = vadd.f32 %v3220, %v3324
      %v3326 = vpop.f32.mrb[0].mxu0
      %3327 = vmatprep.mubr.f32.mxu0 %v2473
      %3328 = vmatmul.mubr.f32.gmra.mrb[0].mxu0 %v2472
      %v3329 = vpop.f32.mrb[0].mxu0
      %v3330 = vadd.f32 %v3225, %v3329
      %v3331 = vpop.f32.mrb[0].mxu0
      %3332 = vmatprep.mubr.f32.mxu0 %v2493
      %3333 = vmatmul.mubr.f32.gmra.mrb[0].mxu0 %v2492
      %v3334 = vpop.f32.mrb[0].mxu0
      %v3335 = vadd.f32 %v3230, %v3334
      %v3336 = vpop.f32.mrb[0].mxu0
      %3337 = vdwg.mxu0
      %3338 = vmatprep.subr.mxu0 0.0
      %3339 = vmatpush1.msra.mxu0 %v287
      %3340 = vmatprep.subr.mxu0 0.0
      %3341 = vmatpush1.msra.mxu0 %v288
      %3342 = vmatprep.subr.mxu0 0.0
      %3343 = vmatpush1.msra.mxu0 %v289
      %3344 = vmatprep.subr.mxu0 0.0
      %3345 = vmatpush1.msra.mxu0 %v290
      %3346 = vmatprep.subr.mxu0 0.0
      %3347 = vmatpush1.msra.mxu0 %v291
      %3348 = vmatprep.subr.mxu0 0.0
      %3349 = vmatpush1.msra.mxu0 %v292
      %3350 = vmatprep.subr.mxu0 0.0
      %3351 = vmatpush1.msra.mxu0 %v293
      %3352 = vmatprep.subr.mxu0 0.0
      %3353 = vmatpush1.msra.mxu0 %v294
      %3354 = vmatprep.subr.mxu0 0.0
      %3355 = vmatpush1.msra.mxu0 %v295
      %3356 = vmatprep.subr.mxu0 0.0
      %3357 = vmatpush1.msra.mxu0 %v296
      %3358 = vmatprep.subr.mxu0 0.0
      %3359 = vmatpush1.msra.mxu0 %v297
      %3360 = vmatprep.subr.mxu0 0.0
      %3361 = vmatpush1.msra.mxu0 %v298
      %3362 = vmatprep.subr.mxu0 0.0
      %3363 = vmatpush1.msra.mxu0 %v299
      %3364 = vmatprep.subr.mxu0 0.0
      %3365 = vmatpush1.msra.mxu0 %v300
      %3366 = vmatprep.subr.mxu0 0.0
      %3367 = vmatpush1.msra.mxu0 %v301
      %3368 = vmatprep.subr.mxu0 0.0
      %3369 = vmatpush1.msra.mxu0 %v302
      %3370 = vmatprep.subr.mxu0 0.0
      %3371 = vmatpush1.msra.mxu0 %v303
      %3372 = vmatprep.subr.mxu0 0.0
      %3373 = vmatpush1.msra.mxu0 %v304
      %3374 = vmatprep.subr.mxu0 0.0
      %3375 = vmatpush1.msra.mxu0 %v305
      %3376 = vmatprep.subr.mxu0 0.0
      %3377 = vmatpush1.msra.mxu0 %v306
      %3378 = vmatprep.subr.mxu0 0.0
      %3379 = vmatpush1.msra.mxu0 %v307
      %3380 = vmatprep.subr.mxu0 0.0
      %3381 = vmatpush1.msra.mxu0 %v308
      %3382 = vmatprep.subr.mxu0 0.0
      %3383 = vmatpush1.msra.mxu0 %v309
      %3384 = vmatprep.subr.mxu0 0.0
      %3385 = vmatpush1.msra.mxu0 %v310
      %3386 = vmatprep.subr.mxu0 0.0
      %3387 = vmatpush1.msra.mxu0 %v311
      %3388 = vmatprep.subr.mxu0 0.0
      %3389 = vmatpush1.msra.mxu0 %v312
      %3390 = vmatprep.subr.mxu0 0.0
      %3391 = vmatpush1.msra.mxu0 %v313
      %3392 = vmatprep.subr.mxu0 0.0
      %3393 = vmatpush1.msra.mxu0 %v314
      %3394 = vmatprep.subr.mxu0 0.0
      %3395 = vmatpush1.msra.mxu0 %v315
      %3396 = vmatprep.subr.mxu0 0.0
      %3397 = vmatpush1.msra.mxu0 %v316
      %3398 = vmatprep.subr.mxu0 0.0
      %3399 = vmatpush1.msra.mxu0 %v317
      %3400 = vmatprep.subr.mxu0 0.0
      %3401 = vmatpush1.msra.mxu0 %v318
      %3402 = vmatprep.mubr.f32.mxu0 %v2293
      %3403 = vmatmul.mubr.f32.gmra.mrb[0].mxu0 %v2291
      %v3404 = vpop.f32.mrb[0].mxu0
      %v3405 = vadd.f32 %v3300, %v3404
      %v3406 = vpop.f32.mrb[0].mxu0
      %3407 = vmatprep.mubr.f32.mxu0 %v2333
      %3408 = vmatmul.mubr.f32.gmra.mrb[0].mxu0 %v2331
      %v3409 = vpop.f32.mrb[0].mxu0
      %v3410 = vadd.f32 %v3305, %v3409
      %v3411 = vpop.f32.mrb[0].mxu0
      %3412 = vmatprep.mubr.f32.mxu0 %v2373
      %3413 = vmatmul.mubr.f32.gmra.mrb[0].mxu0 %v2371
      %v3414 = vpop.f32.mrb[0].mxu0
      %v3415 = vadd.f32 %v3310, %v3414
      %v3416 = vpop.f32.mrb[0].mxu0
      %3417 = vmatprep.mubr.f32.mxu0 %v2413
      %3418 = vmatmul.mubr.f32.gmra.mrb[0].mxu0 %v2411
      %v3419 = vpop.f32.mrb[0].mxu0
      %v3420 = vadd.f32 %v3315, %v3419
      %v3421 = vpop.f32.mrb[0].mxu0
      %3422 = vmatprep.mubr.f32.mxu0 %v2435
      %3423 = vmatmul.mubr.f32.gmra.mrb[0].mxu0 %v2434
      %v3424 = vpop.f32.mrb[0].mxu0
      %v3425 = vadd.f32 %v3320, %v3424
      %v3426 = vpop.f32.mrb[0].mxu0
      %3427 = vmatprep.mubr.f32.mxu0 %v2455
      %3428 = vmatmul.mubr.f32.gmra.mrb[0].mxu0 %v2454
      %v3429 = vpop.f32.mrb[0].mxu0
      %v3430 = vadd.f32 %v3325, %v3429
      %v3431 = vpop.f32.mrb[0].mxu0
      %3432 = vmatprep.mubr.f32.mxu0 %v2475
      %3433 = vmatmul.mubr.f32.gmra.mrb[0].mxu0 %v2474
      %v3434 = vpop.f32.mrb[0].mxu0
      %v3435 = vadd.f32 %v3330, %v3434
      %v3436 = vpop.f32.mrb[0].mxu0
      %3437 = vmatprep.mubr.f32.mxu0 %v2495
      %3438 = vmatmul.mubr.f32.gmra.mrb[0].mxu0 %v2494
      %v3439 = vpop.f32.mrb[0].mxu0
      %v3440 = vadd.f32 %v3335, %v3439
      %v3441 = vpop.f32.mrb[0].mxu0
      %3442 = vdwg.mxu0
      %3443 = vmatprep.subr.mxu0 0.0
      %3444 = vmatpush1.msra.mxu0 %v319
      %3445 = vmatprep.subr.mxu0 0.0
      %3446 = vmatpush1.msra.mxu0 %v320
      %3447 = vmatprep.subr.mxu0 0.0
      %3448 = vmatpush1.msra.mxu0 %v321
      %3449 = vmatprep.subr.mxu0 0.0
      %3450 = vmatpush1.msra.mxu0 %v322
      %3451 = vmatprep.subr.mxu0 0.0
      %3452 = vmatpush1.msra.mxu0 %v323
      %3453 = vmatprep.subr.mxu0 0.0
      %3454 = vmatpush1.msra.mxu0 %v324
      %3455 = vmatprep.subr.mxu0 0.0
      %3456 = vmatpush1.msra.mxu0 %v325
      %3457 = vmatprep.subr.mxu0 0.0
      %3458 = vmatpush1.msra.mxu0 %v326
      %3459 = vmatprep.subr.mxu0 0.0
      %3460 = vmatpush1.msra.mxu0 %v327
      %3461 = vmatprep.subr.mxu0 0.0
      %3462 = vmatpush1.msra.mxu0 %v328
      %3463 = vmatprep.subr.mxu0 0.0
      %3464 = vmatpush1.msra.mxu0 %v329
      %3465 = vmatprep.subr.mxu0 0.0
      %3466 = vmatpush1.msra.mxu0 %v330
      %3467 = vmatprep.subr.mxu0 0.0
      %3468 = vmatpush1.msra.mxu0 %v331
      %3469 = vmatprep.subr.mxu0 0.0
      %3470 = vmatpush1.msra.mxu0 %v332
      %3471 = vmatprep.subr.mxu0 0.0
      %3472 = vmatpush1.msra.mxu0 %v333
      %3473 = vmatprep.subr.mxu0 0.0
      %3474 = vmatpush1.msra.mxu0 %v334
      %3475 = vmatprep.subr.mxu0 0.0
      %3476 = vmatpush1.msra.mxu0 %v335
      %3477 = vmatprep.subr.mxu0 0.0
      %3478 = vmatpush1.msra.mxu0 %v336
      %3479 = vmatprep.subr.mxu0 0.0
      %3480 = vmatpush1.msra.mxu0 %v337
      %3481 = vmatprep.subr.mxu0 0.0
      %3482 = vmatpush1.msra.mxu0 %v338
      %3483 = vmatprep.subr.mxu0 0.0
      %3484 = vmatpush1.msra.mxu0 %v339
      %3485 = vmatprep.subr.mxu0 0.0
      %3486 = vmatpush1.msra.mxu0 %v340
      %3487 = vmatprep.subr.mxu0 0.0
      %3488 = vmatpush1.msra.mxu0 %v341
      %3489 = vmatprep.subr.mxu0 0.0
      %3490 = vmatpush1.msra.mxu0 %v342
      %3491 = vmatprep.subr.mxu0 0.0
      %3492 = vmatpush1.msra.mxu0 %v343
      %3493 = vmatprep.subr.mxu0 0.0
      %3494 = vmatpush1.msra.mxu0 %v344
      %3495 = vmatprep.subr.mxu0 0.0
      %3496 = vmatpush1.msra.mxu0 %v345
      %3497 = vmatprep.subr.mxu0 0.0
      %3498 = vmatpush1.msra.mxu0 %v346
      %3499 = vmatprep.subr.mxu0 0.0
      %3500 = vmatpush1.msra.mxu0 %v347
      %3501 = vmatprep.subr.mxu0 0.0
      %3502 = vmatpush1.msra.mxu0 %v348
      %3503 = vmatprep.subr.mxu0 0.0
      %3504 = vmatpush1.msra.mxu0 %v349
      %3505 = vmatprep.subr.mxu0 0.0
      %3506 = vmatpush1.msra.mxu0 %v350
      %3507 = vmatprep.mubr.f32.mxu0 %v2297
      %3508 = vmatmul.mubr.f32.gmra.mrb[0].mxu0 %v2295
      %v3509 = vpop.f32.mrb[0].mxu0
      %v3510 = vadd.f32 %v3405, %v3509
      %v3511 = vpop.f32.mrb[0].mxu0
      %3512 = vmatprep.mubr.f32.mxu0 %v2337
      %3513 = vmatmul.mubr.f32.gmra.mrb[0].mxu0 %v2335
      %v3514 = vpop.f32.mrb[0].mxu0
      %v3515 = vadd.f32 %v3410, %v3514
      %v3516 = vpop.f32.mrb[0].mxu0
      %3517 = vmatprep.mubr.f32.mxu0 %v2377
      %3518 = vmatmul.mubr.f32.gmra.mrb[0].mxu0 %v2375
      %v3519 = vpop.f32.mrb[0].mxu0
      %v3520 = vadd.f32 %v3415, %v3519
      %v3521 = vpop.f32.mrb[0].mxu0
      %3522 = vmatprep.mubr.f32.mxu0 %v2417
      %3523 = vmatmul.mubr.f32.gmra.mrb[0].mxu0 %v2415
      %v3524 = vpop.f32.mrb[0].mxu0
      %v3525 = vadd.f32 %v3420, %v3524
      %v3526 = vpop.f32.mrb[0].mxu0
      %3527 = vmatprep.mubr.f32.mxu0 %v2437
      %3528 = vmatmul.mubr.f32.gmra.mrb[0].mxu0 %v2436
      %v3529 = vpop.f32.mrb[0].mxu0
      %v3530 = vadd.f32 %v3425, %v3529
      %v3531 = vpop.f32.mrb[0].mxu0
      %3532 = vmatprep.mubr.f32.mxu0 %v2457
      %3533 = vmatmul.mubr.f32.gmra.mrb[0].mxu0 %v2456
      %v3534 = vpop.f32.mrb[0].mxu0
      %v3535 = vadd.f32 %v3430, %v3534
      %v3536 = vpop.f32.mrb[0].mxu0
      %3537 = vmatprep.mubr.f32.mxu0 %v2477
      %3538 = vmatmul.mubr.f32.gmra.mrb[0].mxu0 %v2476
      %v3539 = vpop.f32.mrb[0].mxu0
      %v3540 = vadd.f32 %v3435, %v3539
      %v3541 = vpop.f32.mrb[0].mxu0
      %3542 = vmatprep.mubr.f32.mxu0 %v2497
      %3543 = vmatmul.mubr.f32.gmra.mrb[0].mxu0 %v2496
      %v3544 = vpop.f32.mrb[0].mxu0
      %v3545 = vadd.f32 %v3440, %v3544
      %v3546 = vpop.f32.mrb[0].mxu0
      %3547 = vdwg.mxu0
      %v3548 = vmul.f32 %v3530, 20.0
      %v3549 = vmul.f32 %v3535, 20.0
      %v3550 = vmul.f32 %v3540, 20.0
      %v3551 = vmul.f32 %v3545, 20.0
      %v3552 = vmul.f32 %v3510, %v3510
      %v3553 = vmul.f32 %v3515, %v3515
      %v3554 = vmul.f32 %v3520, %v3520
      %v3555 = vmul.f32 %v3525, %v3525
      %v3556 = vrcp.pop %v3552
      %v3557 = vrcp.pop %v3553
      %v3558 = vrcp.pop %v3554
      %v3559 = vrcp.pop %v3555
      %v3560 = vmul.f32 %v3548, %v3556
      %v3561 = vmul.f32 %v3549, %v3557
      %v3562 = vmul.f32 %v3550, %v3558
      %v3563 = vmul.f32 %v3551, %v3559
      %3564 = vadd.xlane.f32.xlu0 %v3560
      %v3565 = vpop.xlane.xlu0 %3564
      %3566 = vadd.xlane.f32.xlu0 %v3561
      %v3567 = vpop.xlane.xlu0 %3566
      %3568 = vadd.xlane.f32.xlu0 %v3562
      %v3569 = vpop.xlane.xlu0 %3568
      %3570 = vadd.xlane.f32.xlu0 %v3563
      %v3571 = vpop.xlane.xlu0 %3570
      %v3572 = vrcp.pop 128.0
      %v3573 = vmul.f32 %v3565, %v3572
      %v3574 = vmul.f32 %v3567, %v3572
      %v3575 = vmul.f32 %v3569, %v3572
      %v3576 = vmul.f32 %v3571, %v3572
      %v3578 = vsel %vm450, %v351, 0
      %3580 = vmatprep.subr.mxu0 0.0
      %3581 = vmatpush1.msra.mxu0 %v3573
      %3582 = vmatprep.subr.mxu0 0.0
      %3583 = vmatpush1.msra.mxu0 %v3574
      %3584 = vmatprep.subr.mxu0 0.0
      %3585 = vmatpush1.msra.mxu0 %v3575
      %3586 = vmatprep.subr.mxu0 0.0
      %3587 = vmatpush1.msra.mxu0 %v3576
      %3588 = vmatprep.subr.mxu0 0.0
      %3589 = vmatpush1.msra.mxu0 0.0
      %3590 = vmatprep.subr.mxu0 0.0
      %3591 = vmatpush1.msra.mxu0 0.0
      %3592 = vmatprep.subr.mxu0 0.0
      %3593 = vmatpush1.msra.mxu0 0.0
      %3594 = vmatprep.subr.mxu0 0.0
      %3595 = vmatpush1.msra.mxu0 0.0
      %3596 = vmatprep.subr.mxu0 0.0
      %3597 = vmatpush1.msra.mxu0 0.0
      %3598 = vmatprep.subr.mxu0 0.0
      %3599 = vmatpush1.msra.mxu0 0.0
      %3600 = vmatprep.subr.mxu0 0.0
      %3601 = vmatpush1.msra.mxu0 0.0
      %3602 = vmatprep.subr.mxu0 0.0
      %3603 = vmatpush1.msra.mxu0 0.0
      %3604 = vmatprep.subr.mxu0 0.0
      %3605 = vmatpush1.msra.mxu0 0.0
      %3606 = vmatprep.subr.mxu0 0.0
      %3607 = vmatpush1.msra.mxu0 0.0
      %3608 = vmatprep.subr.mxu0 0.0
      %3609 = vmatpush1.msra.mxu0 0.0
      %3610 = vmatprep.subr.mxu0 0.0
      %3611 = vmatpush1.msra.mxu0 0.0
      %3612 = vmatprep.subr.mxu0 0.0
      %3613 = vmatpush1.msra.mxu0 0.0
      %3614 = vmatprep.subr.mxu0 0.0
      %3615 = vmatpush1.msra.mxu0 0.0
      %3616 = vmatprep.subr.mxu0 0.0
      %3617 = vmatpush1.msra.mxu0 0.0
      %3618 = vmatprep.subr.mxu0 0.0
      %3619 = vmatpush1.msra.mxu0 0.0
      %3620 = vmatprep.subr.mxu0 0.0
      %3621 = vmatpush1.msra.mxu0 0.0
      %3622 = vmatprep.subr.mxu0 0.0
      %3623 = vmatpush1.msra.mxu0 0.0
      %3624 = vmatprep.subr.mxu0 0.0
      %3625 = vmatpush1.msra.mxu0 0.0
      %3626 = vmatprep.subr.mxu0 0.0
      %3627 = vmatpush1.msra.mxu0 0.0
      %3628 = vmatprep.subr.mxu0 0.0
      %3629 = vmatpush1.msra.mxu0 0.0
      %3630 = vmatprep.subr.mxu0 0.0
      %3631 = vmatpush1.msra.mxu0 0.0
      %3632 = vmatprep.subr.mxu0 0.0
      %3633 = vmatpush1.msra.mxu0 0.0
      %3634 = vmatprep.subr.mxu0 0.0
      %3635 = vmatpush1.msra.mxu0 0.0
      %3636 = vmatprep.subr.mxu0 0.0
      %3637 = vmatpush1.msra.mxu0 0.0
      %3638 = vmatprep.subr.mxu0 0.0
      %3639 = vmatpush1.msra.mxu0 0.0
      %3640 = vmatprep.subr.mxu0 0.0
      %3641 = vmatpush1.msra.mxu0 0.0
      %3642 = vmatprep.subr.mxu0 0.0
      %3643 = vmatpush1.msra.mxu0 0.0
      %3644 = vmatprep.mubr.f32.mxu0 0.0
      %3645 = vmatmul.mubr.f32.gmra.mrb[0].mxu0 %v3578
      %v3646 = vpop.f32.mrb[0].mxu0
      %v3647 = vadd.f32 %v352, %v3646
      %v3648 = vpop.f32.mrb[0].mxu0
      %3649 = vdwg.mxu0
      %v3650 = vmax.f32 %v3647, 0.0
      %vm3651 = vcmask 64512
      %v3653 = vsel %vm3651, %v353, 0
      %v3656 = vsel %vm3651, %v354, 0
      %v3659 = vsel %vm3651, %v355, 0
      %v3662 = vsel %vm3651, %v356, 0
      %3664 = vmatprep.subr.mxu0 0.0
      %3665 = vmatpush1.msra.mxu0 %v3650
      %3666 = vmatprep.subr.mxu0 0.0
      %3667 = vmatpush1.msra.mxu0 0.0
      %3668 = vmatprep.subr.mxu0 0.0
      %3669 = vmatpush1.msra.mxu0 0.0
      %3670 = vmatprep.subr.mxu0 0.0
      %3671 = vmatpush1.msra.mxu0 0.0
      %3672 = vmatprep.subr.mxu0 0.0
      %3673 = vmatpush1.msra.mxu0 0.0
      %3674 = vmatprep.subr.mxu0 0.0
      %3675 = vmatpush1.msra.mxu0 0.0
      %3676 = vmatprep.subr.mxu0 0.0
      %3677 = vmatpush1.msra.mxu0 0.0
      %3678 = vmatprep.subr.mxu0 0.0
      %3679 = vmatpush1.msra.mxu0 0.0
      %3680 = vmatprep.subr.mxu0 0.0
      %3681 = vmatpush1.msra.mxu0 0.0
      %3682 = vmatprep.subr.mxu0 0.0
      %3683 = vmatpush1.msra.mxu0 0.0
      %3684 = vmatprep.subr.mxu0 0.0
      %3685 = vmatpush1.msra.mxu0 0.0
      %3686 = vmatprep.subr.mxu0 0.0
      %3687 = vmatpush1.msra.mxu0 0.0
      %3688 = vmatprep.subr.mxu0 0.0
      %3689 = vmatpush1.msra.mxu0 0.0
      %3690 = vmatprep.subr.mxu0 0.0
      %3691 = vmatpush1.msra.mxu0 0.0
      %3692 = vmatprep.subr.mxu0 0.0
      %3693 = vmatpush1.msra.mxu0 0.0
      %3694 = vmatprep.subr.mxu0 0.0
      %3695 = vmatpush1.msra.mxu0 0.0
      %3696 = vmatprep.subr.mxu0 0.0
      %3697 = vmatpush1.msra.mxu0 0.0
      %3698 = vmatprep.subr.mxu0 0.0
      %3699 = vmatpush1.msra.mxu0 0.0
      %3700 = vmatprep.subr.mxu0 0.0
      %3701 = vmatpush1.msra.mxu0 0.0
      %3702 = vmatprep.subr.mxu0 0.0
      %3703 = vmatpush1.msra.mxu0 0.0
      %3704 = vmatprep.subr.mxu0 0.0
      %3705 = vmatpush1.msra.mxu0 0.0
      %3706 = vmatprep.subr.mxu0 0.0
      %3707 = vmatpush1.msra.mxu0 0.0
      %3708 = vmatprep.subr.mxu0 0.0
      %3709 = vmatpush1.msra.mxu0 0.0
      %3710 = vmatprep.subr.mxu0 0.0
      %3711 = vmatpush1.msra.mxu0 0.0
      %3712 = vmatprep.subr.mxu0 0.0
      %3713 = vmatpush1.msra.mxu0 0.0
      %3714 = vmatprep.subr.mxu0 0.0
      %3715 = vmatpush1.msra.mxu0 0.0
      %3716 = vmatprep.subr.mxu0 0.0
      %3717 = vmatpush1.msra.mxu0 0.0
      %3718 = vmatprep.subr.mxu0 0.0
      %3719 = vmatpush1.msra.mxu0 0.0
      %3720 = vmatprep.subr.mxu0 0.0
      %3721 = vmatpush1.msra.mxu0 0.0
      %3722 = vmatprep.subr.mxu0 0.0
      %3723 = vmatpush1.msra.mxu0 0.0
      %3724 = vmatprep.subr.mxu0 0.0
      %3725 = vmatpush1.msra.mxu0 0.0
      %3726 = vmatprep.subr.mxu0 0.0
      %3727 = vmatpush1.msra.mxu0 0.0
      %3728 = vmatprep.mubr.f32.mxu0 0.0
      %3729 = vmatmul.mubr.f32.gmra.mrb[0].mxu0 %v3653
      %v3730 = vpop.f32.mrb[0].mxu0
      %v3731 = vadd.f32 %v357, %v3730
      %v3732 = vpop.f32.mrb[0].mxu0
      %3733 = vmatprep.mubr.f32.mxu0 0.0
      %3734 = vmatmul.mubr.f32.gmra.mrb[0].mxu0 %v3656
      %v3735 = vpop.f32.mrb[0].mxu0
      %v3736 = vadd.f32 %v358, %v3735
      %v3737 = vpop.f32.mrb[0].mxu0
      %3738 = vmatprep.mubr.f32.mxu0 0.0
      %3739 = vmatmul.mubr.f32.gmra.mrb[0].mxu0 %v3659
      %v3740 = vpop.f32.mrb[0].mxu0
      %v3741 = vadd.f32 %v359, %v3740
      %v3742 = vpop.f32.mrb[0].mxu0
      %3743 = vmatprep.mubr.f32.mxu0 0.0
      %3744 = vmatmul.mubr.f32.gmra.mrb[0].mxu0 %v3662
      %v3745 = vpop.f32.mrb[0].mxu0
      %v3746 = vadd.f32 %v360, %v3745
      %v3747 = vpop.f32.mrb[0].mxu0
      %3748 = vdwg.mxu0
      %v3749 = vxor.u32 %v3731, 2147483648
      %v3750 = vxor.u32 %v3736, 2147483648
      %v3751 = vxor.u32 %v3741, 2147483648
      %v3752 = vxor.u32 %v3746, 2147483648
      %v3753 = vmul.f32 %v3749, 1.442695
      %v3754 = vpow.pop %v3753
      %v3755 = vmul.f32 %v3750, 1.442695
      %v3756 = vpow.pop %v3755
      %v3757 = vmul.f32 %v3751, 1.442695
      %v3758 = vpow.pop %v3757
      %v3759 = vmul.f32 %v3752, 1.442695
      %v3760 = vpow.pop %v3759
      %v3761 = vadd.f32 %v3754, 1.0
      %v3762 = vadd.f32 %v3756, 1.0
      %v3763 = vadd.f32 %v3758, 1.0
      %v3764 = vadd.f32 %v3760, 1.0
      %v3765 = vrcp.pop %v3761
      %v3766 = vmul.f32 1.0, %v3765
      %v3767 = vrcp.pop %v3762
      %v3768 = vmul.f32 1.0, %v3767
      %v3769 = vrcp.pop %v3763
      %v3770 = vmul.f32 1.0, %v3769
      %v3771 = vrcp.pop %v3764
      %v3772 = vmul.f32 1.0, %v3771
      %3774 = vset.pattern.permute.xlu0 0
      %3775 = vperm.xlu0 %3774, %v3766
      %v3776 = vpop.permute.xlu0 %3775
      %3779 = vset.pattern.permute.xlu0 0
      %3780 = vperm.xlu0 %3779, %v3768
      %v3781 = vpop.permute.xlu0 %3780
      %3784 = vset.pattern.permute.xlu0 0
      %3785 = vperm.xlu0 %3784, %v3770
      %v3786 = vpop.permute.xlu0 %3785
      %3789 = vset.pattern.permute.xlu0 0
      %3790 = vperm.xlu0 %3789, %v3772
      %v3791 = vpop.permute.xlu0 %3790
      %v3793 = vmul.f32 %v3776, %v3560
      %v3794 = vmul.f32 %v3781, %v3561
      %v3795 = vmul.f32 %v3786, %v3562
      %v3796 = vmul.f32 %v3791, %v3563
      %s3797 = smul.u32 %s362, 32
      %s3798 = scalar_lea.vmem [#allocation2], %s3797
      %3799 = vst [vmem:[%s3798] sm:$0xff] %v3793
      %3800 = vst [vmem:[%s3798 + $0x8] sm:$0xff] %v3794
      %3801 = vst [vmem:[%s3798 + $0x10] sm:$0xff] %v3795
      %3802 = vst [vmem:[%s3798 + $0x18] sm:$0xff] %v3796
    $region34: #{attention_forward.1} parent=1 // loop_footer
      %s366 = sadd.s32 1, %s362
    $region35: #{attention_forward.1} parent=1 // loop_footer_branch
      %361 = sbr.rel target = $region31
    $region36: #{attention_forward.1} parent=1 // loop_exit
      _
    // Predicated region
    $region37: #{attention_forward.1} parent=1 // pred_check
      _
    $region38: #{attention_forward.1} parent=1 // pred_check_branch
      %3804 = sbr.rel (0) target = $region40
    $region39: #{attention_forward.1} parent=1 // pred_region
      %s3806 = ssub.s32 1024, 1024
      %3807 = vsyncadd [#allocation3], %s3806
      %s3808 = sshll.u32 [#allocation2], 4
      %s3809 = int_to_ptr.vmem [resolvable:$true] %s3808
      %3814 = dma.vmem_to_hbm [thread:$0]  %s3809, 1024, %s7, [#allocation3], 128, 128, 8
    $region40: #{attention_forward.1} parent=1 // pred_fallthru
      _
    // Predicated region
    $region41: #{attention_forward.1} parent=1 // pred_check
      _
    $region42: #{attention_forward.1} parent=1 // pred_check_branch
      %3816 = sbr.rel (0) target = $region44
    $region43: #{attention_forward.1} parent=1 // pred_region
      %3817 = dma.done [#allocation3], 1024
    $region44: #{attention_forward.1} parent=1 // pred_fallthru
      _
    %3818 = vsyncpa [#allocation3], 1

</llo_original>
